<compile_context>
chip_gen: v7x
topology: tpu7x:2x2x1
jax: 0.10.0
libtpu: 0.0.40
codegen_flags: <defaults>
</compile_context>

<pallas_src>
import functools

import jax
import jax.numpy as jnp
from jax.experimental import pallas as pl
from jax.experimental.pallas import tpu as pltpu

LEAKY_ALPHA = 0.1
BN_EPS = 1e-5
BN_MOMENTUM = 0.9  # unused at inference; kept for parity with the torch module
LANE = 128
VMEM_LIMIT = 64 * 1024 * 1024


def _round_up(x, m):
    return (x + m - 1) // m * m


def _pick_row_tile(h):
    for th in (32, 16, 8):
        if h > th and h % th == 0:
            return th
    return h


# -----------------------------------------------------------------------------
# Kernels
# -----------------------------------------------------------------------------
def _conv1x1_kernel(x_ref, w_ref, bias_ref, o_ref, *, alpha, apply_act):
    """(TM, Cin) @ (Cin, Cout) on the MXU, fused bias (+ LeakyReLU) epilogue."""
    y = jnp.dot(x_ref[...], w_ref[...], preferred_element_type=jnp.float32)
    y = y + bias_ref[...]
    if apply_act:
        y = jnp.maximum(y, alpha * y)
    o_ref[...] = y.astype(o_ref.dtype)


def _conv3x3_kernel(xw_ref, w_ref, bias_ref, o_ref, *, alpha, th, W, K3):
    """3x3 / pad=1 conv of one row band as 3 MXU matmuls (dx folded into K).

    xw_ref:  (H+2, W, 3*Cin)   width-im2col'd, zero-padded plane (bf16)
    w_ref:   (3, 3*Cin, Cout)  per-dy weight, dx taps stacked along K (bf16)
    o_ref:   (th, W, Cout)
    """
    r = pl.program_id(1)
    row0 = pl.multiple_of(r * th, th)
    cout = o_ref.shape[-1]
    acc = jnp.zeros((th * W, cout), jnp.float32)
    for dy in range(3):
        xs = xw_ref[pl.ds(row0 + dy, th)]          # leading-axis slice: free
        acc = acc + jnp.dot(xs.reshape(th * W, K3), w_ref[dy],
                            preferred_element_type=jnp.float32)
    y = acc + bias_ref[...]
    y = jnp.maximum(y, alpha * y)
    o_ref[...] = y.reshape(th, W, cout).astype(o_ref.dtype)


# -----------------------------------------------------------------------------
# Pallas wrappers (layout plumbing only)
# -----------------------------------------------------------------------------
def conv1x1(x, w, bias, *, apply_act=True, alpha=LEAKY_ALPHA, tm=512):
    """x: (B,H,W,Cp_in) bf16, channel-padded; w: (1,1,Cin,Cout) f32 (BN folded
    into the weights); bias: (Cout,) f32.  Returns (B,H,W,Cp_out) bf16 with the
    padded output channels identically zero."""
    B, H, W, cp_in = x.shape
    w2 = w.reshape(w.shape[-2], w.shape[-1])
    cin, cout = w2.shape
    cp_out = _round_up(cout, LANE)

    w2 = jnp.pad(w2, ((0, cp_in - cin), (0, cp_out - cout))).astype(jnp.bfloat16)
    b2 = jnp.pad(bias, (0, cp_out - cout)).reshape(1, cp_out).astype(jnp.float32)

    M = B * H * W
    tm = max(8, min(tm, _round_up(M, 8)))
    grid_m = pl.cdiv(M, tm)

    kern = functools.partial(_conv1x1_kernel, alpha=alpha, apply_act=apply_act)
    out = pl.pallas_call(
        kern,
        out_shape=jax.ShapeDtypeStruct((M, cp_out), jnp.bfloat16),
        grid_spec=pltpu.PrefetchScalarGridSpec(
            num_scalar_prefetch=0,
            grid=(grid_m,),
            in_specs=[
                pl.BlockSpec((tm, cp_in), lambda i: (i, 0)),
                pl.BlockSpec((cp_in, cp_out), lambda i: (0, 0)),
                pl.BlockSpec((1, cp_out), lambda i: (0, 0)),
            ],
            out_specs=pl.BlockSpec((tm, cp_out), lambda i: (i, 0)),
        ),
        compiler_params=pltpu.CompilerParams(
            dimension_semantics=("parallel",),
            vmem_limit_bytes=VMEM_LIMIT),
    )(x.reshape(M, cp_in), w2, b2)
    return out.reshape(B, H, W, cp_out)


def conv3x3(x, w, bias, *, alpha=LEAKY_ALPHA):
    """x: (B,H,W,Cp_in) bf16, channel-padded; w: (3,3,Cin,Cout) f32 (BN folded
    into the weights); bias: (Cout,) f32.  pad=1, stride=1."""
    B, H, W, cp_in = x.shape
    cin, cout = w.shape[2], w.shape[3]
    cp_out = _round_up(cout, LANE)
    K3 = 3 * cp_in

    wp = jnp.pad(w, ((0, 0), (0, 0), (0, cp_in - cin), (0, cp_out - cout)))
    # Fold the 3 dx taps into the contraction dim: per dy weight is (3*Cin, Cout).
    w3 = jnp.concatenate([wp[:, 0], wp[:, 1], wp[:, 2]], axis=1).astype(jnp.bfloat16)
    b2 = jnp.pad(bias, (0, cp_out - cout)).reshape(1, cp_out).astype(jnp.float32)

    # Width-direction im2col done once at trace time (fused XLA pad+concat);
    # the kernel then only slices along the leading row axis, which is free.
    xp = jnp.pad(x, ((0, 0), (1, 1), (1, 1), (0, 0)))
    xw = jnp.concatenate(
        [xp[:, :, 0:W], xp[:, :, 1:W + 1], xp[:, :, 2:W + 2]], axis=-1)
    # xw: (B, H+2, W, 3*Cp_in) bf16

    th = _pick_row_tile(H)
    n_rt = H // th

    kern = functools.partial(_conv3x3_kernel, alpha=alpha, th=th, W=W, K3=K3)
    out = pl.pallas_call(
        kern,
        out_shape=jax.ShapeDtypeStruct((B, H, W, cp_out), jnp.bfloat16),
        grid_spec=pltpu.PrefetchScalarGridSpec(
            num_scalar_prefetch=0,
            grid=(B, n_rt),
            in_specs=[
                # full padded plane stays VMEM-resident across the row-tile axis
                pl.BlockSpec((None, H + 2, W, K3), lambda b, r: (b, 0, 0, 0)),
                pl.BlockSpec((3, K3, cp_out), lambda b, r: (0, 0, 0)),
                pl.BlockSpec((1, cp_out), lambda b, r: (0, 0)),
            ],
            out_specs=pl.BlockSpec((None, th, W, cp_out),
                                   lambda b, r: (b, r, 0, 0)),
        ),
        compiler_params=pltpu.CompilerParams(
            dimension_semantics=("parallel", "parallel"),
            vmem_limit_bytes=VMEM_LIMIT),
    )(xw, w3, b2)
    return out


# -----------------------------------------------------------------------------
# YoloBlock forward
# -----------------------------------------------------------------------------
def fold_bn(gamma, beta, mean, var, eps=BN_EPS):
    """Inference-mode BatchNorm folded to per-channel scale/bias."""
    scale = gamma * jax.lax.rsqrt(var + eps)
    return scale, beta - mean * scale


def yolo_block_forward(x, params):
    """x: (B,H,W,Cin) NHWC f32.  params[name] = (w_hwio, scale, bias).
    Returns (c5, out) in the input dtype."""
    # TODO(synk): training-mode BatchNorm (batch statistics + running-stat
    # updates) is not reproduced; BN is applied in its folded inference form.

    def prep(name):
        w, scale, bias = params[name]
        return w * scale, bias          # fold the BN scale into the conv weights

    cin = x.shape[-1]
    cp = _round_up(cin, LANE)
    xb = jnp.pad(x, ((0, 0), (0, 0), (0, 0), (0, cp - cin))).astype(jnp.bfloat16)

    c1 = conv1x1(xb, *prep("conv0"))
    c2 = conv3x3(c1, *prep("conv1"))
    c3 = conv1x1(c2, *prep("conv2"))
    c4 = conv3x3(c3, *prep("conv3"))
    c5p = conv1x1(c4, *prep("conv4"))
    c6 = conv3x3(c5p, *prep("conv5"))
    outp = conv1x1(c6, *prep("conv6"), apply_act=False)
    # TODO(synk): fuse each 3x3 -> following 1x1 pair into one pallas_call so
    # the wide 2*Cmid intermediate never round-trips HBM (biggest remaining
    # win on v5e/v6e bandwidth).

    out_chls = params["conv4"][0].shape[-1]
    out_channels = params["conv6"][0].shape[-1]
    c5 = c5p[..., :out_chls].astype(x.dtype)
    out = outp[..., :out_channels].astype(x.dtype)
    return c5, out


# -----------------------------------------------------------------------------
# Pure-JAX f32 reference (for a sanity check)
# -----------------------------------------------------------------------------
def _ref_layer(x, w, scale, bias, *, apply_act=True, alpha=LEAKY_ALPHA):
    pad = (w.shape[0] - 1) // 2
    y = jax.lax.conv_general_dilated(
        x, w, window_strides=(1, 1), padding=((pad, pad), (pad, pad)),
        dimension_numbers=("NHWC", "HWIO", "NHWC"))
    y = y * scale + bias
    if apply_act:
        y = jnp.maximum(y, alpha * y)
    return y


def yolo_block_reference(x, params):
    c1 = _ref_layer(x, *params["conv0"])
    c2 = _ref_layer(c1, *params["conv1"])
    c3 = _ref_layer(c2, *params["conv2"])
    c4 = _ref_layer(c3, *params["conv3"])
    c5 = _ref_layer(c4, *params["conv4"])
    c6 = _ref_layer(c5, *params["conv5"])
    out = _ref_layer(c6, *params["conv6"], apply_act=False)
    return c5, out


# -----------------------------------------------------------------------------
# Demo
# -----------------------------------------------------------------------------
if __name__ == "__main__":
    key = jax.random.PRNGKey(0)
    B, H, W = 2, 16, 16
    in_channels, out_chls, out_channels = 32, 16, 24
    out_chls_2 = out_chls * 2

    keys = jax.random.split(key, 9)

    def conv_bn_params(k, cin, cout, ksize):
        k1, k2, k3, k4, k5 = jax.random.split(k, 5)
        w = jax.random.normal(k1, (ksize, ksize, cin, cout), jnp.float32)
        w = w / jnp.sqrt(float(cin * ksize * ksize))
        gamma = 1.0 + 0.1 * jax.random.normal(k2, (cout,), jnp.float32)
        beta = 0.1 * jax.random.normal(k3, (cout,), jnp.float32)
        mean = 0.1 * jax.random.normal(k4, (cout,), jnp.float32)
        var = 0.5 + jax.nn.softplus(jax.random.normal(k5, (cout,), jnp.float32))
        scale, bias = fold_bn(gamma, beta, mean, var)
        return (w, scale, bias)

    params = {
        "conv0": conv_bn_params(keys[0], in_channels, out_chls, 1),
        "conv1": conv_bn_params(keys[1], out_chls, out_chls_2, 3),
        "conv2": conv_bn_params(keys[2], out_chls_2, out_chls, 1),
        "conv3": conv_bn_params(keys[3], out_chls, out_chls_2, 3),
        "conv4": conv_bn_params(keys[4], out_chls_2, out_chls, 1),
        "conv5": conv_bn_params(keys[5], out_chls, out_chls_2, 3),
    }
    # conv6: plain 1x1 conv with bias, no BN, no activation
    w6 = jax.random.normal(keys[6], (1, 1, out_chls_2, out_channels), jnp.float32)
    w6 = w6 / jnp.sqrt(float(out_chls_2))
    b6 = 0.1 * jax.random.normal(keys[7], (out_channels,), jnp.float32)
    params["conv6"] = (w6, jnp.ones((out_channels,), jnp.float32), b6)

    x = jax.random.normal(keys[8], (B, H, W, in_channels), jnp.float32)

    c5, out = jax.jit(yolo_block_forward)(x, params)
    c5, out = jax.block_until_ready((c5, out))

    assert c5.shape == (B, H, W, out_chls)
    assert out.shape == (B, H, W, out_channels)
    assert bool(jnp.all(jnp.isfinite(c5))) and bool(jnp.all(jnp.isfinite(out)))

    # sanity-check against the pure-JAX f32 reference (tolerance covers the
    # intentional bf16 MXU path)
    c5_ref, out_ref = yolo_block_reference(x, params)
    tol = 5e-2
    err_c5 = float(jnp.max(jnp.abs(c5 - c5_ref)))
    err_out = float(jnp.max(jnp.abs(out - out_ref)))
    lim_c5 = tol * (float(jnp.max(jnp.abs(c5_ref))) + 1.0)
    lim_out = tol * (float(jnp.max(jnp.abs(out_ref))) + 1.0)
    assert err_c5 <= lim_c5 and err_out <= lim_out, (err_c5, err_out)

    print("KERNEL_OK")
</pallas_src>

<mosaic_0001>
module attributes {stable_mosaic.version = 11 : i64} {
  func.func @_conv1x1_kernel(%arg0: i32, %arg1: memref<512x128xbf16, #tpu.memory_space<vmem>>, %arg2: memref<128x128xbf16, #tpu.memory_space<vmem>>, %arg3: memref<1x128xf32, #tpu.memory_space<vmem>>, %arg4: memref<512x128xbf16, #tpu.memory_space<vmem>>) attributes {dimension_semantics = [#tpu.dimension_semantics<parallel>], iteration_bounds = array<i64: 1>, scalar_prefetch = 0 : i64, scratch_operands = 0 : i64, tpu.core_type = #tpu.core_type<tc>, window_params = [{transform_indices = @transform_0, window_bounds = array<i64: 512, 128>}, {pipeline_mode = #tpu.pipeline_mode<synchronous>, transform_indices = @transform_1, window_bounds = array<i64: 128, 128>}, {pipeline_mode = #tpu.pipeline_mode<synchronous>, transform_indices = @transform_2, window_bounds = array<i64: 1, 128>}, {transform_indices = @transform_3, window_bounds = array<i64: 512, 128>}]} {
    %c0 = arith.constant 0 : index
    %c0_0 = arith.constant 0 : index
    %0 = vector.load %arg1[%c0, %c0_0] : memref<512x128xbf16, #tpu.memory_space<vmem>>, vector<512x128xbf16>
    %c0_1 = arith.constant 0 : index
    %c0_2 = arith.constant 0 : index
    %1 = vector.load %arg2[%c0_1, %c0_2] : memref<128x128xbf16, #tpu.memory_space<vmem>>, vector<128x128xbf16>
    %cst = arith.constant dense<0.000000e+00> : vector<512x128xf32>
    %2 = tpu.matmul %0, %1, %cst {dimension_numbers = #tpu.dot_dimension_numbers<[1], [0], [0], [1], [0, 0, 1, 1], [], []>} : vector<512x128xbf16>, vector<128x128xbf16>, vector<512x128xf32> -> vector<512x128xf32>
    %c0_3 = arith.constant 0 : index
    %c0_4 = arith.constant 0 : index
    %3 = vector.load %arg3[%c0_3, %c0_4] : memref<1x128xf32, #tpu.memory_space<vmem>>, vector<1x128xf32>
    %4 = vector.broadcast %3 : vector<1x128xf32> to vector<512x128xf32>
    %5 = arith.addf %2, %4 : vector<512x128xf32>
    %cst_5 = arith.constant 1.000000e-01 : f32
    %6 = vector.broadcast %cst_5 : f32 to vector<512x128xf32>
    %7 = arith.mulf %6, %5 : vector<512x128xf32>
    %8 = arith.maximumf %5, %7 : vector<512x128xf32>
    %9 = arith.truncf %8 : vector<512x128xf32> to vector<512x128xbf16>
    %c0_6 = arith.constant 0 : index
    %c0_7 = arith.constant 0 : index
    %10 = vector.load %arg4[%c0_6, %c0_7] : memref<512x128xbf16, #tpu.memory_space<vmem>>, vector<512x128xbf16>
    tpu.vector_store %arg4[%c0_6, %c0_7], %9 {strides = array<i32>} : memref<512x128xbf16, #tpu.memory_space<vmem>>, vector<512x128xbf16>,
    return
  }
  func.func @transform_0(%arg0: i32) -> (i32, i32) {
    %c0_i32 = arith.constant 0 : i32
    %c0_i32_0 = arith.constant 0 : i32
    return %arg0, %c0_i32 : i32, i32
  }
  func.func @transform_1(%arg0: i32) -> (i32, i32) {
    %c0_i32 = arith.constant 0 : i32
    %c0_i32_0 = arith.constant 0 : i32
    %c0_i32_1 = arith.constant 0 : i32
    return %c0_i32, %c0_i32_0 : i32, i32
  }
  func.func @transform_2(%arg0: i32) -> (i32, i32) {
    %c0_i32 = arith.constant 0 : i32
    %c0_i32_0 = arith.constant 0 : i32
    %c0_i32_1 = arith.constant 0 : i32
    return %c0_i32, %c0_i32_0 : i32, i32
  }
  func.func @transform_3(%arg0: i32) -> (i32, i32) {
    %c0_i32 = arith.constant 0 : i32
    %c0_i32_0 = arith.constant 0 : i32
    return %arg0, %c0_i32 : i32, i32
  }
}

module attributes {stable_mosaic.version = 11 : i64} {
  func.func @_conv3x3_kernel(%arg0: i32, %arg1: i32, %arg2: memref<1x18x16x384xbf16, #tpu.memory_space<vmem>>, %arg3: memref<3x384x128xbf16, #tpu.memory_space<vmem>>, %arg4: memref<1x128xf32, #tpu.memory_space<vmem>>, %arg5: memref<1x8x16x128xbf16, #tpu.memory_space<vmem>>) attributes {dimension_semantics = [#tpu.dimension_semantics<parallel>, #tpu.dimension_semantics<parallel>], iteration_bounds = array<i64: 2, 2>, scalar_prefetch = 0 : i64, scratch_operands = 0 : i64, tpu.core_type = #tpu.core_type<tc>, window_params = [{transform_indices = @transform_0, window_bounds = array<i64: 1, 18, 16, 384>}, {pipeline_mode = #tpu.pipeline_mode<synchronous>, transform_indices = @transform_1, window_bounds = array<i64: 3, 384, 128>}, {pipeline_mode = #tpu.pipeline_mode<synchronous>, transform_indices = @transform_2, window_bounds = array<i64: 1, 128>}, {transform_indices = @transform_3, window_bounds = array<i64: 1, 8, 16, 128>}]} {
    %c8_i32 = arith.constant 8 : i32
    %0 = arith.muli %arg1, %c8_i32 : i32
    %1 = tpu.assume_multiple %0, 8 : i32
    %cst = arith.constant 0.000000e+00 : f32
    %2 = vector.broadcast %cst : f32 to vector<128x128xf32>
    %c0_i32 = arith.constant 0 : i32
    %3 = arith.addi %1, %c0_i32 : i32
    %c0 = arith.constant 0 : index
    %4 = arith.index_cast %3 : i32 to index
    %c0_0 = arith.constant 0 : index
    %c0_1 = arith.constant 0 : index
    %5 = vector.load %arg2[%c0, %4, %c0_0, %c0_1] : memref<1x18x16x384xbf16, #tpu.memory_space<vmem>>, vector<1x8x16x384xbf16>
    %6 = vector.shape_cast %5 : vector<1x8x16x384xbf16> to vector<8x16x384xbf16>
    %7 = vector.shape_cast %6 : vector<8x16x384xbf16> to vector<128x384xbf16>
    %c0_2 = arith.constant 0 : index
    %c0_3 = arith.constant 0 : index
    %c0_4 = arith.constant 0 : index
    %8 = vector.load %arg3[%c0_2, %c0_3, %c0_4] : memref<3x384x128xbf16, #tpu.memory_space<vmem>>, vector<1x384x128xbf16>
    %9 = vector.shape_cast %8 : vector<1x384x128xbf16> to vector<384x128xbf16>
    %cst_5 = arith.constant dense<0.000000e+00> : vector<128x128xf32>
    %10 = tpu.matmul %7, %9, %cst_5 {dimension_numbers = #tpu.dot_dimension_numbers<[1], [0], [0], [1], [0, 0, 1, 1], [], []>} : vector<128x384xbf16>, vector<384x128xbf16>, vector<128x128xf32> -> vector<128x128xf32>
    %11 = arith.addf %2, %10 : vector<128x128xf32>
    %c1_i32 = arith.constant 1 : i32
    %12 = arith.addi %1, %c1_i32 : i32
    %c0_6 = arith.constant 0 : index
    %13 = arith.index_cast %12 : i32 to index
    %c0_7 = arith.constant 0 : index
    %c0_8 = arith.constant 0 : index
    %14 = vector.load %arg2[%c0_6, %13, %c0_7, %c0_8] : memref<1x18x16x384xbf16, #tpu.memory_space<vmem>>, vector<1x8x16x384xbf16>
    %15 = vector.shape_cast %14 : vector<1x8x16x384xbf16> to vector<8x16x384xbf16>
    %16 = vector.shape_cast %15 : vector<8x16x384xbf16> to vector<128x384xbf16>
    %c1 = arith.constant 1 : index
    %c0_9 = arith.constant 0 : index
    %c0_10 = arith.constant 0 : index
    %17 = vector.load %arg3[%c1, %c0_9, %c0_10] : memref<3x384x128xbf16, #tpu.memory_space<vmem>>, vector<1x384x128xbf16>
    %18 = vector.shape_cast %17 : vector<1x384x128xbf16> to vector<384x128xbf16>
    %cst_11 = arith.constant dense<0.000000e+00> : vector<128x128xf32>
    %19 = tpu.matmul %16, %18, %cst_11 {dimension_numbers = #tpu.dot_dimension_numbers<[1], [0], [0], [1], [0, 0, 1, 1], [], []>} : vector<128x384xbf16>, vector<384x128xbf16>, vector<128x128xf32> -> vector<128x128xf32>
    %20 = arith.addf %11, %19 : vector<128x128xf32>
    %c2_i32 = arith.constant 2 : i32
    %21 = arith.addi %1, %c2_i32 : i32
    %c0_12 = arith.constant 0 : index
    %22 = arith.index_cast %21 : i32 to index
    %c0_13 = arith.constant 0 : index
    %c0_14 = arith.constant 0 : index
    %23 = vector.load %arg2[%c0_12, %22, %c0_13, %c0_14] : memref<1x18x16x384xbf16, #tpu.memory_space<vmem>>, vector<1x8x16x384xbf16>
    %24 = vector.shape_cast %23 : vector<1x8x16x384xbf16> to vector<8x16x384xbf16>
    %25 = vector.shape_cast %24 : vector<8x16x384xbf16> to vector<128x384xbf16>
    %c2 = arith.constant 2 : index
    %c0_15 = arith.constant 0 : index
    %c0_16 = arith.constant 0 : index
    %26 = vector.load %arg3[%c2, %c0_15, %c0_16] : memref<3x384x128xbf16, #tpu.memory_space<vmem>>, vector<1x384x128xbf16>
    %27 = vector.shape_cast %26 : vector<1x384x128xbf16> to vector<384x128xbf16>
    %cst_17 = arith.constant dense<0.000000e+00> : vector<128x128xf32>
    %28 = tpu.matmul %25, %27, %cst_17 {dimension_numbers = #tpu.dot_dimension_numbers<[1], [0], [0], [1], [0, 0, 1, 1], [], []>} : vector<128x384xbf16>, vector<384x128xbf16>, vector<128x128xf32> -> vector<128x128xf32>
    %29 = arith.addf %20, %28 : vector<128x128xf32>
    %c0_18 = arith.constant 0 : index
    %c0_19 = arith.constant 0 : index
    %30 = vector.load %arg4[%c0_18, %c0_19] : memref<1x128xf32, #tpu.memory_space<vmem>>, vector<1x128xf32>
    %31 = vector.broadcast %30 : vector<1x128xf32> to vector<128x128xf32>
    %32 = arith.addf %29, %31 : vector<128x128xf32>
    %cst_20 = arith.constant 1.000000e-01 : f32
    %33 = vector.broadcast %cst_20 : f32 to vector<128x128xf32>
    %34 = arith.mulf %33, %32 : vector<128x128xf32>
    %35 = arith.maximumf %32, %34 : vector<128x128xf32>
    %36 = vector.shape_cast %35 : vector<128x128xf32> to vector<8x16x128xf32>
    %37 = arith.truncf %36 : vector<8x16x128xf32> to vector<8x16x128xbf16>
    %c0_21 = arith.constant 0 : index
    %c0_22 = arith.constant 0 : index
    %c0_23 = arith.constant 0 : index
    %c0_24 = arith.constant 0 : index
    %38 = vector.load %arg5[%c0_21, %c0_22, %c0_23, %c0_24] : memref<1x8x16x128xbf16, #tpu.memory_space<vmem>>, vector<1x8x16x128xbf16>
    %39 = vector.shape_cast %38 : vector<1x8x16x128xbf16> to vector<8x16x128xbf16>
    %40 = vector.shape_cast %37 : vector<8x16x128xbf16> to vector<1x8x16x128xbf16>
    tpu.vector_store %arg5[%c0_21, %c0_22, %c0_23, %c0_24], %40 {strides = array<i32>} : memref<1x8x16x128xbf16, #tpu.memory_space<vmem>>, vector<1x8x16x128xbf16>,
    return
  }
  func.func @transform_0(%arg0: i32, %arg1: i32) -> (i32, i32, i32, i32) {
    %c0_i32 = arith.constant 0 : i32
    %c0_i32_0 = arith.constant 0 : i32
    %c0_i32_1 = arith.constant 0 : i32
    %c0_i32_2 = arith.constant 0 : i32
    return %arg0, %c0_i32, %c0_i32_0, %c0_i32_1 : i32, i32, i32, i32
  }
  func.func @transform_1(%arg0: i32, %arg1: i32) -> (i32, i32, i32) {
    %c0_i32 = arith.constant 0 : i32
    %c0_i32_0 = arith.constant 0 : i32
    %c0_i32_1 = arith.constant 0 : i32
    %c0_i32_2 = arith.constant 0 : i32
    return %c0_i32, %c0_i32_0, %c0_i32_1 : i32, i32, i32
  }
  func.func @transform_2(%arg0: i32, %arg1: i32) -> (i32, i32) {
    %c0_i32 = arith.constant 0 : i32
    %c0_i32_0 = arith.constant 0 : i32
    %c0_i32_1 = arith.constant 0 : i32
    return %c0_i32, %c0_i32_0 : i32, i32
  }
  func.func @transform_3(%arg0: i32, %arg1: i32) -> (i32, i32, i32, i32) {
    %c0_i32 = arith.constant 0 : i32
    %c0_i32_0 = arith.constant 0 : i32
    %c0_i32_1 = arith.constant 0 : i32
    return %arg0, %arg1, %c0_i32, %c0_i32_0 : i32, i32, i32, i32
  }
}

module attributes {stable_mosaic.version = 11 : i64} {
  func.func @_conv1x1_kernel(%arg0: i32, %arg1: memref<512x128xbf16, #tpu.memory_space<vmem>>, %arg2: memref<128x128xbf16, #tpu.memory_space<vmem>>, %arg3: memref<1x128xf32, #tpu.memory_space<vmem>>, %arg4: memref<512x128xbf16, #tpu.memory_space<vmem>>) attributes {dimension_semantics = [#tpu.dimension_semantics<parallel>], iteration_bounds = array<i64: 1>, scalar_prefetch = 0 : i64, scratch_operands = 0 : i64, tpu.core_type = #tpu.core_type<tc>, window_params = [{transform_indices = @transform_0, window_bounds = array<i64: 512, 128>}, {pipeline_mode = #tpu.pipeline_mode<synchronous>, transform_indices = @transform_1, window_bounds = array<i64: 128, 128>}, {pipeline_mode = #tpu.pipeline_mode<synchronous>, transform_indices = @transform_2, window_bounds = array<i64: 1, 128>}, {transform_indices = @transform_3, window_bounds = array<i64: 512, 128>}]} {
    %c0 = arith.constant 0 : index
    %c0_0 = arith.constant 0 : index
    %0 = vector.load %arg1[%c0, %c0_0] : memref<512x128xbf16, #tpu.memory_space<vmem>>, vector<512x128xbf16>
    %c0_1 = arith.constant 0 : index
    %c0_2 = arith.constant 0 : index
    %1 = vector.load %arg2[%c0_1, %c0_2] : memref<128x128xbf16, #tpu.memory_space<vmem>>, vector<128x128xbf16>
    %cst = arith.constant dense<0.000000e+00> : vector<512x128xf32>
    %2 = tpu.matmul %0, %1, %cst {dimension_numbers = #tpu.dot_dimension_numbers<[1], [0], [0], [1], [0, 0, 1, 1], [], []>} : vector<512x128xbf16>, vector<128x128xbf16>, vector<512x128xf32> -> vector<512x128xf32>
    %c0_3 = arith.constant 0 : index
    %c0_4 = arith.constant 0 : index
    %3 = vector.load %arg3[%c0_3, %c0_4] : memref<1x128xf32, #tpu.memory_space<vmem>>, vector<1x128xf32>
    %4 = vector.broadcast %3 : vector<1x128xf32> to vector<512x128xf32>
    %5 = arith.addf %2, %4 : vector<512x128xf32>
    %6 = arith.truncf %5 : vector<512x128xf32> to vector<512x128xbf16>
    %c0_5 = arith.constant 0 : index
    %c0_6 = arith.constant 0 : index
    %7 = vector.load %arg4[%c0_5, %c0_6] : memref<512x128xbf16, #tpu.memory_space<vmem>>, vector<512x128xbf16>
    tpu.vector_store %arg4[%c0_5, %c0_6], %6 {strides = array<i32>} : memref<512x128xbf16, #tpu.memory_space<vmem>>, vector<512x128xbf16>,
    return
  }
  func.func @transform_0(%arg0: i32) -> (i32, i32) {
    %c0_i32 = arith.constant 0 : i32
    %c0_i32_0 = arith.constant 0 : i32
    return %arg0, %c0_i32 : i32, i32
  }
  func.func @transform_1(%arg0: i32) -> (i32, i32) {
    %c0_i32 = arith.constant 0 : i32
    %c0_i32_0 = arith.constant 0 : i32
    %c0_i32_1 = arith.constant 0 : i32
    return %c0_i32, %c0_i32_0 : i32, i32
  }
  func.func @transform_2(%arg0: i32) -> (i32, i32) {
    %c0_i32 = arith.constant 0 : i32
    %c0_i32_0 = arith.constant 0 : i32
    %c0_i32_1 = arith.constant 0 : i32
    return %c0_i32, %c0_i32_0 : i32, i32
  }
  func.func @transform_3(%arg0: i32) -> (i32, i32) {
    %c0_i32 = arith.constant 0 : i32
    %c0_i32_0 = arith.constant 0 : i32
    return %arg0, %c0_i32 : i32, i32
  }
}

</mosaic_0001>

<llo_original>
// kernel: yolo_block_forward.7
$region0: #{yolo_block_forward.7}
  #allocation0 [shape = 'u32[]', space=smem, size = 0x4, offset = 0x4, fixed_abs, tag = 'smem constant byte address 0x4 - core index']
  #allocation1 [shape = 'u32[144,128]{1,0:T(1,128)}', space=vmem, size = 0x12000, scoped, tag = 'internal scratch']
  %s0 = inlined_call_operand.hbm [shape: bf16[512,128], index: 0, kind: input, shape index: {}]
  %s1 = inlined_call_operand.hbm [shape: bf16[128,128], index: 1, kind: input, shape index: {}]
  %s2 = inlined_call_operand.hbm [shape: f32[1,128], index: 2, kind: input, shape index: {}]
  %s3 = inlined_call_operand.hbm [shape: bf16[512,128], index: 3, kind: output, shape index: {}]
  %s4 = sld [smem:[#allocation0]]
  $region34: #{yolo_block_forward.7} parent=0
    _
  %s6 = ssub.s32 1, %s4
  %s7 = scalar_select 0, %s6, %s4
  $region1: #{yolo_block_forward.7} parent=0
    #allocation2 [shape = 'u8[131072]{0}', space=vmem, size = 0x20000, scoped, tag = 'input window, operand 0, single buffered']
    #allocation3 [shape = 's32[1]{0}', space=sflag, size = 0x4, scoped, tag = 'scoped memory for yolo_block_forward.7']
    #allocation4 [shape = 's32[1]{0}', space=sflag, size = 0x4, scoped, tag = 'scoped memory for yolo_block_forward.7']
    #allocation5 [shape = 'u8[32768]{0}', space=vmem, size = 0x8000, scoped, tag = 'input window, operand 1, single buffered']
    #allocation6 [shape = 's32[1]{0}', space=sflag, size = 0x4, scoped, tag = 'scoped memory for yolo_block_forward.7']
    #allocation7 [shape = 'u8[512]{0}', space=vmem, size = 0x400, scoped, tag = 'input window, operand 2, single buffered']
    #allocation8 [shape = 'u8[131072]{0}', space=vmem, size = 0x20000, scoped, tag = 'output window, operand 0, single buffered']
    %8 = vsyncpa [#allocation3], 0
    %9 = vsyncpa [#allocation6], 0
    %10 = vsyncpa [#allocation4], 0
    // Predicated region
    $region2: #{yolo_block_forward.7} parent=1 // pred_check
      _
    $region3: #{yolo_block_forward.7} parent=1 // pred_check_branch
      %12 = sbr.rel (0) target = $region5
    $region4: #{yolo_block_forward.7} parent=1 // pred_region
      %s14 = ssub.s32 4096, 4096
      %15 = vsyncadd [#allocation3], %s14
      %s16 = sshll.u32 [#allocation2], 4
      %s17 = int_to_ptr.vmem [resolvable:$true] %s16
      %22 = dma.hbm_to_vmem [thread:$0]  %s0, 4096, %s17, [#allocation3], 64, 64, 4
    $region5: #{yolo_block_forward.7} parent=1 // pred_fallthru
      _
    // Predicated region
    $region6: #{yolo_block_forward.7} parent=1 // pred_check
      _
    $region7: #{yolo_block_forward.7} parent=1 // pred_check_branch
      %24 = sbr.rel (0) target = $region9
    $region8: #{yolo_block_forward.7} parent=1 // pred_region
      %s26 = ssub.s32 1024, 1024
      %27 = vsyncadd [#allocation6], %s26
      %s28 = sshll.u32 [#allocation5], 4
      %s29 = int_to_ptr.vmem [resolvable:$true] %s28
      %34 = dma.hbm_to_vmem [thread:$0]  %s1, 1024, %s29, [#allocation6], 64, 64, 4
    $region9: #{yolo_block_forward.7} parent=1 // pred_fallthru
      _
    // Predicated region
    $region10: #{yolo_block_forward.7} parent=1 // pred_check
      _
    $region11: #{yolo_block_forward.7} parent=1 // pred_check_branch
      %36 = sbr.rel (0) target = $region13
    $region12: #{yolo_block_forward.7} parent=1 // pred_region
      %s38 = ssub.s32 16, 16
      %39 = vsyncadd [#allocation6], %s38
      %s41 = sshll.u32 [#allocation7], 4
      %s42 = int_to_ptr.vmem [resolvable:$true] %s41
      %44 = dma.hbm_to_vmem [thread:$0]  %s2, 16, %s42, [#allocation6]
    $region13: #{yolo_block_forward.7} parent=1 // pred_fallthru
      _
    // Predicated region
    $region14: #{yolo_block_forward.7} parent=1 // pred_check
      _
    $region15: #{yolo_block_forward.7} parent=1 // pred_check_branch
      %46 = sbr.rel (0) target = $region17
    $region16: #{yolo_block_forward.7} parent=1 // pred_region
      %47 = dma.done [#allocation3], 4096
    $region17: #{yolo_block_forward.7} parent=1 // pred_fallthru
      _
    // Predicated region
    $region18: #{yolo_block_forward.7} parent=1 // pred_check
      _
    $region19: #{yolo_block_forward.7} parent=1 // pred_check_branch
      %49 = sbr.rel (0) target = $region21
    $region20: #{yolo_block_forward.7} parent=1 // pred_region
      %50 = dma.done [#allocation6], 1024
    $region21: #{yolo_block_forward.7} parent=1 // pred_fallthru
      _
    // Predicated region
    $region22: #{yolo_block_forward.7} parent=1 // pred_check
      _
    $region23: #{yolo_block_forward.7} parent=1 // pred_check_branch
      %52 = sbr.rel (0) target = $region25
    $region24: #{yolo_block_forward.7} parent=1 // pred_region
      %53 = dma.done [#allocation6], 16
    $region25: #{yolo_block_forward.7} parent=1 // pred_fallthru
      _
    %v55 = vld [vmem:[#allocation2] sm:$0xf]
    %v56 = vld [vmem:[#allocation2 + $0x4] sm:$0xf]
    %v57 = vld [vmem:[#allocation2 + $0x8] sm:$0xf]
    %v58 = vld [vmem:[#allocation2 + $0xc] sm:$0xf]
    %v59 = vld [vmem:[#allocation2 + $0x10] sm:$0xf]
    %v60 = vld [vmem:[#allocation2 + $0x14] sm:$0xf]
    %v61 = vld [vmem:[#allocation2 + $0x18] sm:$0xf]
    %v62 = vld [vmem:[#allocation2 + $0x1c] sm:$0xf]
    %v63 = vld [vmem:[#allocation2 + $0x20] sm:$0xf]
    %v64 = vld [vmem:[#allocation2 + $0x24] sm:$0xf]
    %v65 = vld [vmem:[#allocation2 + $0x28] sm:$0xf]
    %v66 = vld [vmem:[#allocation2 + $0x2c] sm:$0xf]
    %v67 = vld [vmem:[#allocation2 + $0x30] sm:$0xf]
    %v68 = vld [vmem:[#allocation2 + $0x34] sm:$0xf]
    %v69 = vld [vmem:[#allocation2 + $0x38] sm:$0xf]
    %v70 = vld [vmem:[#allocation2 + $0x3c] sm:$0xf]
    %v71 = vld [vmem:[#allocation2 + $0x40] sm:$0xf]
    %v72 = vld [vmem:[#allocation2 + $0x44] sm:$0xf]
    %v73 = vld [vmem:[#allocation2 + $0x48] sm:$0xf]
    %v74 = vld [vmem:[#allocation2 + $0x4c] sm:$0xf]
    %v75 = vld [vmem:[#allocation2 + $0x50] sm:$0xf]
    %v76 = vld [vmem:[#allocation2 + $0x54] sm:$0xf]
    %v77 = vld [vmem:[#allocation2 + $0x58] sm:$0xf]
    %v78 = vld [vmem:[#allocation2 + $0x5c] sm:$0xf]
    %v79 = vld [vmem:[#allocation2 + $0x60] sm:$0xf]
    %v80 = vld [vmem:[#allocation2 + $0x64] sm:$0xf]
    %v81 = vld [vmem:[#allocation2 + $0x68] sm:$0xf]
    %v82 = vld [vmem:[#allocation2 + $0x6c] sm:$0xf]
    %v83 = vld [vmem:[#allocation2 + $0x70] sm:$0xf]
    %v84 = vld [vmem:[#allocation2 + $0x74] sm:$0xf]
    %v85 = vld [vmem:[#allocation2 + $0x78] sm:$0xf]
    %v86 = vld [vmem:[#allocation2 + $0x7c] sm:$0xf]
    %v87 = vld [vmem:[#allocation2 + $0x80] sm:$0xf]
    %v88 = vld [vmem:[#allocation2 + $0x84] sm:$0xf]
    %v89 = vld [vmem:[#allocation2 + $0x88] sm:$0xf]
    %v90 = vld [vmem:[#allocation2 + $0x8c] sm:$0xf]
    %v91 = vld [vmem:[#allocation2 + $0x90] sm:$0xf]
    %v92 = vld [vmem:[#allocation2 + $0x94] sm:$0xf]
    %v93 = vld [vmem:[#allocation2 + $0x98] sm:$0xf]
    %v94 = vld [vmem:[#allocation2 + $0x9c] sm:$0xf]
    %v95 = vld [vmem:[#allocation2 + $0xa0] sm:$0xf]
    %v96 = vld [vmem:[#allocation2 + $0xa4] sm:$0xf]
    %v97 = vld [vmem:[#allocation2 + $0xa8] sm:$0xf]
    %v98 = vld [vmem:[#allocation2 + $0xac] sm:$0xf]
    %v99 = vld [vmem:[#allocation2 + $0xb0] sm:$0xf]
    %v100 = vld [vmem:[#allocation2 + $0xb4] sm:$0xf]
    %v101 = vld [vmem:[#allocation2 + $0xb8] sm:$0xf]
    %v102 = vld [vmem:[#allocation2 + $0xbc] sm:$0xf]
    %v103 = vld [vmem:[#allocation2 + $0xc0] sm:$0xf]
    %v104 = vld [vmem:[#allocation2 + $0xc4] sm:$0xf]
    %v105 = vld [vmem:[#allocation2 + $0xc8] sm:$0xf]
    %v106 = vld [vmem:[#allocation2 + $0xcc] sm:$0xf]
    %v107 = vld [vmem:[#allocation2 + $0xd0] sm:$0xf]
    %v108 = vld [vmem:[#allocation2 + $0xd4] sm:$0xf]
    %v109 = vld [vmem:[#allocation2 + $0xd8] sm:$0xf]
    %v110 = vld [vmem:[#allocation2 + $0xdc] sm:$0xf]
    %v111 = vld [vmem:[#allocation2 + $0xe0] sm:$0xf]
    %v112 = vld [vmem:[#allocation2 + $0xe4] sm:$0xf]
    %v113 = vld [vmem:[#allocation2 + $0xe8] sm:$0xf]
    %v114 = vld [vmem:[#allocation2 + $0xec] sm:$0xf]
    %v115 = vld [vmem:[#allocation2 + $0xf0] sm:$0xf]
    %v116 = vld [vmem:[#allocation2 + $0xf4] sm:$0xf]
    %v117 = vld [vmem:[#allocation2 + $0xf8] sm:$0xf]
    %v118 = vld [vmem:[#allocation2 + $0xfc] sm:$0xf]
    %v119 = vld [vmem:[#allocation5] sm:$0xf]
    %v120 = vld [vmem:[#allocation5 + $0x4] sm:$0xf]
    %v121 = vld [vmem:[#allocation5 + $0x8] sm:$0xf]
    %v122 = vld [vmem:[#allocation5 + $0xc] sm:$0xf]
    %v123 = vld [vmem:[#allocation5 + $0x10] sm:$0xf]
    %v124 = vld [vmem:[#allocation5 + $0x14] sm:$0xf]
    %v125 = vld [vmem:[#allocation5 + $0x18] sm:$0xf]
    %v126 = vld [vmem:[#allocation5 + $0x1c] sm:$0xf]
    %v127 = vld [vmem:[#allocation5 + $0x20] sm:$0xf]
    %v128 = vld [vmem:[#allocation5 + $0x24] sm:$0xf]
    %v129 = vld [vmem:[#allocation5 + $0x28] sm:$0xf]
    %v130 = vld [vmem:[#allocation5 + $0x2c] sm:$0xf]
    %v131 = vld [vmem:[#allocation5 + $0x30] sm:$0xf]
    %v132 = vld [vmem:[#allocation5 + $0x34] sm:$0xf]
    %v133 = vld [vmem:[#allocation5 + $0x38] sm:$0xf]
    %v134 = vld [vmem:[#allocation5 + $0x3c] sm:$0xf]
    %v135 = vld [vmem:[#allocation7] sm:$0x1]
    %v137 = vlaneseq
    %v138 = vshrl.u32 %v137, 7
    %v139 = vsub.s32 0, %v138
    %v140 = vrot.slane %v135, %v139
    %v206 = vunpack.c.l.b16 %v55
    %v207 = vunpack.c.l.b16 %v56
    %v208 = vunpack.c.l.b16 %v57
    %v209 = vunpack.c.l.b16 %v58
    %v210 = vunpack.c.l.b16 %v59
    %v211 = vunpack.c.l.b16 %v60
    %v212 = vunpack.c.l.b16 %v61
    %v213 = vunpack.c.l.b16 %v62
    %v214 = vunpack.c.l.b16 %v63
    %v215 = vunpack.c.l.b16 %v64
    %v216 = vunpack.c.l.b16 %v65
    %v217 = vunpack.c.l.b16 %v66
    %v218 = vunpack.c.l.b16 %v67
    %v219 = vunpack.c.l.b16 %v68
    %v220 = vunpack.c.l.b16 %v69
    %v221 = vunpack.c.l.b16 %v70
    %v222 = vunpack.c.l.b16 %v71
    %v223 = vunpack.c.l.b16 %v72
    %v224 = vunpack.c.l.b16 %v73
    %v225 = vunpack.c.l.b16 %v74
    %v226 = vunpack.c.l.b16 %v75
    %v227 = vunpack.c.l.b16 %v76
    %v228 = vunpack.c.l.b16 %v77
    %v229 = vunpack.c.l.b16 %v78
    %v230 = vunpack.c.l.b16 %v79
    %v231 = vunpack.c.l.b16 %v80
    %v232 = vunpack.c.l.b16 %v81
    %v233 = vunpack.c.l.b16 %v82
    %v234 = vunpack.c.l.b16 %v83
    %v235 = vunpack.c.l.b16 %v84
    %v236 = vunpack.c.l.b16 %v85
    %v237 = vunpack.c.l.b16 %v86
    %v238 = vunpack.c.l.b16 %v87
    %v239 = vunpack.c.l.b16 %v88
    %v240 = vunpack.c.l.b16 %v89
    %v241 = vunpack.c.l.b16 %v90
    %v242 = vunpack.c.l.b16 %v91
    %v243 = vunpack.c.l.b16 %v92
    %v244 = vunpack.c.l.b16 %v93
    %v245 = vunpack.c.l.b16 %v94
    %v246 = vunpack.c.l.b16 %v95
    %v247 = vunpack.c.l.b16 %v96
    %v248 = vunpack.c.l.b16 %v97
    %v249 = vunpack.c.l.b16 %v98
    %v250 = vunpack.c.l.b16 %v99
    %v251 = vunpack.c.l.b16 %v100
    %v252 = vunpack.c.l.b16 %v101
    %v253 = vunpack.c.l.b16 %v102
    %v254 = vunpack.c.l.b16 %v103
    %v255 = vunpack.c.l.b16 %v104
    %v256 = vunpack.c.l.b16 %v105
    %v257 = vunpack.c.l.b16 %v106
    %v258 = vunpack.c.l.b16 %v107
    %v259 = vunpack.c.l.b16 %v108
    %v260 = vunpack.c.l.b16 %v109
    %v261 = vunpack.c.l.b16 %v110
    %v262 = vunpack.c.l.b16 %v111
    %v263 = vunpack.c.l.b16 %v112
    %v264 = vunpack.c.l.b16 %v113
    %v265 = vunpack.c.l.b16 %v114
    %v266 = vunpack.c.l.b16 %v115
    %v267 = vunpack.c.l.b16 %v116
    %v268 = vunpack.c.l.b16 %v117
    %v269 = vunpack.c.l.b16 %v118
    %v270 = vpack.c.b16 %v207, %v206
    %v271 = vpack.c.b16 %v209, %v208
    %v272 = vpack.c.b16 %v211, %v210
    %v273 = vpack.c.b16 %v213, %v212
    %v274 = vpack.c.b16 %v215, %v214
    %v275 = vpack.c.b16 %v217, %v216
    %v276 = vpack.c.b16 %v219, %v218
    %v277 = vpack.c.b16 %v221, %v220
    %v278 = vpack.c.b16 %v223, %v222
    %v279 = vpack.c.b16 %v225, %v224
    %v280 = vpack.c.b16 %v227, %v226
    %v281 = vpack.c.b16 %v229, %v228
    %v282 = vpack.c.b16 %v231, %v230
    %v283 = vpack.c.b16 %v233, %v232
    %v284 = vpack.c.b16 %v235, %v234
    %v285 = vpack.c.b16 %v237, %v236
    %v286 = vpack.c.b16 %v239, %v238
    %v287 = vpack.c.b16 %v241, %v240
    %v288 = vpack.c.b16 %v243, %v242
    %v289 = vpack.c.b16 %v245, %v244
    %v290 = vpack.c.b16 %v247, %v246
    %v291 = vpack.c.b16 %v249, %v248
    %v292 = vpack.c.b16 %v251, %v250
    %v293 = vpack.c.b16 %v253, %v252
    %v294 = vpack.c.b16 %v255, %v254
    %v295 = vpack.c.b16 %v257, %v256
    %v296 = vpack.c.b16 %v259, %v258
    %v297 = vpack.c.b16 %v261, %v260
    %v298 = vpack.c.b16 %v263, %v262
    %v299 = vpack.c.b16 %v265, %v264
    %v300 = vpack.c.b16 %v267, %v266
    %v301 = vpack.c.b16 %v269, %v268
    %v350 = vunpack.c.l.b16 %v119
    %v351 = vunpack.c.l.b16 %v120
    %v352 = vunpack.c.l.b16 %v121
    %v353 = vunpack.c.l.b16 %v122
    %v354 = vunpack.c.l.b16 %v123
    %v355 = vunpack.c.l.b16 %v124
    %v356 = vunpack.c.l.b16 %v125
    %v357 = vunpack.c.l.b16 %v126
    %v358 = vunpack.c.l.b16 %v127
    %v359 = vunpack.c.l.b16 %v128
    %v360 = vunpack.c.l.b16 %v129
    %v361 = vunpack.c.l.b16 %v130
    %v362 = vunpack.c.l.b16 %v131
    %v363 = vunpack.c.l.b16 %v132
    %v364 = vunpack.c.l.b16 %v133
    %v365 = vunpack.c.l.b16 %v134
    %v366 = vpack.c.b16 %v351, %v350
    %v367 = vpack.c.b16 %v353, %v352
    %v368 = vpack.c.b16 %v355, %v354
    %v369 = vpack.c.b16 %v357, %v356
    %v370 = vpack.c.b16 %v359, %v358
    %v371 = vpack.c.b16 %v361, %v360
    %v372 = vpack.c.b16 %v363, %v362
    %v373 = vpack.c.b16 %v365, %v364
    %382 = vmatprep.subr.bf16.mxu0 0
    %383 = vmatpush1.bf16.msra.mxu0 %v366
    %384 = vmatprep.subr.bf16.mxu0 0
    %385 = vmatpush1.bf16.msra.mxu0 %v367
    %386 = vmatprep.subr.bf16.mxu0 0
    %387 = vmatpush1.bf16.msra.mxu0 %v368
    %388 = vmatprep.subr.bf16.mxu0 0
    %389 = vmatpush1.bf16.msra.mxu0 %v369
    %390 = vmatprep.subr.bf16.mxu0 0
    %391 = vmatpush1.bf16.msra.mxu0 %v370
    %392 = vmatprep.subr.bf16.mxu0 0
    %393 = vmatpush1.bf16.msra.mxu0 %v371
    %394 = vmatprep.subr.bf16.mxu0 0
    %395 = vmatpush1.bf16.msra.mxu0 %v372
    %396 = vmatprep.subr.bf16.mxu0 0
    %397 = vmatpush1.bf16.msra.mxu0 %v373
    %398 = vmatprep.subr.bf16.mxu0 0
    %399 = vmatpush1.bf16.msra.mxu0 0
    %400 = vmatprep.subr.bf16.mxu0 0
    %401 = vmatpush1.bf16.msra.mxu0 0
    %402 = vmatprep.subr.bf16.mxu0 0
    %403 = vmatpush1.bf16.msra.mxu0 0
    %404 = vmatprep.subr.bf16.mxu0 0
    %405 = vmatpush1.bf16.msra.mxu0 0
    %406 = vmatprep.subr.bf16.mxu0 0
    %407 = vmatpush1.bf16.msra.mxu0 0
    %408 = vmatprep.subr.bf16.mxu0 0
    %409 = vmatpush1.bf16.msra.mxu0 0
    %410 = vmatprep.subr.bf16.mxu0 0
    %411 = vmatpush1.bf16.msra.mxu0 0
    %412 = vmatprep.subr.bf16.mxu0 0
    %413 = vmatpush1.bf16.msra.mxu0 0
    %414 = vmatprep.mubr.bf16.mxu0 0
    %415 = vmatmul.mubr.bf16.gmra.mrb[0].mxu0 %v270
    %v416 = vpop.f32.mrb[0].mxu0
    %v417 = vadd.f32 %v140, %v416
    %v418 = vpop.f32.mrb[0].mxu0
    %v419 = vpop.f32.mrb[0].mxu0
    %v420 = vadd.f32 %v140, %v419
    %v421 = vpop.f32.mrb[0].mxu0
    %422 = vmatprep.mubr.bf16.mxu0 0
    %423 = vmatmul.mubr.bf16.gmra.mrb[0].mxu0 %v271
    %v424 = vpop.f32.mrb[0].mxu0
    %v425 = vadd.f32 %v140, %v424
    %v426 = vpop.f32.mrb[0].mxu0
    %v427 = vpop.f32.mrb[0].mxu0
    %v428 = vadd.f32 %v140, %v427
    %v429 = vpop.f32.mrb[0].mxu0
    %430 = vmatprep.mubr.bf16.mxu0 0
    %431 = vmatmul.mubr.bf16.gmra.mrb[0].mxu0 %v272
    %v432 = vpop.f32.mrb[0].mxu0
    %v433 = vadd.f32 %v140, %v432
    %v434 = vpop.f32.mrb[0].mxu0
    %v435 = vpop.f32.mrb[0].mxu0
    %v436 = vadd.f32 %v140, %v435
    %v437 = vpop.f32.mrb[0].mxu0
    %438 = vmatprep.mubr.bf16.mxu0 0
    %439 = vmatmul.mubr.bf16.gmra.mrb[0].mxu0 %v273
    %v440 = vpop.f32.mrb[0].mxu0
    %v441 = vadd.f32 %v140, %v440
    %v442 = vpop.f32.mrb[0].mxu0
    %v443 = vpop.f32.mrb[0].mxu0
    %v444 = vadd.f32 %v140, %v443
    %v445 = vpop.f32.mrb[0].mxu0
    %446 = vmatprep.mubr.bf16.mxu0 0
    %447 = vmatmul.mubr.bf16.gmra.mrb[0].mxu0 %v274
    %v448 = vpop.f32.mrb[0].mxu0
    %v449 = vadd.f32 %v140, %v448
    %v450 = vpop.f32.mrb[0].mxu0
    %v451 = vpop.f32.mrb[0].mxu0
    %v452 = vadd.f32 %v140, %v451
    %v453 = vpop.f32.mrb[0].mxu0
    %454 = vmatprep.mubr.bf16.mxu0 0
    %455 = vmatmul.mubr.bf16.gmra.mrb[0].mxu0 %v275
    %v456 = vpop.f32.mrb[0].mxu0
    %v457 = vadd.f32 %v140, %v456
    %v458 = vpop.f32.mrb[0].mxu0
    %v459 = vpop.f32.mrb[0].mxu0
    %v460 = vadd.f32 %v140, %v459
    %v461 = vpop.f32.mrb[0].mxu0
    %462 = vmatprep.mubr.bf16.mxu0 0
    %463 = vmatmul.mubr.bf16.gmra.mrb[0].mxu0 %v276
    %v464 = vpop.f32.mrb[0].mxu0
    %v465 = vadd.f32 %v140, %v464
    %v466 = vpop.f32.mrb[0].mxu0
    %v467 = vpop.f32.mrb[0].mxu0
    %v468 = vadd.f32 %v140, %v467
    %v469 = vpop.f32.mrb[0].mxu0
    %470 = vmatprep.mubr.bf16.mxu0 0
    %471 = vmatmul.mubr.bf16.gmra.mrb[0].mxu0 %v277
    %v472 = vpop.f32.mrb[0].mxu0
    %v473 = vadd.f32 %v140, %v472
    %v474 = vpop.f32.mrb[0].mxu0
    %v475 = vpop.f32.mrb[0].mxu0
    %v476 = vadd.f32 %v140, %v475
    %v477 = vpop.f32.mrb[0].mxu0
    %478 = vmatprep.mubr.bf16.mxu0 0
    %479 = vmatmul.mubr.bf16.gmra.mrb[0].mxu0 %v278
    %v480 = vpop.f32.mrb[0].mxu0
    %v481 = vadd.f32 %v140, %v480
    %v482 = vpop.f32.mrb[0].mxu0
    %v483 = vpop.f32.mrb[0].mxu0
    %v484 = vadd.f32 %v140, %v483
    %v485 = vpop.f32.mrb[0].mxu0
    %486 = vmatprep.mubr.bf16.mxu0 0
    %487 = vmatmul.mubr.bf16.gmra.mrb[0].mxu0 %v279
    %v488 = vpop.f32.mrb[0].mxu0
    %v489 = vadd.f32 %v140, %v488
    %v490 = vpop.f32.mrb[0].mxu0
    %v491 = vpop.f32.mrb[0].mxu0
    %v492 = vadd.f32 %v140, %v491
    %v493 = vpop.f32.mrb[0].mxu0
    %494 = vmatprep.mubr.bf16.mxu0 0
    %495 = vmatmul.mubr.bf16.gmra.mrb[0].mxu0 %v280
    %v496 = vpop.f32.mrb[0].mxu0
    %v497 = vadd.f32 %v140, %v496
    %v498 = vpop.f32.mrb[0].mxu0
    %v499 = vpop.f32.mrb[0].mxu0
    %v500 = vadd.f32 %v140, %v499
    %v501 = vpop.f32.mrb[0].mxu0
    %502 = vmatprep.mubr.bf16.mxu0 0
    %503 = vmatmul.mubr.bf16.gmra.mrb[0].mxu0 %v281
    %v504 = vpop.f32.mrb[0].mxu0
    %v505 = vadd.f32 %v140, %v504
    %v506 = vpop.f32.mrb[0].mxu0
    %v507 = vpop.f32.mrb[0].mxu0
    %v508 = vadd.f32 %v140, %v507
    %v509 = vpop.f32.mrb[0].mxu0
    %510 = vmatprep.mubr.bf16.mxu0 0
    %511 = vmatmul.mubr.bf16.gmra.mrb[0].mxu0 %v282
    %v512 = vpop.f32.mrb[0].mxu0
    %v513 = vadd.f32 %v140, %v512
    %v514 = vpop.f32.mrb[0].mxu0
    %v515 = vpop.f32.mrb[0].mxu0
    %v516 = vadd.f32 %v140, %v515
    %v517 = vpop.f32.mrb[0].mxu0
    %518 = vmatprep.mubr.bf16.mxu0 0
    %519 = vmatmul.mubr.bf16.gmra.mrb[0].mxu0 %v283
    %v520 = vpop.f32.mrb[0].mxu0
    %v521 = vadd.f32 %v140, %v520
    %v522 = vpop.f32.mrb[0].mxu0
    %v523 = vpop.f32.mrb[0].mxu0
    %v524 = vadd.f32 %v140, %v523
    %v525 = vpop.f32.mrb[0].mxu0
    %526 = vmatprep.mubr.bf16.mxu0 0
    %527 = vmatmul.mubr.bf16.gmra.mrb[0].mxu0 %v284
    %v528 = vpop.f32.mrb[0].mxu0
    %v529 = vadd.f32 %v140, %v528
    %v530 = vpop.f32.mrb[0].mxu0
    %v531 = vpop.f32.mrb[0].mxu0
    %v532 = vadd.f32 %v140, %v531
    %v533 = vpop.f32.mrb[0].mxu0
    %534 = vmatprep.mubr.bf16.mxu0 0
    %535 = vmatmul.mubr.bf16.gmra.mrb[0].mxu0 %v285
    %v536 = vpop.f32.mrb[0].mxu0
    %v537 = vadd.f32 %v140, %v536
    %v538 = vpop.f32.mrb[0].mxu0
    %v539 = vpop.f32.mrb[0].mxu0
    %v540 = vadd.f32 %v140, %v539
    %v541 = vpop.f32.mrb[0].mxu0
    %542 = vmatprep.mubr.bf16.mxu0 0
    %543 = vmatmul.mubr.bf16.gmra.mrb[0].mxu0 %v286
    %v544 = vpop.f32.mrb[0].mxu0
    %v545 = vadd.f32 %v140, %v544
    %v546 = vpop.f32.mrb[0].mxu0
    %v547 = vpop.f32.mrb[0].mxu0
    %v548 = vadd.f32 %v140, %v547
    %v549 = vpop.f32.mrb[0].mxu0
    %550 = vmatprep.mubr.bf16.mxu0 0
    %551 = vmatmul.mubr.bf16.gmra.mrb[0].mxu0 %v287
    %v552 = vpop.f32.mrb[0].mxu0
    %v553 = vadd.f32 %v140, %v552
    %v554 = vpop.f32.mrb[0].mxu0
    %v555 = vpop.f32.mrb[0].mxu0
    %v556 = vadd.f32 %v140, %v555
    %v557 = vpop.f32.mrb[0].mxu0
    %558 = vmatprep.mubr.bf16.mxu0 0
    %559 = vmatmul.mubr.bf16.gmra.mrb[0].mxu0 %v288
    %v560 = vpop.f32.mrb[0].mxu0
    %v561 = vadd.f32 %v140, %v560
    %v562 = vpop.f32.mrb[0].mxu0
    %v563 = vpop.f32.mrb[0].mxu0
    %v564 = vadd.f32 %v140, %v563
    %v565 = vpop.f32.mrb[0].mxu0
    %566 = vmatprep.mubr.bf16.mxu0 0
    %567 = vmatmul.mubr.bf16.gmra.mrb[0].mxu0 %v289
    %v568 = vpop.f32.mrb[0].mxu0
    %v569 = vadd.f32 %v140, %v568
    %v570 = vpop.f32.mrb[0].mxu0
    %v571 = vpop.f32.mrb[0].mxu0
    %v572 = vadd.f32 %v140, %v571
    %v573 = vpop.f32.mrb[0].mxu0
    %574 = vmatprep.mubr.bf16.mxu0 0
    %575 = vmatmul.mubr.bf16.gmra.mrb[0].mxu0 %v290
    %v576 = vpop.f32.mrb[0].mxu0
    %v577 = vadd.f32 %v140, %v576
    %v578 = vpop.f32.mrb[0].mxu0
    %v579 = vpop.f32.mrb[0].mxu0
    %v580 = vadd.f32 %v140, %v579
    %v581 = vpop.f32.mrb[0].mxu0
    %582 = vmatprep.mubr.bf16.mxu0 0
    %583 = vmatmul.mubr.bf16.gmra.mrb[0].mxu0 %v291
    %v584 = vpop.f32.mrb[0].mxu0
    %v585 = vadd.f32 %v140, %v584
    %v586 = vpop.f32.mrb[0].mxu0
    %v587 = vpop.f32.mrb[0].mxu0
    %v588 = vadd.f32 %v140, %v587
    %v589 = vpop.f32.mrb[0].mxu0
    %590 = vmatprep.mubr.bf16.mxu0 0
    %591 = vmatmul.mubr.bf16.gmra.mrb[0].mxu0 %v292
    %v592 = vpop.f32.mrb[0].mxu0
    %v593 = vadd.f32 %v140, %v592
    %v594 = vpop.f32.mrb[0].mxu0
    %v595 = vpop.f32.mrb[0].mxu0
    %v596 = vadd.f32 %v140, %v595
    %v597 = vpop.f32.mrb[0].mxu0
    %598 = vmatprep.mubr.bf16.mxu0 0
    %599 = vmatmul.mubr.bf16.gmra.mrb[0].mxu0 %v293
    %v600 = vpop.f32.mrb[0].mxu0
    %v601 = vadd.f32 %v140, %v600
    %v602 = vpop.f32.mrb[0].mxu0
    %v603 = vpop.f32.mrb[0].mxu0
    %v604 = vadd.f32 %v140, %v603
    %v605 = vpop.f32.mrb[0].mxu0
    %606 = vmatprep.mubr.bf16.mxu0 0
    %607 = vmatmul.mubr.bf16.gmra.mrb[0].mxu0 %v294
    %v608 = vpop.f32.mrb[0].mxu0
    %v609 = vadd.f32 %v140, %v608
    %v610 = vpop.f32.mrb[0].mxu0
    %v611 = vpop.f32.mrb[0].mxu0
    %v612 = vadd.f32 %v140, %v611
    %v613 = vpop.f32.mrb[0].mxu0
    %614 = vmatprep.mubr.bf16.mxu0 0
    %615 = vmatmul.mubr.bf16.gmra.mrb[0].mxu0 %v295
    %v616 = vpop.f32.mrb[0].mxu0
    %v617 = vadd.f32 %v140, %v616
    %v618 = vpop.f32.mrb[0].mxu0
    %v619 = vpop.f32.mrb[0].mxu0
    %v620 = vadd.f32 %v140, %v619
    %v621 = vpop.f32.mrb[0].mxu0
    %622 = vmatprep.mubr.bf16.mxu0 0
    %623 = vmatmul.mubr.bf16.gmra.mrb[0].mxu0 %v296
    %v624 = vpop.f32.mrb[0].mxu0
    %v625 = vadd.f32 %v140, %v624
    %v626 = vpop.f32.mrb[0].mxu0
    %v627 = vpop.f32.mrb[0].mxu0
    %v628 = vadd.f32 %v140, %v627
    %v629 = vpop.f32.mrb[0].mxu0
    %630 = vmatprep.mubr.bf16.mxu0 0
    %631 = vmatmul.mubr.bf16.gmra.mrb[0].mxu0 %v297
    %v632 = vpop.f32.mrb[0].mxu0
    %v633 = vadd.f32 %v140, %v632
    %v634 = vpop.f32.mrb[0].mxu0
    %v635 = vpop.f32.mrb[0].mxu0
    %v636 = vadd.f32 %v140, %v635
    %v637 = vpop.f32.mrb[0].mxu0
    %638 = vmatprep.mubr.bf16.mxu0 0
    %639 = vmatmul.mubr.bf16.gmra.mrb[0].mxu0 %v298
    %v640 = vpop.f32.mrb[0].mxu0
    %v641 = vadd.f32 %v140, %v640
    %v642 = vpop.f32.mrb[0].mxu0
    %v643 = vpop.f32.mrb[0].mxu0
    %v644 = vadd.f32 %v140, %v643
    %v645 = vpop.f32.mrb[0].mxu0
    %646 = vmatprep.mubr.bf16.mxu0 0
    %647 = vmatmul.mubr.bf16.gmra.mrb[0].mxu0 %v299
    %v648 = vpop.f32.mrb[0].mxu0
    %v649 = vadd.f32 %v140, %v648
    %v650 = vpop.f32.mrb[0].mxu0
    %v651 = vpop.f32.mrb[0].mxu0
    %v652 = vadd.f32 %v140, %v651
    %v653 = vpop.f32.mrb[0].mxu0
    %654 = vmatprep.mubr.bf16.mxu0 0
    %655 = vmatmul.mubr.bf16.gmra.mrb[0].mxu0 %v300
    %v656 = vpop.f32.mrb[0].mxu0
    %v657 = vadd.f32 %v140, %v656
    %v658 = vpop.f32.mrb[0].mxu0
    %v659 = vpop.f32.mrb[0].mxu0
    %v660 = vadd.f32 %v140, %v659
    %v661 = vpop.f32.mrb[0].mxu0
    %662 = vmatprep.mubr.bf16.mxu0 0
    %663 = vmatmul.mubr.bf16.gmra.mrb[0].mxu0 %v301
    %v664 = vpop.f32.mrb[0].mxu0
    %v665 = vadd.f32 %v140, %v664
    %v666 = vpop.f32.mrb[0].mxu0
    %v667 = vpop.f32.mrb[0].mxu0
    %v668 = vadd.f32 %v140, %v667
    %v669 = vpop.f32.mrb[0].mxu0
    %670 = vdwg.mxu0
    %v671 = vmul.f32 %v417, 0.1
    %v672 = vmul.f32 %v420, 0.1
    %v673 = vmul.f32 %v425, 0.1
    %v674 = vmul.f32 %v428, 0.1
    %v675 = vmul.f32 %v433, 0.1
    %v676 = vmul.f32 %v436, 0.1
    %v677 = vmul.f32 %v441, 0.1
    %v678 = vmul.f32 %v444, 0.1
    %v679 = vmul.f32 %v449, 0.1
    %v680 = vmul.f32 %v452, 0.1
    %v681 = vmul.f32 %v457, 0.1
    %v682 = vmul.f32 %v460, 0.1
    %v683 = vmul.f32 %v465, 0.1
    %v684 = vmul.f32 %v468, 0.1
    %v685 = vmul.f32 %v473, 0.1
    %v686 = vmul.f32 %v476, 0.1
    %v687 = vmul.f32 %v481, 0.1
    %v688 = vmul.f32 %v484, 0.1
    %v689 = vmul.f32 %v489, 0.1
    %v690 = vmul.f32 %v492, 0.1
    %v691 = vmul.f32 %v497, 0.1
    %v692 = vmul.f32 %v500, 0.1
    %v693 = vmul.f32 %v505, 0.1
    %v694 = vmul.f32 %v508, 0.1
    %v695 = vmul.f32 %v513, 0.1
    %v696 = vmul.f32 %v516, 0.1
    %v697 = vmul.f32 %v521, 0.1
    %v698 = vmul.f32 %v524, 0.1
    %v699 = vmul.f32 %v529, 0.1
    %v700 = vmul.f32 %v532, 0.1
    %v701 = vmul.f32 %v537, 0.1
    %v702 = vmul.f32 %v540, 0.1
    %v703 = vmul.f32 %v545, 0.1
    %v704 = vmul.f32 %v548, 0.1
    %v705 = vmul.f32 %v553, 0.1
    %v706 = vmul.f32 %v556, 0.1
    %v707 = vmul.f32 %v561, 0.1
    %v708 = vmul.f32 %v564, 0.1
    %v709 = vmul.f32 %v569, 0.1
    %v710 = vmul.f32 %v572, 0.1
    %v711 = vmul.f32 %v577, 0.1
    %v712 = vmul.f32 %v580, 0.1
    %v713 = vmul.f32 %v585, 0.1
    %v714 = vmul.f32 %v588, 0.1
    %v715 = vmul.f32 %v593, 0.1
    %v716 = vmul.f32 %v596, 0.1
    %v717 = vmul.f32 %v601, 0.1
    %v718 = vmul.f32 %v604, 0.1
    %v719 = vmul.f32 %v609, 0.1
    %v720 = vmul.f32 %v612, 0.1
    %v721 = vmul.f32 %v617, 0.1
    %v722 = vmul.f32 %v620, 0.1
    %v723 = vmul.f32 %v625, 0.1
    %v724 = vmul.f32 %v628, 0.1
    %v725 = vmul.f32 %v633, 0.1
    %v726 = vmul.f32 %v636, 0.1
    %v727 = vmul.f32 %v641, 0.1
    %v728 = vmul.f32 %v644, 0.1
    %v729 = vmul.f32 %v649, 0.1
    %v730 = vmul.f32 %v652, 0.1
    %v731 = vmul.f32 %v657, 0.1
    %v732 = vmul.f32 %v660, 0.1
    %v733 = vmul.f32 %v665, 0.1
    %v734 = vmul.f32 %v668, 0.1
    %v735 = vmax.f32 %v417, %v671
    %v736 = vmax.f32 %v420, %v672
    %v737 = vmax.f32 %v425, %v673
    %v738 = vmax.f32 %v428, %v674
    %v739 = vmax.f32 %v433, %v675
    %v740 = vmax.f32 %v436, %v676
    %v741 = vmax.f32 %v441, %v677
    %v742 = vmax.f32 %v444, %v678
    %v743 = vmax.f32 %v449, %v679
    %v744 = vmax.f32 %v452, %v680
    %v745 = vmax.f32 %v457, %v681
    %v746 = vmax.f32 %v460, %v682
    %v747 = vmax.f32 %v465, %v683
    %v748 = vmax.f32 %v468, %v684
    %v749 = vmax.f32 %v473, %v685
    %v750 = vmax.f32 %v476, %v686
    %v751 = vmax.f32 %v481, %v687
    %v752 = vmax.f32 %v484, %v688
    %v753 = vmax.f32 %v489, %v689
    %v754 = vmax.f32 %v492, %v690
    %v755 = vmax.f32 %v497, %v691
    %v756 = vmax.f32 %v500, %v692
    %v757 = vmax.f32 %v505, %v693
    %v758 = vmax.f32 %v508, %v694
    %v759 = vmax.f32 %v513, %v695
    %v760 = vmax.f32 %v516, %v696
    %v761 = vmax.f32 %v521, %v697
    %v762 = vmax.f32 %v524, %v698
    %v763 = vmax.f32 %v529, %v699
    %v764 = vmax.f32 %v532, %v700
    %v765 = vmax.f32 %v537, %v701
    %v766 = vmax.f32 %v540, %v702
    %v767 = vmax.f32 %v545, %v703
    %v768 = vmax.f32 %v548, %v704
    %v769 = vmax.f32 %v553, %v705
    %v770 = vmax.f32 %v556, %v706
    %v771 = vmax.f32 %v561, %v707
    %v772 = vmax.f32 %v564, %v708
    %v773 = vmax.f32 %v569, %v709
    %v774 = vmax.f32 %v572, %v710
    %v775 = vmax.f32 %v577, %v711
    %v776 = vmax.f32 %v580, %v712
    %v777 = vmax.f32 %v585, %v713
    %v778 = vmax.f32 %v588, %v714
    %v779 = vmax.f32 %v593, %v715
    %v780 = vmax.f32 %v596, %v716
    %v781 = vmax.f32 %v601, %v717
    %v782 = vmax.f32 %v604, %v718
    %v783 = vmax.f32 %v609, %v719
    %v784 = vmax.f32 %v612, %v720
    %v785 = vmax.f32 %v617, %v721
    %v786 = vmax.f32 %v620, %v722
    %v787 = vmax.f32 %v625, %v723
    %v788 = vmax.f32 %v628, %v724
    %v789 = vmax.f32 %v633, %v725
    %v790 = vmax.f32 %v636, %v726
    %v791 = vmax.f32 %v641, %v727
    %v792 = vmax.f32 %v644, %v728
    %v793 = vmax.f32 %v649, %v729
    %v794 = vmax.f32 %v652, %v730
    %v795 = vmax.f32 %v657, %v731
    %v796 = vmax.f32 %v660, %v732
    %v797 = vmax.f32 %v665, %v733
    %v798 = vmax.f32 %v668, %v734
    %v799 = vpack.c.bf16 %v736, %v735
    %v800 = vpack.c.bf16 %v738, %v737
    %v801 = vpack.c.bf16 %v740, %v739
    %v802 = vpack.c.bf16 %v742, %v741
    %v803 = vpack.c.bf16 %v744, %v743
    %v804 = vpack.c.bf16 %v746, %v745
    %v805 = vpack.c.bf16 %v748, %v747
    %v806 = vpack.c.bf16 %v750, %v749
    %v807 = vpack.c.bf16 %v752, %v751
    %v808 = vpack.c.bf16 %v754, %v753
    %v809 = vpack.c.bf16 %v756, %v755
    %v810 = vpack.c.bf16 %v758, %v757
    %v811 = vpack.c.bf16 %v760, %v759
    %v812 = vpack.c.bf16 %v762, %v761
    %v813 = vpack.c.bf16 %v764, %v763
    %v814 = vpack.c.bf16 %v766, %v765
    %v815 = vpack.c.bf16 %v768, %v767
    %v816 = vpack.c.bf16 %v770, %v769
    %v817 = vpack.c.bf16 %v772, %v771
    %v818 = vpack.c.bf16 %v774, %v773
    %v819 = vpack.c.bf16 %v776, %v775
    %v820 = vpack.c.bf16 %v778, %v777
    %v821 = vpack.c.bf16 %v780, %v779
    %v822 = vpack.c.bf16 %v782, %v781
    %v823 = vpack.c.bf16 %v784, %v783
    %v824 = vpack.c.bf16 %v786, %v785
    %v825 = vpack.c.bf16 %v788, %v787
    %v826 = vpack.c.bf16 %v790, %v789
    %v827 = vpack.c.bf16 %v792, %v791
    %v828 = vpack.c.bf16 %v794, %v793
    %v829 = vpack.c.bf16 %v796, %v795
    %v830 = vpack.c.bf16 %v798, %v797
    %v863 = vunpack.c.l.b16 %v799
    %v864 = vunpack.c.h.b16 %v799
    %v865 = vunpack.c.l.b16 %v800
    %v866 = vunpack.c.h.b16 %v800
    %v867 = vunpack.c.l.b16 %v801
    %v868 = vunpack.c.h.b16 %v801
    %v869 = vunpack.c.l.b16 %v802
    %v870 = vunpack.c.h.b16 %v802
    %v871 = vunpack.c.l.b16 %v803
    %v872 = vunpack.c.h.b16 %v803
    %v873 = vunpack.c.l.b16 %v804
    %v874 = vunpack.c.h.b16 %v804
    %v875 = vunpack.c.l.b16 %v805
    %v876 = vunpack.c.h.b16 %v805
    %v877 = vunpack.c.l.b16 %v806
    %v878 = vunpack.c.h.b16 %v806
    %v879 = vunpack.c.l.b16 %v807
    %v880 = vunpack.c.h.b16 %v807
    %v881 = vunpack.c.l.b16 %v808
    %v882 = vunpack.c.h.b16 %v808
    %v883 = vunpack.c.l.b16 %v809
    %v884 = vunpack.c.h.b16 %v809
    %v885 = vunpack.c.l.b16 %v810
    %v886 = vunpack.c.h.b16 %v810
    %v887 = vunpack.c.l.b16 %v811
    %v888 = vunpack.c.h.b16 %v811
    %v889 = vunpack.c.l.b16 %v812
    %v890 = vunpack.c.h.b16 %v812
    %v891 = vunpack.c.l.b16 %v813
    %v892 = vunpack.c.h.b16 %v813
    %v893 = vunpack.c.l.b16 %v814
    %v894 = vunpack.c.h.b16 %v814
    %v895 = vunpack.c.l.b16 %v815
    %v896 = vunpack.c.h.b16 %v815
    %v897 = vunpack.c.l.b16 %v816
    %v898 = vunpack.c.h.b16 %v816
    %v899 = vunpack.c.l.b16 %v817
    %v900 = vunpack.c.h.b16 %v817
    %v901 = vunpack.c.l.b16 %v818
    %v902 = vunpack.c.h.b16 %v818
    %v903 = vunpack.c.l.b16 %v819
    %v904 = vunpack.c.h.b16 %v819
    %v905 = vunpack.c.l.b16 %v820
    %v906 = vunpack.c.h.b16 %v820
    %v907 = vunpack.c.l.b16 %v821
    %v908 = vunpack.c.h.b16 %v821
    %v909 = vunpack.c.l.b16 %v822
    %v910 = vunpack.c.h.b16 %v822
    %v911 = vunpack.c.l.b16 %v823
    %v912 = vunpack.c.h.b16 %v823
    %v913 = vunpack.c.l.b16 %v824
    %v914 = vunpack.c.h.b16 %v824
    %v915 = vunpack.c.l.b16 %v825
    %v916 = vunpack.c.h.b16 %v825
    %v917 = vunpack.c.l.b16 %v826
    %v918 = vunpack.c.h.b16 %v826
    %v919 = vunpack.c.l.b16 %v827
    %v920 = vunpack.c.h.b16 %v827
    %v921 = vunpack.c.l.b16 %v828
    %v922 = vunpack.c.h.b16 %v828
    %v923 = vunpack.c.l.b16 %v829
    %v924 = vunpack.c.h.b16 %v829
    %v925 = vunpack.c.l.b16 %v830
    %v926 = vunpack.c.h.b16 %v830
    %v927 = vpack.c.b16 %v863, %v863
    %v928 = vpack.c.b16 %v864, %v864
    %v929 = vpack.c.b16 %v865, %v865
    %v930 = vpack.c.b16 %v866, %v866
    %v931 = vpack.c.b16 %v867, %v867
    %v932 = vpack.c.b16 %v868, %v868
    %v933 = vpack.c.b16 %v869, %v869
    %v934 = vpack.c.b16 %v870, %v870
    %v935 = vpack.c.b16 %v871, %v871
    %v936 = vpack.c.b16 %v872, %v872
    %v937 = vpack.c.b16 %v873, %v873
    %v938 = vpack.c.b16 %v874, %v874
    %v939 = vpack.c.b16 %v875, %v875
    %v940 = vpack.c.b16 %v876, %v876
    %v941 = vpack.c.b16 %v877, %v877
    %v942 = vpack.c.b16 %v878, %v878
    %v943 = vpack.c.b16 %v879, %v879
    %v944 = vpack.c.b16 %v880, %v880
    %v945 = vpack.c.b16 %v881, %v881
    %v946 = vpack.c.b16 %v882, %v882
    %v947 = vpack.c.b16 %v883, %v883
    %v948 = vpack.c.b16 %v884, %v884
    %v949 = vpack.c.b16 %v885, %v885
    %v950 = vpack.c.b16 %v886, %v886
    %v951 = vpack.c.b16 %v887, %v887
    %v952 = vpack.c.b16 %v888, %v888
    %v953 = vpack.c.b16 %v889, %v889
    %v954 = vpack.c.b16 %v890, %v890
    %v955 = vpack.c.b16 %v891, %v891
    %v956 = vpack.c.b16 %v892, %v892
    %v957 = vpack.c.b16 %v893, %v893
    %v958 = vpack.c.b16 %v894, %v894
    %v959 = vpack.c.b16 %v895, %v895
    %v960 = vpack.c.b16 %v896, %v896
    %v961 = vpack.c.b16 %v897, %v897
    %v962 = vpack.c.b16 %v898, %v898
    %v963 = vpack.c.b16 %v899, %v899
    %v964 = vpack.c.b16 %v900, %v900
    %v965 = vpack.c.b16 %v901, %v901
    %v966 = vpack.c.b16 %v902, %v902
    %v967 = vpack.c.b16 %v903, %v903
    %v968 = vpack.c.b16 %v904, %v904
    %v969 = vpack.c.b16 %v905, %v905
    %v970 = vpack.c.b16 %v906, %v906
    %v971 = vpack.c.b16 %v907, %v907
    %v972 = vpack.c.b16 %v908, %v908
    %v973 = vpack.c.b16 %v909, %v909
    %v974 = vpack.c.b16 %v910, %v910
    %v975 = vpack.c.b16 %v911, %v911
    %v976 = vpack.c.b16 %v912, %v912
    %v977 = vpack.c.b16 %v913, %v913
    %v978 = vpack.c.b16 %v914, %v914
    %v979 = vpack.c.b16 %v915, %v915
    %v980 = vpack.c.b16 %v916, %v916
    %v981 = vpack.c.b16 %v917, %v917
    %v982 = vpack.c.b16 %v918, %v918
    %v983 = vpack.c.b16 %v919, %v919
    %v984 = vpack.c.b16 %v920, %v920
    %v985 = vpack.c.b16 %v921, %v921
    %v986 = vpack.c.b16 %v922, %v922
    %v987 = vpack.c.b16 %v923, %v923
    %v988 = vpack.c.b16 %v924, %v924
    %v989 = vpack.c.b16 %v925, %v925
    %v990 = vpack.c.b16 %v926, %v926
    %1055 = vst [vmem:[#allocation8] sm:$0xf] %v927
    %1056 = vst [vmem:[#allocation8 + $0x4] sm:$0xf] %v928
    %1057 = vst [vmem:[#allocation8 + $0x8] sm:$0xf] %v929
    %1058 = vst [vmem:[#allocation8 + $0xc] sm:$0xf] %v930
    %1059 = vst [vmem:[#allocation8 + $0x10] sm:$0xf] %v931
    %1060 = vst [vmem:[#allocation8 + $0x14] sm:$0xf] %v932
    %1061 = vst [vmem:[#allocation8 + $0x18] sm:$0xf] %v933
    %1062 = vst [vmem:[#allocation8 + $0x1c] sm:$0xf] %v934
    %1063 = vst [vmem:[#allocation8 + $0x20] sm:$0xf] %v935
    %1064 = vst [vmem:[#allocation8 + $0x24] sm:$0xf] %v936
    %1065 = vst [vmem:[#allocation8 + $0x28] sm:$0xf] %v937
    %1066 = vst [vmem:[#allocation8 + $0x2c] sm:$0xf] %v938
    %1067 = vst [vmem:[#allocation8 + $0x30] sm:$0xf] %v939
    %1068 = vst [vmem:[#allocation8 + $0x34] sm:$0xf] %v940
    %1069 = vst [vmem:[#allocation8 + $0x38] sm:$0xf] %v941
    %1070 = vst [vmem:[#allocation8 + $0x3c] sm:$0xf] %v942
    %1071 = vst [vmem:[#allocation8 + $0x40] sm:$0xf] %v943
    %1072 = vst [vmem:[#allocation8 + $0x44] sm:$0xf] %v944
    %1073 = vst [vmem:[#allocation8 + $0x48] sm:$0xf] %v945
    %1074 = vst [vmem:[#allocation8 + $0x4c] sm:$0xf] %v946
    %1075 = vst [vmem:[#allocation8 + $0x50] sm:$0xf] %v947
    %1076 = vst [vmem:[#allocation8 + $0x54] sm:$0xf] %v948
    %1077 = vst [vmem:[#allocation8 + $0x58] sm:$0xf] %v949
    %1078 = vst [vmem:[#allocation8 + $0x5c] sm:$0xf] %v950
    %1079 = vst [vmem:[#allocation8 + $0x60] sm:$0xf] %v951
    %1080 = vst [vmem:[#allocation8 + $0x64] sm:$0xf] %v952
    %1081 = vst [vmem:[#allocation8 + $0x68] sm:$0xf] %v953
    %1082 = vst [vmem:[#allocation8 + $0x6c] sm:$0xf] %v954
    %1083 = vst [vmem:[#allocation8 + $0x70] sm:$0xf] %v955
    %1084 = vst [vmem:[#allocation8 + $0x74] sm:$0xf] %v956
    %1085 = vst [vmem:[#allocation8 + $0x78] sm:$0xf] %v957
    %1086 = vst [vmem:[#allocation8 + $0x7c] sm:$0xf] %v958
    %1087 = vst [vmem:[#allocation8 + $0x80] sm:$0xf] %v959
    %1088 = vst [vmem:[#allocation8 + $0x84] sm:$0xf] %v960
    %1089 = vst [vmem:[#allocation8 + $0x88] sm:$0xf] %v961
    %1090 = vst [vmem:[#allocation8 + $0x8c] sm:$0xf] %v962
    %1091 = vst [vmem:[#allocation8 + $0x90] sm:$0xf] %v963
    %1092 = vst [vmem:[#allocation8 + $0x94] sm:$0xf] %v964
    %1093 = vst [vmem:[#allocation8 + $0x98] sm:$0xf] %v965
    %1094 = vst [vmem:[#allocation8 + $0x9c] sm:$0xf] %v966
    %1095 = vst [vmem:[#allocation8 + $0xa0] sm:$0xf] %v967
    %1096 = vst [vmem:[#allocation8 + $0xa4] sm:$0xf] %v968
    %1097 = vst [vmem:[#allocation8 + $0xa8] sm:$0xf] %v969
    %1098 = vst [vmem:[#allocation8 + $0xac] sm:$0xf] %v970
    %1099 = vst [vmem:[#allocation8 + $0xb0] sm:$0xf] %v971
    %1100 = vst [vmem:[#allocation8 + $0xb4] sm:$0xf] %v972
    %1101 = vst [vmem:[#allocation8 + $0xb8] sm:$0xf] %v973
    %1102 = vst [vmem:[#allocation8 + $0xbc] sm:$0xf] %v974
    %1103 = vst [vmem:[#allocation8 + $0xc0] sm:$0xf] %v975
    %1104 = vst [vmem:[#allocation8 + $0xc4] sm:$0xf] %v976
    %1105 = vst [vmem:[#allocation8 + $0xc8] sm:$0xf] %v977
    %1106 = vst [vmem:[#allocation8 + $0xcc] sm:$0xf] %v978
    %1107 = vst [vmem:[#allocation8 + $0xd0] sm:$0xf] %v979
    %1108 = vst [vmem:[#allocation8 + $0xd4] sm:$0xf] %v980
    %1109 = vst [vmem:[#allocation8 + $0xd8] sm:$0xf] %v981
    %1110 = vst [vmem:[#allocation8 + $0xdc] sm:$0xf] %v982
    %1111 = vst [vmem:[#allocation8 + $0xe0] sm:$0xf] %v983
    %1112 = vst [vmem:[#allocation8 + $0xe4] sm:$0xf] %v984
    %1113 = vst [vmem:[#allocation8 + $0xe8] sm:$0xf] %v985
    %1114 = vst [vmem:[#allocation8 + $0xec] sm:$0xf] %v986
    %1115 = vst [vmem:[#allocation8 + $0xf0] sm:$0xf] %v987
    %1116 = vst [vmem:[#allocation8 + $0xf4] sm:$0xf] %v988
    %1117 = vst [vmem:[#allocation8 + $0xf8] sm:$0xf] %v989
    %1118 = vst [vmem:[#allocation8 + $0xfc] sm:$0xf] %v990
    // Predicated region
    $region26: #{yolo_block_forward.7} parent=1 // pred_check
      _
    $region27: #{yolo_block_forward.7} parent=1 // pred_check_branch
      %1120 = sbr.rel (0) target = $region29
    $region28: #{yolo_block_forward.7} parent=1 // pred_region
      %s1122 = ssub.s32 4096, 4096
      %1123 = vsyncadd [#allocation4], %s1122
      %s1124 = sshll.u32 [#allocation8], 4
      %s1125 = int_to_ptr.vmem [resolvable:$true] %s1124
      %1130 = dma.vmem_to_hbm [thread:$0]  %s1125, 4096, %s3, [#allocation4], 64, 64, 4
    $region29: #{yolo_block_forward.7} parent=1 // pred_fallthru
      _
    // Predicated region
    $region30: #{yolo_block_forward.7} parent=1 // pred_check
      _
    $region31: #{yolo_block_forward.7} parent=1 // pred_check_branch
      %1132 = sbr.rel (0) target = $region33
    $region32: #{yolo_block_forward.7} parent=1 // pred_region
      %1133 = dma.done [#allocation4], 4096
    $region33: #{yolo_block_forward.7} parent=1 // pred_fallthru
      _
    %1134 = vsyncpa [#allocation3], 1
    %1135 = vsyncpa [#allocation6], 1
    %1136 = vsyncpa [#allocation4], 1

// kernel: yolo_block_forward.8
$region0: #{yolo_block_forward.8}
  #allocation0 [shape = 'u32[]', space=smem, size = 0x4, offset = 0x4, fixed_abs, tag = 'smem constant byte address 0x4 - core index']
  #allocation1 [shape = 'u32[144,128]{1,0:T(1,128)}', space=vmem, size = 0x12000, scoped, tag = 'internal scratch']
  %s0 = inlined_call_operand.hbm [shape: bf16[2,18,16,384], index: 0, kind: input, shape index: {}]
  %s1 = inlined_call_operand.hbm [shape: bf16[3,384,128], index: 1, kind: input, shape index: {}]
  %s2 = inlined_call_operand.hbm [shape: f32[1,128], index: 2, kind: input, shape index: {}]
  %s3 = inlined_call_operand.hbm [shape: bf16[2,16,16,128], index: 3, kind: output, shape index: {}]
  %s4 = sld [smem:[#allocation0]]
  $region57: #{yolo_block_forward.8} parent=0
    _
  %s6 = ssub.s32 1, %s4
  %s7 = scalar_select 0, %s6, %s4
  $region1: #{yolo_block_forward.8} parent=0
    #allocation2 [shape = 'u8[442368]{0}', space=vmem, size = 0x6c000, scoped, tag = 'input window, operand 0']
    #allocation3 [shape = 's32[2]{0}', space=sflag, size = 0x8, scoped, tag = 'scoped memory for yolo_block_forward.8']
    #allocation4 [shape = 's32[2]{0}', space=sflag, size = 0x8, scoped, tag = 'scoped memory for yolo_block_forward.8']
    #allocation5 [shape = 'u8[294912]{0}', space=vmem, size = 0x48000, scoped, tag = 'input window, operand 1, single buffered']
    #allocation6 [shape = 's32[1]{0}', space=sflag, size = 0x4, scoped, tag = 'scoped memory for yolo_block_forward.8']
    #allocation7 [shape = 'u8[512]{0}', space=vmem, size = 0x400, scoped, tag = 'input window, operand 2, single buffered']
    #allocation8 [shape = 'u8[65536]{0}', space=vmem, size = 0x10000, scoped, tag = 'output window, operand 0']
    %8 = vsyncpa [#allocation3], 0
    %s9 = scalar_lea.sflag [#allocation3], 1
    %10 = vsyncpa %s9, 0
    %11 = vsyncpa [#allocation6], 0
    %12 = vsyncpa [#allocation4], 0
    %s13 = scalar_lea.sflag [#allocation4], 1
    %14 = vsyncpa %s13, 0
    loop: start=0, step=1, limit=6
    $region2: #{yolo_block_forward.8} parent=1 // loop_pre_header
      _
    $region3: #{yolo_block_forward.8} parent=1 // loop_header
      %s16 = sphi 0, %s20
      %p17 = scmp.ge.s32.totalorder %s16, 6
      %s23 = sphi 0, %s35
      %s24 = sphi 0, %s31
      %s25 = sphi 0, %s23
      %s26 = sphi 0, %s24
      %s27 = sphi 0, %s25
      %s28 = sphi 0, %s26
      %s38 = sphi 0, %s40
      %s41 = sphi 0, %s38
      %s42 = sphi 0, %s41
      %s58 = sphi 0, %s42
      %s62 = sphi 0, %s62
      %s64 = sphi 0, %s62
      %s65 = sphi 0, %s64
      %s79 = sphi 0, %s65
      %s83 = sphi 0, %s83
      %s85 = sphi 0, %s83
      %s86 = sphi 0, %s85
      %s100 = sphi 0, %s86
      %s108 = sphi 0, %s110
      %s111 = sphi 0, %s108
      %s112 = sphi 0, %s111
      %s128 = sphi 0, %s112
    $region4: #{yolo_block_forward.8} parent=1 // loop_header_branch
      %19 = sbr.rel (%p17) target = $region8
    $region5: #{yolo_block_forward.8} parent=1 // loop_body
      %s21 = ssub.s32 %s16, 1
      %s22 = ssub.s32 %s16, 2
      %s29 = sadd.s32 1, %s24
      %p30 = scmp.ge.s32.totalorder %s29, 2
      %s31 = scalar_select %p30, 0, %s29
      %s32 = sadd.s32 1, %s23
      %s33 = scalar_select %p30, %s32, %s23
      %p34 = scmp.ge.s32.totalorder %s33, 2
      %s35 = scalar_select %p34, 0, %s33
      %s36 = ssub.s32 %s23, %s35
      %p37 = scmp.eq.s32.totalorder %s36, 0
      %s39 = sadd.s32 %s38, 1
      %s40 = scalar_select %p37, %s38, %s39
      %p43 = pneg %p37
      %p44 = scmp.eq.s32.totalorder %s16, 3
      %p45 = por %p43, %p44
      %p46 = scmp.ne.s32.totalorder %s38, %s41
      %p47 = scmp.eq.s32.totalorder %s16, 0
      %p48 = por %p46, %p47
      %p49 = scmp.ne.s32.totalorder %s38, %s41
      %p50 = scmp.eq.s32.totalorder %s21, 3
      %p51 = por %p49, %p50
      %p52 = scmp.ne.s32.totalorder %s41, %s42
      %p53 = scmp.eq.s32.totalorder %s21, 0
      %p54 = por %p52, %p53
      %p55 = scmp.ne.s32.totalorder %s41, %s42
      %p56 = scmp.eq.s32.totalorder %s22, 3
      %p57 = por %p55, %p56
      %p59 = scmp.ne.s32.totalorder %s42, %s58
      %p60 = scmp.eq.s32.totalorder %s22, 0
      %p61 = por %p59, %p60
      %s63 = sadd.s32 %s62, 1
      %p66 = scmp.eq.s32.totalorder %s16, 3
      %p67 = scmp.ne.s32.totalorder %s62, %s64
      %p68 = scmp.eq.s32.totalorder %s16, 0
      %p69 = por %p67, %p68
      %p70 = scmp.ne.s32.totalorder %s62, %s64
      %p71 = scmp.eq.s32.totalorder %s21, 3
      %p72 = por %p70, %p71
      %p73 = scmp.ne.s32.totalorder %s64, %s65
      %p74 = scmp.eq.s32.totalorder %s21, 0
      %p75 = por %p73, %p74
      %p76 = scmp.ne.s32.totalorder %s64, %s65
      %p77 = scmp.eq.s32.totalorder %s22, 3
      %p78 = por %p76, %p77
      %p80 = scmp.ne.s32.totalorder %s65, %s79
      %p81 = scmp.eq.s32.totalorder %s22, 0
      %p82 = por %p80, %p81
      %s84 = sadd.s32 %s83, 1
      %p87 = scmp.eq.s32.totalorder %s16, 3
      %p88 = scmp.ne.s32.totalorder %s83, %s85
      %p89 = scmp.eq.s32.totalorder %s16, 0
      %p90 = por %p88, %p89
      %p91 = scmp.ne.s32.totalorder %s83, %s85
      %p92 = scmp.eq.s32.totalorder %s21, 3
      %p93 = por %p91, %p92
      %p94 = scmp.ne.s32.totalorder %s85, %s86
      %p95 = scmp.eq.s32.totalorder %s21, 0
      %p96 = por %p94, %p95
      %p97 = scmp.ne.s32.totalorder %s85, %s86
      %p98 = scmp.eq.s32.totalorder %s22, 3
      %p99 = por %p97, %p98
      %p101 = scmp.ne.s32.totalorder %s86, %s100
      %p102 = scmp.eq.s32.totalorder %s22, 0
      %p103 = por %p101, %p102
      %s104 = ssub.s32 %s23, %s35
      %s105 = ssub.s32 %s24, %s31
      %s106 = sor.u32 %s104, %s105
      %p107 = scmp.eq.s32.totalorder %s106, 0
      %s109 = sadd.s32 %s108, 1
      %s110 = scalar_select %p107, %s108, %s109
      %p113 = pneg %p107
      %p114 = scmp.eq.s32.totalorder %s16, 3
      %p115 = por %p113, %p114
      %p116 = scmp.ne.s32.totalorder %s108, %s111
      %p117 = scmp.eq.s32.totalorder %s16, 0
      %p118 = por %p116, %p117
      %p119 = scmp.ne.s32.totalorder %s108, %s111
      %p120 = scmp.eq.s32.totalorder %s21, 3
      %p121 = por %p119, %p120
      %p122 = scmp.ne.s32.totalorder %s111, %s112
      %p123 = scmp.eq.s32.totalorder %s21, 0
      %p124 = por %p122, %p123
      %p125 = scmp.ne.s32.totalorder %s111, %s112
      %p126 = scmp.eq.s32.totalorder %s22, 3
      %p127 = por %p125, %p126
      %p129 = scmp.ne.s32.totalorder %s112, %s128
      %p130 = scmp.eq.s32.totalorder %s22, 0
      %p131 = por %p129, %p130
      %p132 = scmp.le.s32.totalorder 1, %s16
      %p133 = scmp.lt.s32.totalorder %s16, 5
      %p134 = pnand %p132, %p133
      %p135 = pneg %p134
      // Predicated region
      $region9: #{yolo_block_forward.8} parent=5 // pred_check
        _
      $region10: #{yolo_block_forward.8} parent=5 // pred_check_branch
        %137 = sbr.rel (%p134) target = $region12
      $region11: #{yolo_block_forward.8} parent=5 // pred_region
        %s138 = ssub.s32 %s16, 1
        // Predicated region
        $region13: #{yolo_block_forward.8} parent=11 // pred_check
          %p139 = pneg %p75
        $region14: #{yolo_block_forward.8} parent=11 // pred_check_branch
          %141 = sbr.rel (%p139) target = $region16
        $region15: #{yolo_block_forward.8} parent=11 // pred_region
          %s143 = ssub.s32 9216, 9216
          %144 = vsyncadd [#allocation6], %s143
          %s145 = sshll.u32 [#allocation5], 4
          %s146 = int_to_ptr.vmem [resolvable:$true] %s145
          %151 = dma.hbm_to_vmem [thread:$0]  %s1, 9216, %s146, [#allocation6], 64, 64, 4
        $region16: #{yolo_block_forward.8} parent=11 // pred_fallthru
          _
        // Predicated region
        $region17: #{yolo_block_forward.8} parent=11 // pred_check
          %p152 = pneg %p96
        $region18: #{yolo_block_forward.8} parent=11 // pred_check_branch
          %154 = sbr.rel (%p152) target = $region20
        $region19: #{yolo_block_forward.8} parent=11 // pred_region
          %s156 = ssub.s32 16, 16
          %157 = vsyncadd [#allocation6], %s156
          %s159 = sshll.u32 [#allocation7], 4
          %s160 = int_to_ptr.vmem [resolvable:$true] %s159
          %162 = dma.hbm_to_vmem [thread:$0]  %s2, 16, %s160, [#allocation6]
        $region20: #{yolo_block_forward.8} parent=11 // pred_fallthru
          _
      $region12: #{yolo_block_forward.8} parent=5 // pred_fallthru
        _
      %p163 = scmp.lt.s32.totalorder %s16, 4
      // Predicated region
      $region21: #{yolo_block_forward.8} parent=5 // pred_check
        %p164 = pneg %p163
      $region22: #{yolo_block_forward.8} parent=5 // pred_check_branch
        %166 = sbr.rel (%p164) target = $region24
      $region23: #{yolo_block_forward.8} parent=5 // pred_region
        // Predicated region
        $region25: #{yolo_block_forward.8} parent=23 // pred_check
          %p167 = pneg %p48
        $region26: #{yolo_block_forward.8} parent=23 // pred_check_branch
          %169 = sbr.rel (%p167) target = $region28
        $region27: #{yolo_block_forward.8} parent=23 // pred_region
          %s170 = sand.u32 %s38, 1
          %s171 = scalar_lea.sflag [#allocation3], %s170
          %s172 = sand.u32 %s38, 1
          %s173 = smul.addr %s172, 432
          %s174 = scalar_lea.vmem [#allocation2], %s173
          %s176 = ssub.s32 6912, 6912
          %177 = vsyncadd %s171, %s176
          %s178 = smul.addr %s23, 108
          %s179 = smul.addr %s178, 64
          %s180 = scalar_lea.hbm %s0, %s179
          %s181 = sshll.u32 %s174, 4
          %s182 = int_to_ptr.vmem [resolvable:$true] %s181
          %187 = dma.hbm_to_vmem [thread:$0]  %s180, 6912, %s182, %s171, 192, 192, 12
        $region28: #{yolo_block_forward.8} parent=23 // pred_fallthru
          _
      $region24: #{yolo_block_forward.8} parent=5 // pred_fallthru
        _
      %p188 = scmp.le.s32.totalorder 1, %s16
      %p189 = scmp.lt.s32.totalorder %s16, 5
      %p190 = pnand %p188, %p189
      %p191 = pneg %p190
      // Predicated region
      $region29: #{yolo_block_forward.8} parent=5 // pred_check
        _
      $region30: #{yolo_block_forward.8} parent=5 // pred_check_branch
        %193 = sbr.rel (%p190) target = $region32
      $region31: #{yolo_block_forward.8} parent=5 // pred_region
        %s194 = ssub.s32 %s16, 1
        %s195 = sand.u32 %s41, 1
        %s196 = scalar_lea.sflag [#allocation3], %s195
        %s197 = sand.u32 %s41, 1
        %s198 = smul.addr %s197, 432
        %s199 = scalar_lea.vmem [#allocation2], %s198
        // Predicated region
        $region33: #{yolo_block_forward.8} parent=31 // pred_check
          %p200 = pneg %p54
        $region34: #{yolo_block_forward.8} parent=31 // pred_check_branch
          %202 = sbr.rel (%p200) target = $region36
        $region35: #{yolo_block_forward.8} parent=31 // pred_region
          %203 = dma.done %s196, 6912
        $region36: #{yolo_block_forward.8} parent=31 // pred_fallthru
          _
        // Predicated region
        $region37: #{yolo_block_forward.8} parent=31 // pred_check
          %p204 = pneg %p75
        $region38: #{yolo_block_forward.8} parent=31 // pred_check_branch
          %206 = sbr.rel (%p204) target = $region40
        $region39: #{yolo_block_forward.8} parent=31 // pred_region
          %207 = dma.done [#allocation6], 9216
        $region40: #{yolo_block_forward.8} parent=31 // pred_fallthru
          _
        // Predicated region
        $region41: #{yolo_block_forward.8} parent=31 // pred_check
          %p208 = pneg %p96
        $region42: #{yolo_block_forward.8} parent=31 // pred_check_branch
          %210 = sbr.rel (%p208) target = $region44
        $region43: #{yolo_block_forward.8} parent=31 // pred_region
          %211 = dma.done [#allocation6], 16
        $region44: #{yolo_block_forward.8} parent=31 // pred_fallthru
          _
        %s212 = sand.u32 %s41, 1
        %s213 = scalar_lea.sflag [#allocation3], %s212
        %s214 = sand.u32 %s41, 1
        %s215 = smul.addr %s214, 432
        %s216 = scalar_lea.vmem [#allocation2], %s215
        %p217 = pneg %p54
        %p218 = pneg %p51
        %p219 = pneg %p75
        %p220 = pneg %p72
        %p221 = pneg %p96
        %p222 = pneg %p93
        %p223 = pneg %p124
        %p224 = pneg %p121
        %s225 = sand.u32 %s111, 1
        %s226 = scalar_lea.sflag [#allocation4], %s225
        %s227 = sand.u32 %s111, 1
        %s228 = smul.addr %s227, 64
        %s229 = scalar_lea.vmem [#allocation8], %s228
        %s230 = smul.u32 8, %s26
        %s232 = smul.u32 %s26, 8
        %s233 = smul.u32 %s232, 6
        %s234 = smul.addr %s233, 4
        %s235 = scalar_lea.vmem %s199, %s234 [#allocation2]
        %v236 = vld [vmem:[%s235] sm:$0xff]
        %v237 = vld [vmem:[%s235 + $0x8] sm:$0xf]
        %v238 = vld [vmem:[%s235 + $0xc] sm:$0xff]
        %v239 = vld [vmem:[%s235 + $0x14] sm:$0xf]
        %v240 = vld [vmem:[%s235 + $0x18] sm:$0xff]
        %v241 = vld [vmem:[%s235 + $0x20] sm:$0xf]
        %v242 = vld [vmem:[%s235 + $0x24] sm:$0xff]
        %v243 = vld [vmem:[%s235 + $0x2c] sm:$0xf]
        %v244 = vld [vmem:[%s235 + $0x30] sm:$0xff]
        %v245 = vld [vmem:[%s235 + $0x38] sm:$0xf]
        %v246 = vld [vmem:[%s235 + $0x3c] sm:$0xff]
        %v247 = vld [vmem:[%s235 + $0x44] sm:$0xf]
        %v248 = vld [vmem:[%s235 + $0x48] sm:$0xff]
        %v249 = vld [vmem:[%s235 + $0x50] sm:$0xf]
        %v250 = vld [vmem:[%s235 + $0x54] sm:$0xff]
        %v251 = vld [vmem:[%s235 + $0x5c] sm:$0xf]
        %v252 = vld [vmem:[%s235 + $0x60] sm:$0xff]
        %v253 = vld [vmem:[%s235 + $0x68] sm:$0xf]
        %v254 = vld [vmem:[%s235 + $0x6c] sm:$0xff]
        %v255 = vld [vmem:[%s235 + $0x74] sm:$0xf]
        %v256 = vld [vmem:[%s235 + $0x78] sm:$0xff]
        %v257 = vld [vmem:[%s235 + $0x80] sm:$0xf]
        %v258 = vld [vmem:[%s235 + $0x84] sm:$0xff]
        %v259 = vld [vmem:[%s235 + $0x8c] sm:$0xf]
        %v260 = vld [vmem:[%s235 + $0x90] sm:$0xff]
        %v261 = vld [vmem:[%s235 + $0x98] sm:$0xf]
        %v262 = vld [vmem:[%s235 + $0x9c] sm:$0xff]
        %v263 = vld [vmem:[%s235 + $0xa4] sm:$0xf]
        %v264 = vld [vmem:[%s235 + $0xa8] sm:$0xff]
        %v265 = vld [vmem:[%s235 + $0xb0] sm:$0xf]
        %v266 = vld [vmem:[%s235 + $0xb4] sm:$0xff]
        %v267 = vld [vmem:[%s235 + $0xbc] sm:$0xf]
        %v268 = vld [vmem:[#allocation5] sm:$0xf]
        %v269 = vld [vmem:[#allocation5 + $0x4] sm:$0xf]
        %v270 = vld [vmem:[#allocation5 + $0x8] sm:$0xf]
        %v271 = vld [vmem:[#allocation5 + $0xc] sm:$0xf]
        %v272 = vld [vmem:[#allocation5 + $0x10] sm:$0xf]
        %v273 = vld [vmem:[#allocation5 + $0x14] sm:$0xf]
        %v274 = vld [vmem:[#allocation5 + $0x18] sm:$0xf]
        %v275 = vld [vmem:[#allocation5 + $0x1c] sm:$0xf]
        %v276 = vld [vmem:[#allocation5 + $0x20] sm:$0xf]
        %v277 = vld [vmem:[#allocation5 + $0x24] sm:$0xf]
        %v278 = vld [vmem:[#allocation5 + $0x28] sm:$0xf]
        %v279 = vld [vmem:[#allocation5 + $0x2c] sm:$0xf]
        %v280 = vld [vmem:[#allocation5 + $0x30] sm:$0xf]
        %v281 = vld [vmem:[#allocation5 + $0x34] sm:$0xf]
        %v282 = vld [vmem:[#allocation5 + $0x38] sm:$0xf]
        %v283 = vld [vmem:[#allocation5 + $0x3c] sm:$0xf]
        %v284 = vld [vmem:[#allocation5 + $0x40] sm:$0xf]
        %v285 = vld [vmem:[#allocation5 + $0x44] sm:$0xf]
        %v286 = vld [vmem:[#allocation5 + $0x48] sm:$0xf]
        %v287 = vld [vmem:[#allocation5 + $0x4c] sm:$0xf]
        %v288 = vld [vmem:[#allocation5 + $0x50] sm:$0xf]
        %v289 = vld [vmem:[#allocation5 + $0x54] sm:$0xf]
        %v290 = vld [vmem:[#allocation5 + $0x58] sm:$0xf]
        %v291 = vld [vmem:[#allocation5 + $0x5c] sm:$0xf]
        %v292 = vld [vmem:[#allocation5 + $0x60] sm:$0xf]
        %v293 = vld [vmem:[#allocation5 + $0x64] sm:$0xf]
        %v294 = vld [vmem:[#allocation5 + $0x68] sm:$0xf]
        %v295 = vld [vmem:[#allocation5 + $0x6c] sm:$0xf]
        %v296 = vld [vmem:[#allocation5 + $0x70] sm:$0xf]
        %v297 = vld [vmem:[#allocation5 + $0x74] sm:$0xf]
        %v298 = vld [vmem:[#allocation5 + $0x78] sm:$0xf]
        %v299 = vld [vmem:[#allocation5 + $0x7c] sm:$0xf]
        %v300 = vld [vmem:[#allocation5 + $0x80] sm:$0xf]
        %v301 = vld [vmem:[#allocation5 + $0x84] sm:$0xf]
        %v302 = vld [vmem:[#allocation5 + $0x88] sm:$0xf]
        %v303 = vld [vmem:[#allocation5 + $0x8c] sm:$0xf]
        %v304 = vld [vmem:[#allocation5 + $0x90] sm:$0xf]
        %v305 = vld [vmem:[#allocation5 + $0x94] sm:$0xf]
        %v306 = vld [vmem:[#allocation5 + $0x98] sm:$0xf]
        %v307 = vld [vmem:[#allocation5 + $0x9c] sm:$0xf]
        %v308 = vld [vmem:[#allocation5 + $0xa0] sm:$0xf]
        %v309 = vld [vmem:[#allocation5 + $0xa4] sm:$0xf]
        %v310 = vld [vmem:[#allocation5 + $0xa8] sm:$0xf]
        %v311 = vld [vmem:[#allocation5 + $0xac] sm:$0xf]
        %v312 = vld [vmem:[#allocation5 + $0xb0] sm:$0xf]
        %v313 = vld [vmem:[#allocation5 + $0xb4] sm:$0xf]
        %v314 = vld [vmem:[#allocation5 + $0xb8] sm:$0xf]
        %v315 = vld [vmem:[#allocation5 + $0xbc] sm:$0xf]
        %s316 = sadd.s32 %s232, 1
        %s317 = smul.u32 %s316, 6
        %s318 = smul.addr %s317, 4
        %s319 = scalar_lea.vmem %s199, %s318 [#allocation2]
        %v320 = vld [vmem:[%s319] sm:$0xff]
        %v321 = vld [vmem:[%s319 + $0x8] sm:$0xf]
        %v322 = vld [vmem:[%s319 + $0xc] sm:$0xff]
        %v323 = vld [vmem:[%s319 + $0x14] sm:$0xf]
        %v324 = vld [vmem:[%s319 + $0x18] sm:$0xff]
        %v325 = vld [vmem:[%s319 + $0x20] sm:$0xf]
        %v326 = vld [vmem:[%s319 + $0x24] sm:$0xff]
        %v327 = vld [vmem:[%s319 + $0x2c] sm:$0xf]
        %v328 = vld [vmem:[%s319 + $0x30] sm:$0xff]
        %v329 = vld [vmem:[%s319 + $0x38] sm:$0xf]
        %v330 = vld [vmem:[%s319 + $0x3c] sm:$0xff]
        %v331 = vld [vmem:[%s319 + $0x44] sm:$0xf]
        %v332 = vld [vmem:[%s319 + $0x48] sm:$0xff]
        %v333 = vld [vmem:[%s319 + $0x50] sm:$0xf]
        %v334 = vld [vmem:[%s319 + $0x54] sm:$0xff]
        %v335 = vld [vmem:[%s319 + $0x5c] sm:$0xf]
        %v336 = vld [vmem:[%s319 + $0x60] sm:$0xff]
        %v337 = vld [vmem:[%s319 + $0x68] sm:$0xf]
        %v338 = vld [vmem:[%s319 + $0x6c] sm:$0xff]
        %v339 = vld [vmem:[%s319 + $0x74] sm:$0xf]
        %v340 = vld [vmem:[%s319 + $0x78] sm:$0xff]
        %v341 = vld [vmem:[%s319 + $0x80] sm:$0xf]
        %v342 = vld [vmem:[%s319 + $0x84] sm:$0xff]
        %v343 = vld [vmem:[%s319 + $0x8c] sm:$0xf]
        %v344 = vld [vmem:[%s319 + $0x90] sm:$0xff]
        %v345 = vld [vmem:[%s319 + $0x98] sm:$0xf]
        %v346 = vld [vmem:[%s319 + $0x9c] sm:$0xff]
        %v347 = vld [vmem:[%s319 + $0xa4] sm:$0xf]
        %v348 = vld [vmem:[%s319 + $0xa8] sm:$0xff]
        %v349 = vld [vmem:[%s319 + $0xb0] sm:$0xf]
        %v350 = vld [vmem:[%s319 + $0xb4] sm:$0xff]
        %v351 = vld [vmem:[%s319 + $0xbc] sm:$0xf]
        %s352 = scalar_lea.vmem [#allocation5], 192
        %v353 = vld [vmem:[%s352] sm:$0xf]
        %v354 = vld [vmem:[%s352 + $0x4] sm:$0xf]
        %v355 = vld [vmem:[%s352 + $0x8] sm:$0xf]
        %v356 = vld [vmem:[%s352 + $0xc] sm:$0xf]
        %v357 = vld [vmem:[%s352 + $0x10] sm:$0xf]
        %v358 = vld [vmem:[%s352 + $0x14] sm:$0xf]
        %v359 = vld [vmem:[%s352 + $0x18] sm:$0xf]
        %v360 = vld [vmem:[%s352 + $0x1c] sm:$0xf]
        %v361 = vld [vmem:[%s352 + $0x20] sm:$0xf]
        %v362 = vld [vmem:[%s352 + $0x24] sm:$0xf]
        %v363 = vld [vmem:[%s352 + $0x28] sm:$0xf]
        %v364 = vld [vmem:[%s352 + $0x2c] sm:$0xf]
        %v365 = vld [vmem:[%s352 + $0x30] sm:$0xf]
        %v366 = vld [vmem:[%s352 + $0x34] sm:$0xf]
        %v367 = vld [vmem:[%s352 + $0x38] sm:$0xf]
        %v368 = vld [vmem:[%s352 + $0x3c] sm:$0xf]
        %v369 = vld [vmem:[%s352 + $0x40] sm:$0xf]
        %v370 = vld [vmem:[%s352 + $0x44] sm:$0xf]
        %v371 = vld [vmem:[%s352 + $0x48] sm:$0xf]
        %v372 = vld [vmem:[%s352 + $0x4c] sm:$0xf]
        %v373 = vld [vmem:[%s352 + $0x50] sm:$0xf]
        %v374 = vld [vmem:[%s352 + $0x54] sm:$0xf]
        %v375 = vld [vmem:[%s352 + $0x58] sm:$0xf]
        %v376 = vld [vmem:[%s352 + $0x5c] sm:$0xf]
        %v377 = vld [vmem:[%s352 + $0x60] sm:$0xf]
        %v378 = vld [vmem:[%s352 + $0x64] sm:$0xf]
        %v379 = vld [vmem:[%s352 + $0x68] sm:$0xf]
        %v380 = vld [vmem:[%s352 + $0x6c] sm:$0xf]
        %v381 = vld [vmem:[%s352 + $0x70] sm:$0xf]
        %v382 = vld [vmem:[%s352 + $0x74] sm:$0xf]
        %v383 = vld [vmem:[%s352 + $0x78] sm:$0xf]
        %v384 = vld [vmem:[%s352 + $0x7c] sm:$0xf]
        %v385 = vld [vmem:[%s352 + $0x80] sm:$0xf]
        %v386 = vld [vmem:[%s352 + $0x84] sm:$0xf]
        %v387 = vld [vmem:[%s352 + $0x88] sm:$0xf]
        %v388 = vld [vmem:[%s352 + $0x8c] sm:$0xf]
        %v389 = vld [vmem:[%s352 + $0x90] sm:$0xf]
        %v390 = vld [vmem:[%s352 + $0x94] sm:$0xf]
        %v391 = vld [vmem:[%s352 + $0x98] sm:$0xf]
        %v392 = vld [vmem:[%s352 + $0x9c] sm:$0xf]
        %v393 = vld [vmem:[%s352 + $0xa0] sm:$0xf]
        %v394 = vld [vmem:[%s352 + $0xa4] sm:$0xf]
        %v395 = vld [vmem:[%s352 + $0xa8] sm:$0xf]
        %v396 = vld [vmem:[%s352 + $0xac] sm:$0xf]
        %v397 = vld [vmem:[%s352 + $0xb0] sm:$0xf]
        %v398 = vld [vmem:[%s352 + $0xb4] sm:$0xf]
        %v399 = vld [vmem:[%s352 + $0xb8] sm:$0xf]
        %v400 = vld [vmem:[%s352 + $0xbc] sm:$0xf]
        %v433 = vunpack.c.l.b16 %v320
        %v434 = vunpack.c.h.b16 %v320
        %v435 = vunpack.c.l.b16 %v321
        %v436 = vunpack.c.l.b16 %v322
        %v437 = vunpack.c.h.b16 %v322
        %v438 = vunpack.c.l.b16 %v323
        %v439 = vunpack.c.l.b16 %v324
        %v440 = vunpack.c.h.b16 %v324
        %v441 = vunpack.c.l.b16 %v325
        %v442 = vunpack.c.l.b16 %v326
        %v443 = vunpack.c.h.b16 %v326
        %v444 = vunpack.c.l.b16 %v327
        %v445 = vunpack.c.l.b16 %v328
        %v446 = vunpack.c.h.b16 %v328
        %v447 = vunpack.c.l.b16 %v329
        %v448 = vunpack.c.l.b16 %v330
        %v449 = vunpack.c.h.b16 %v330
        %v450 = vunpack.c.l.b16 %v331
        %v451 = vunpack.c.l.b16 %v332
        %v452 = vunpack.c.h.b16 %v332
        %v453 = vunpack.c.l.b16 %v333
        %v454 = vunpack.c.l.b16 %v334
        %v455 = vunpack.c.h.b16 %v334
        %v456 = vunpack.c.l.b16 %v335
        %v457 = vunpack.c.l.b16 %v336
        %v458 = vunpack.c.h.b16 %v336
        %v459 = vunpack.c.l.b16 %v337
        %v460 = vunpack.c.l.b16 %v338
        %v461 = vunpack.c.h.b16 %v338
        %v462 = vunpack.c.l.b16 %v339
        %v463 = vunpack.c.l.b16 %v340
        %v464 = vunpack.c.h.b16 %v340
        %v465 = vunpack.c.l.b16 %v341
        %v466 = vunpack.c.l.b16 %v342
        %v467 = vunpack.c.h.b16 %v342
        %v468 = vunpack.c.l.b16 %v343
        %v469 = vunpack.c.l.b16 %v344
        %v470 = vunpack.c.h.b16 %v344
        %v471 = vunpack.c.l.b16 %v345
        %v472 = vunpack.c.l.b16 %v346
        %v473 = vunpack.c.h.b16 %v346
        %v474 = vunpack.c.l.b16 %v347
        %v475 = vunpack.c.l.b16 %v348
        %v476 = vunpack.c.h.b16 %v348
        %v477 = vunpack.c.l.b16 %v349
        %v478 = vunpack.c.l.b16 %v350
        %v479 = vunpack.c.h.b16 %v350
        %v480 = vunpack.c.l.b16 %v351
        %v481 = vpack.c.b16 %v436, %v433
        %v482 = vpack.c.b16 %v437, %v434
        %v483 = vpack.c.b16 %v438, %v435
        %v484 = vpack.c.b16 %v442, %v439
        %v485 = vpack.c.b16 %v443, %v440
        %v486 = vpack.c.b16 %v444, %v441
        %v487 = vpack.c.b16 %v448, %v445
        %v488 = vpack.c.b16 %v449, %v446
        %v489 = vpack.c.b16 %v450, %v447
        %v490 = vpack.c.b16 %v454, %v451
        %v491 = vpack.c.b16 %v455, %v452
        %v492 = vpack.c.b16 %v456, %v453
        %v493 = vpack.c.b16 %v460, %v457
        %v494 = vpack.c.b16 %v461, %v458
        %v495 = vpack.c.b16 %v462, %v459
        %v496 = vpack.c.b16 %v466, %v463
        %v497 = vpack.c.b16 %v467, %v464
        %v498 = vpack.c.b16 %v468, %v465
        %v499 = vpack.c.b16 %v472, %v469
        %v500 = vpack.c.b16 %v473, %v470
        %v501 = vpack.c.b16 %v474, %v471
        %v502 = vpack.c.b16 %v478, %v475
        %v503 = vpack.c.b16 %v479, %v476
        %v504 = vpack.c.b16 %v480, %v477
        %v577 = vunpack.c.l.b16 %v353
        %v578 = vunpack.c.l.b16 %v354
        %v579 = vunpack.c.l.b16 %v355
        %v580 = vunpack.c.l.b16 %v356
        %v581 = vunpack.c.l.b16 %v357
        %v582 = vunpack.c.l.b16 %v358
        %v583 = vunpack.c.l.b16 %v359
        %v584 = vunpack.c.l.b16 %v360
        %v585 = vunpack.c.l.b16 %v361
        %v586 = vunpack.c.l.b16 %v362
        %v587 = vunpack.c.l.b16 %v363
        %v588 = vunpack.c.l.b16 %v364
        %v589 = vunpack.c.l.b16 %v365
        %v590 = vunpack.c.l.b16 %v366
        %v591 = vunpack.c.l.b16 %v367
        %v592 = vunpack.c.l.b16 %v368
        %v593 = vunpack.c.l.b16 %v369
        %v594 = vunpack.c.l.b16 %v370
        %v595 = vunpack.c.l.b16 %v371
        %v596 = vunpack.c.l.b16 %v372
        %v597 = vunpack.c.l.b16 %v373
        %v598 = vunpack.c.l.b16 %v374
        %v599 = vunpack.c.l.b16 %v375
        %v600 = vunpack.c.l.b16 %v376
        %v601 = vunpack.c.l.b16 %v377
        %v602 = vunpack.c.l.b16 %v378
        %v603 = vunpack.c.l.b16 %v379
        %v604 = vunpack.c.l.b16 %v380
        %v605 = vunpack.c.l.b16 %v381
        %v606 = vunpack.c.l.b16 %v382
        %v607 = vunpack.c.l.b16 %v383
        %v608 = vunpack.c.l.b16 %v384
        %v609 = vunpack.c.l.b16 %v385
        %v610 = vunpack.c.l.b16 %v386
        %v611 = vunpack.c.l.b16 %v387
        %v612 = vunpack.c.l.b16 %v388
        %v613 = vunpack.c.l.b16 %v389
        %v614 = vunpack.c.l.b16 %v390
        %v615 = vunpack.c.l.b16 %v391
        %v616 = vunpack.c.l.b16 %v392
        %v617 = vunpack.c.l.b16 %v393
        %v618 = vunpack.c.l.b16 %v394
        %v619 = vunpack.c.l.b16 %v395
        %v620 = vunpack.c.l.b16 %v396
        %v621 = vunpack.c.l.b16 %v397
        %v622 = vunpack.c.l.b16 %v398
        %v623 = vunpack.c.l.b16 %v399
        %v624 = vunpack.c.l.b16 %v400
        %v625 = vpack.c.b16 %v578, %v577
        %v626 = vpack.c.b16 %v580, %v579
        %v627 = vpack.c.b16 %v582, %v581
        %v628 = vpack.c.b16 %v584, %v583
        %v629 = vpack.c.b16 %v586, %v585
        %v630 = vpack.c.b16 %v588, %v587
        %v631 = vpack.c.b16 %v590, %v589
        %v632 = vpack.c.b16 %v592, %v591
        %v633 = vpack.c.b16 %v594, %v593
        %v634 = vpack.c.b16 %v596, %v595
        %v635 = vpack.c.b16 %v598, %v597
        %v636 = vpack.c.b16 %v600, %v599
        %v637 = vpack.c.b16 %v602, %v601
        %v638 = vpack.c.b16 %v604, %v603
        %v639 = vpack.c.b16 %v606, %v605
        %v640 = vpack.c.b16 %v608, %v607
        %v641 = vpack.c.b16 %v610, %v609
        %v642 = vpack.c.b16 %v612, %v611
        %v643 = vpack.c.b16 %v614, %v613
        %v644 = vpack.c.b16 %v616, %v615
        %v645 = vpack.c.b16 %v618, %v617
        %v646 = vpack.c.b16 %v620, %v619
        %v647 = vpack.c.b16 %v622, %v621
        %v648 = vpack.c.b16 %v624, %v623
        %673 = vmatprep.subr.bf16.mxu0 0
        %674 = vmatpush1.bf16.msra.mxu0 %v625
        %675 = vmatprep.subr.bf16.mxu0 0
        %676 = vmatpush1.bf16.msra.mxu0 %v626
        %677 = vmatprep.subr.bf16.mxu0 0
        %678 = vmatpush1.bf16.msra.mxu0 %v627
        %679 = vmatprep.subr.bf16.mxu0 0
        %680 = vmatpush1.bf16.msra.mxu0 %v628
        %681 = vmatprep.subr.bf16.mxu0 0
        %682 = vmatpush1.bf16.msra.mxu0 %v629
        %683 = vmatprep.subr.bf16.mxu0 0
        %684 = vmatpush1.bf16.msra.mxu0 %v630
        %685 = vmatprep.subr.bf16.mxu0 0
        %686 = vmatpush1.bf16.msra.mxu0 %v631
        %687 = vmatprep.subr.bf16.mxu0 0
        %688 = vmatpush1.bf16.msra.mxu0 %v632
        %689 = vmatprep.subr.bf16.mxu0 0
        %690 = vmatpush1.bf16.msra.mxu0 %v633
        %691 = vmatprep.subr.bf16.mxu0 0
        %692 = vmatpush1.bf16.msra.mxu0 %v634
        %693 = vmatprep.subr.bf16.mxu0 0
        %694 = vmatpush1.bf16.msra.mxu0 %v635
        %695 = vmatprep.subr.bf16.mxu0 0
        %696 = vmatpush1.bf16.msra.mxu0 %v636
        %697 = vmatprep.subr.bf16.mxu0 0
        %698 = vmatpush1.bf16.msra.mxu0 %v637
        %699 = vmatprep.subr.bf16.mxu0 0
        %700 = vmatpush1.bf16.msra.mxu0 %v638
        %701 = vmatprep.subr.bf16.mxu0 0
        %702 = vmatpush1.bf16.msra.mxu0 %v639
        %703 = vmatprep.subr.bf16.mxu0 0
        %704 = vmatpush1.bf16.msra.mxu0 %v640
        %705 = vmatprep.mubr.bf16.mxu0 %v482
        %706 = vmatmul.mubr.bf16.gmra.mrb[0].mxu0 %v481
        %v707 = vpop.f32.mrb[0].mxu0
        %v708 = vadd.f32 0.0, %v707
        %v709 = vpop.f32.mrb[0].mxu0
        %v710 = vpop.f32.mrb[0].mxu0
        %v711 = vadd.f32 0.0, %v710
        %v712 = vpop.f32.mrb[0].mxu0
        %713 = vmatprep.mubr.bf16.mxu0 %v485
        %714 = vmatmul.mubr.bf16.gmra.mrb[0].mxu0 %v484
        %v715 = vpop.f32.mrb[0].mxu0
        %v716 = vadd.f32 0.0, %v715
        %v717 = vpop.f32.mrb[0].mxu0
        %v718 = vpop.f32.mrb[0].mxu0
        %v719 = vadd.f32 0.0, %v718
        %v720 = vpop.f32.mrb[0].mxu0
        %721 = vmatprep.mubr.bf16.mxu0 %v488
        %722 = vmatmul.mubr.bf16.gmra.mrb[0].mxu0 %v487
        %v723 = vpop.f32.mrb[0].mxu0
        %v724 = vadd.f32 0.0, %v723
        %v725 = vpop.f32.mrb[0].mxu0
        %v726 = vpop.f32.mrb[0].mxu0
        %v727 = vadd.f32 0.0, %v726
        %v728 = vpop.f32.mrb[0].mxu0
        %729 = vmatprep.mubr.bf16.mxu0 %v491
        %730 = vmatmul.mubr.bf16.gmra.mrb[0].mxu0 %v490
        %v731 = vpop.f32.mrb[0].mxu0
        %v732 = vadd.f32 0.0, %v731
        %v733 = vpop.f32.mrb[0].mxu0
        %v734 = vpop.f32.mrb[0].mxu0
        %v735 = vadd.f32 0.0, %v734
        %v736 = vpop.f32.mrb[0].mxu0
        %737 = vmatprep.mubr.bf16.mxu0 %v494
        %738 = vmatmul.mubr.bf16.gmra.mrb[0].mxu0 %v493
        %v739 = vpop.f32.mrb[0].mxu0
        %v740 = vadd.f32 0.0, %v739
        %v741 = vpop.f32.mrb[0].mxu0
        %v742 = vpop.f32.mrb[0].mxu0
        %v743 = vadd.f32 0.0, %v742
        %v744 = vpop.f32.mrb[0].mxu0
        %745 = vmatprep.mubr.bf16.mxu0 %v497
        %746 = vmatmul.mubr.bf16.gmra.mrb[0].mxu0 %v496
        %v747 = vpop.f32.mrb[0].mxu0
        %v748 = vadd.f32 0.0, %v747
        %v749 = vpop.f32.mrb[0].mxu0
        %v750 = vpop.f32.mrb[0].mxu0
        %v751 = vadd.f32 0.0, %v750
        %v752 = vpop.f32.mrb[0].mxu0
        %753 = vmatprep.mubr.bf16.mxu0 %v500
        %754 = vmatmul.mubr.bf16.gmra.mrb[0].mxu0 %v499
        %v755 = vpop.f32.mrb[0].mxu0
        %v756 = vadd.f32 0.0, %v755
        %v757 = vpop.f32.mrb[0].mxu0
        %v758 = vpop.f32.mrb[0].mxu0
        %v759 = vadd.f32 0.0, %v758
        %v760 = vpop.f32.mrb[0].mxu0
        %761 = vmatprep.mubr.bf16.mxu0 %v503
        %762 = vmatmul.mubr.bf16.gmra.mrb[0].mxu0 %v502
        %v763 = vpop.f32.mrb[0].mxu0
        %v764 = vadd.f32 0.0, %v763
        %v765 = vpop.f32.mrb[0].mxu0
        %v766 = vpop.f32.mrb[0].mxu0
        %v767 = vadd.f32 0.0, %v766
        %v768 = vpop.f32.mrb[0].mxu0
        %769 = vdwg.mxu0
        %770 = vmatprep.subr.bf16.mxu0 0
        %771 = vmatpush1.bf16.msra.mxu0 %v641
        %772 = vmatprep.subr.bf16.mxu0 0
        %773 = vmatpush1.bf16.msra.mxu0 %v642
        %774 = vmatprep.subr.bf16.mxu0 0
        %775 = vmatpush1.bf16.msra.mxu0 %v643
        %776 = vmatprep.subr.bf16.mxu0 0
        %777 = vmatpush1.bf16.msra.mxu0 %v644
        %778 = vmatprep.subr.bf16.mxu0 0
        %779 = vmatpush1.bf16.msra.mxu0 %v645
        %780 = vmatprep.subr.bf16.mxu0 0
        %781 = vmatpush1.bf16.msra.mxu0 %v646
        %782 = vmatprep.subr.bf16.mxu0 0
        %783 = vmatpush1.bf16.msra.mxu0 %v647
        %784 = vmatprep.subr.bf16.mxu0 0
        %785 = vmatpush1.bf16.msra.mxu0 %v648
        %786 = vmatprep.subr.bf16.mxu0 0
        %787 = vmatpush1.bf16.msra.mxu0 0
        %788 = vmatprep.subr.bf16.mxu0 0
        %789 = vmatpush1.bf16.msra.mxu0 0
        %790 = vmatprep.subr.bf16.mxu0 0
        %791 = vmatpush1.bf16.msra.mxu0 0
        %792 = vmatprep.subr.bf16.mxu0 0
        %793 = vmatpush1.bf16.msra.mxu0 0
        %794 = vmatprep.subr.bf16.mxu0 0
        %795 = vmatpush1.bf16.msra.mxu0 0
        %796 = vmatprep.subr.bf16.mxu0 0
        %797 = vmatpush1.bf16.msra.mxu0 0
        %798 = vmatprep.subr.bf16.mxu0 0
        %799 = vmatpush1.bf16.msra.mxu0 0
        %800 = vmatprep.subr.bf16.mxu0 0
        %801 = vmatpush1.bf16.msra.mxu0 0
        %802 = vmatprep.mubr.bf16.mxu0 0
        %803 = vmatmul.mubr.bf16.gmra.mrb[0].mxu0 %v483
        %v804 = vpop.f32.mrb[0].mxu0
        %v805 = vadd.f32 %v708, %v804
        %v806 = vpop.f32.mrb[0].mxu0
        %v807 = vpop.f32.mrb[0].mxu0
        %v808 = vadd.f32 %v711, %v807
        %v809 = vpop.f32.mrb[0].mxu0
        %810 = vmatprep.mubr.bf16.mxu0 0
        %811 = vmatmul.mubr.bf16.gmra.mrb[0].mxu0 %v486
        %v812 = vpop.f32.mrb[0].mxu0
        %v813 = vadd.f32 %v716, %v812
        %v814 = vpop.f32.mrb[0].mxu0
        %v815 = vpop.f32.mrb[0].mxu0
        %v816 = vadd.f32 %v719, %v815
        %v817 = vpop.f32.mrb[0].mxu0
        %818 = vmatprep.mubr.bf16.mxu0 0
        %819 = vmatmul.mubr.bf16.gmra.mrb[0].mxu0 %v489
        %v820 = vpop.f32.mrb[0].mxu0
        %v821 = vadd.f32 %v724, %v820
        %v822 = vpop.f32.mrb[0].mxu0
        %v823 = vpop.f32.mrb[0].mxu0
        %v824 = vadd.f32 %v727, %v823
        %v825 = vpop.f32.mrb[0].mxu0
        %826 = vmatprep.mubr.bf16.mxu0 0
        %827 = vmatmul.mubr.bf16.gmra.mrb[0].mxu0 %v492
        %v828 = vpop.f32.mrb[0].mxu0
        %v829 = vadd.f32 %v732, %v828
        %v830 = vpop.f32.mrb[0].mxu0
        %v831 = vpop.f32.mrb[0].mxu0
        %v832 = vadd.f32 %v735, %v831
        %v833 = vpop.f32.mrb[0].mxu0
        %834 = vmatprep.mubr.bf16.mxu0 0
        %835 = vmatmul.mubr.bf16.gmra.mrb[0].mxu0 %v495
        %v836 = vpop.f32.mrb[0].mxu0
        %v837 = vadd.f32 %v740, %v836
        %v838 = vpop.f32.mrb[0].mxu0
        %v839 = vpop.f32.mrb[0].mxu0
        %v840 = vadd.f32 %v743, %v839
        %v841 = vpop.f32.mrb[0].mxu0
        %842 = vmatprep.mubr.bf16.mxu0 0
        %843 = vmatmul.mubr.bf16.gmra.mrb[0].mxu0 %v498
        %v844 = vpop.f32.mrb[0].mxu0
        %v845 = vadd.f32 %v748, %v844
        %v846 = vpop.f32.mrb[0].mxu0
        %v847 = vpop.f32.mrb[0].mxu0
        %v848 = vadd.f32 %v751, %v847
        %v849 = vpop.f32.mrb[0].mxu0
        %850 = vmatprep.mubr.bf16.mxu0 0
        %851 = vmatmul.mubr.bf16.gmra.mrb[0].mxu0 %v501
        %v852 = vpop.f32.mrb[0].mxu0
        %v853 = vadd.f32 %v756, %v852
        %v854 = vpop.f32.mrb[0].mxu0
        %v855 = vpop.f32.mrb[0].mxu0
        %v856 = vadd.f32 %v759, %v855
        %v857 = vpop.f32.mrb[0].mxu0
        %858 = vmatprep.mubr.bf16.mxu0 0
        %859 = vmatmul.mubr.bf16.gmra.mrb[0].mxu0 %v504
        %v860 = vpop.f32.mrb[0].mxu0
        %v861 = vadd.f32 %v764, %v860
        %v862 = vpop.f32.mrb[0].mxu0
        %v863 = vpop.f32.mrb[0].mxu0
        %v864 = vadd.f32 %v767, %v863
        %v865 = vpop.f32.mrb[0].mxu0
        %866 = vdwg.mxu0
        %v899 = vunpack.c.l.b16 %v236
        %v900 = vunpack.c.h.b16 %v236
        %v901 = vunpack.c.l.b16 %v237
        %v902 = vunpack.c.l.b16 %v238
        %v903 = vunpack.c.h.b16 %v238
        %v904 = vunpack.c.l.b16 %v239
        %v905 = vunpack.c.l.b16 %v240
        %v906 = vunpack.c.h.b16 %v240
        %v907 = vunpack.c.l.b16 %v241
        %v908 = vunpack.c.l.b16 %v242
        %v909 = vunpack.c.h.b16 %v242
        %v910 = vunpack.c.l.b16 %v243
        %v911 = vunpack.c.l.b16 %v244
        %v912 = vunpack.c.h.b16 %v244
        %v913 = vunpack.c.l.b16 %v245
        %v914 = vunpack.c.l.b16 %v246
        %v915 = vunpack.c.h.b16 %v246
        %v916 = vunpack.c.l.b16 %v247
        %v917 = vunpack.c.l.b16 %v248
        %v918 = vunpack.c.h.b16 %v248
        %v919 = vunpack.c.l.b16 %v249
        %v920 = vunpack.c.l.b16 %v250
        %v921 = vunpack.c.h.b16 %v250
        %v922 = vunpack.c.l.b16 %v251
        %v923 = vunpack.c.l.b16 %v252
        %v924 = vunpack.c.h.b16 %v252
        %v925 = vunpack.c.l.b16 %v253
        %v926 = vunpack.c.l.b16 %v254
        %v927 = vunpack.c.h.b16 %v254
        %v928 = vunpack.c.l.b16 %v255
        %v929 = vunpack.c.l.b16 %v256
        %v930 = vunpack.c.h.b16 %v256
        %v931 = vunpack.c.l.b16 %v257
        %v932 = vunpack.c.l.b16 %v258
        %v933 = vunpack.c.h.b16 %v258
        %v934 = vunpack.c.l.b16 %v259
        %v935 = vunpack.c.l.b16 %v260
        %v936 = vunpack.c.h.b16 %v260
        %v937 = vunpack.c.l.b16 %v261
        %v938 = vunpack.c.l.b16 %v262
        %v939 = vunpack.c.h.b16 %v262
        %v940 = vunpack.c.l.b16 %v263
        %v941 = vunpack.c.l.b16 %v264
        %v942 = vunpack.c.h.b16 %v264
        %v943 = vunpack.c.l.b16 %v265
        %v944 = vunpack.c.l.b16 %v266
        %v945 = vunpack.c.h.b16 %v266
        %v946 = vunpack.c.l.b16 %v267
        %v947 = vpack.c.b16 %v902, %v899
        %v948 = vpack.c.b16 %v903, %v900
        %v949 = vpack.c.b16 %v904, %v901
        %v950 = vpack.c.b16 %v908, %v905
        %v951 = vpack.c.b16 %v909, %v906
        %v952 = vpack.c.b16 %v910, %v907
        %v953 = vpack.c.b16 %v914, %v911
        %v954 = vpack.c.b16 %v915, %v912
        %v955 = vpack.c.b16 %v916, %v913
        %v956 = vpack.c.b16 %v920, %v917
        %v957 = vpack.c.b16 %v921, %v918
        %v958 = vpack.c.b16 %v922, %v919
        %v959 = vpack.c.b16 %v926, %v923
        %v960 = vpack.c.b16 %v927, %v924
        %v961 = vpack.c.b16 %v928, %v925
        %v962 = vpack.c.b16 %v932, %v929
        %v963 = vpack.c.b16 %v933, %v930
        %v964 = vpack.c.b16 %v934, %v931
        %v965 = vpack.c.b16 %v938, %v935
        %v966 = vpack.c.b16 %v939, %v936
        %v967 = vpack.c.b16 %v940, %v937
        %v968 = vpack.c.b16 %v944, %v941
        %v969 = vpack.c.b16 %v945, %v942
        %v970 = vpack.c.b16 %v946, %v943
        %v1043 = vunpack.c.l.b16 %v268
        %v1044 = vunpack.c.l.b16 %v269
        %v1045 = vunpack.c.l.b16 %v270
        %v1046 = vunpack.c.l.b16 %v271
        %v1047 = vunpack.c.l.b16 %v272
        %v1048 = vunpack.c.l.b16 %v273
        %v1049 = vunpack.c.l.b16 %v274
        %v1050 = vunpack.c.l.b16 %v275
        %v1051 = vunpack.c.l.b16 %v276
        %v1052 = vunpack.c.l.b16 %v277
        %v1053 = vunpack.c.l.b16 %v278
        %v1054 = vunpack.c.l.b16 %v279
        %v1055 = vunpack.c.l.b16 %v280
        %v1056 = vunpack.c.l.b16 %v281
        %v1057 = vunpack.c.l.b16 %v282
        %v1058 = vunpack.c.l.b16 %v283
        %v1059 = vunpack.c.l.b16 %v284
        %v1060 = vunpack.c.l.b16 %v285
        %v1061 = vunpack.c.l.b16 %v286
        %v1062 = vunpack.c.l.b16 %v287
        %v1063 = vunpack.c.l.b16 %v288
        %v1064 = vunpack.c.l.b16 %v289
        %v1065 = vunpack.c.l.b16 %v290
        %v1066 = vunpack.c.l.b16 %v291
        %v1067 = vunpack.c.l.b16 %v292
        %v1068 = vunpack.c.l.b16 %v293
        %v1069 = vunpack.c.l.b16 %v294
        %v1070 = vunpack.c.l.b16 %v295
        %v1071 = vunpack.c.l.b16 %v296
        %v1072 = vunpack.c.l.b16 %v297
        %v1073 = vunpack.c.l.b16 %v298
        %v1074 = vunpack.c.l.b16 %v299
        %v1075 = vunpack.c.l.b16 %v300
        %v1076 = vunpack.c.l.b16 %v301
        %v1077 = vunpack.c.l.b16 %v302
        %v1078 = vunpack.c.l.b16 %v303
        %v1079 = vunpack.c.l.b16 %v304
        %v1080 = vunpack.c.l.b16 %v305
        %v1081 = vunpack.c.l.b16 %v306
        %v1082 = vunpack.c.l.b16 %v307
        %v1083 = vunpack.c.l.b16 %v308
        %v1084 = vunpack.c.l.b16 %v309
        %v1085 = vunpack.c.l.b16 %v310
        %v1086 = vunpack.c.l.b16 %v311
        %v1087 = vunpack.c.l.b16 %v312
        %v1088 = vunpack.c.l.b16 %v313
        %v1089 = vunpack.c.l.b16 %v314
        %v1090 = vunpack.c.l.b16 %v315
        %v1091 = vpack.c.b16 %v1044, %v1043
        %v1092 = vpack.c.b16 %v1046, %v1045
        %v1093 = vpack.c.b16 %v1048, %v1047
        %v1094 = vpack.c.b16 %v1050, %v1049
        %v1095 = vpack.c.b16 %v1052, %v1051
        %v1096 = vpack.c.b16 %v1054, %v1053
        %v1097 = vpack.c.b16 %v1056, %v1055
        %v1098 = vpack.c.b16 %v1058, %v1057
        %v1099 = vpack.c.b16 %v1060, %v1059
        %v1100 = vpack.c.b16 %v1062, %v1061
        %v1101 = vpack.c.b16 %v1064, %v1063
        %v1102 = vpack.c.b16 %v1066, %v1065
        %v1103 = vpack.c.b16 %v1068, %v1067
        %v1104 = vpack.c.b16 %v1070, %v1069
        %v1105 = vpack.c.b16 %v1072, %v1071
        %v1106 = vpack.c.b16 %v1074, %v1073
        %v1107 = vpack.c.b16 %v1076, %v1075
        %v1108 = vpack.c.b16 %v1078, %v1077
        %v1109 = vpack.c.b16 %v1080, %v1079
        %v1110 = vpack.c.b16 %v1082, %v1081
        %v1111 = vpack.c.b16 %v1084, %v1083
        %v1112 = vpack.c.b16 %v1086, %v1085
        %v1113 = vpack.c.b16 %v1088, %v1087
        %v1114 = vpack.c.b16 %v1090, %v1089
        %1139 = vmatprep.subr.bf16.mxu0 0
        %1140 = vmatpush1.bf16.msra.mxu0 %v1091
        %1141 = vmatprep.subr.bf16.mxu0 0
        %1142 = vmatpush1.bf16.msra.mxu0 %v1092
        %1143 = vmatprep.subr.bf16.mxu0 0
        %1144 = vmatpush1.bf16.msra.mxu0 %v1093
        %1145 = vmatprep.subr.bf16.mxu0 0
        %1146 = vmatpush1.bf16.msra.mxu0 %v1094
        %1147 = vmatprep.subr.bf16.mxu0 0
        %1148 = vmatpush1.bf16.msra.mxu0 %v1095
        %1149 = vmatprep.subr.bf16.mxu0 0
        %1150 = vmatpush1.bf16.msra.mxu0 %v1096
        %1151 = vmatprep.subr.bf16.mxu0 0
        %1152 = vmatpush1.bf16.msra.mxu0 %v1097
        %1153 = vmatprep.subr.bf16.mxu0 0
        %1154 = vmatpush1.bf16.msra.mxu0 %v1098
        %1155 = vmatprep.subr.bf16.mxu0 0
        %1156 = vmatpush1.bf16.msra.mxu0 %v1099
        %1157 = vmatprep.subr.bf16.mxu0 0
        %1158 = vmatpush1.bf16.msra.mxu0 %v1100
        %1159 = vmatprep.subr.bf16.mxu0 0
        %1160 = vmatpush1.bf16.msra.mxu0 %v1101
        %1161 = vmatprep.subr.bf16.mxu0 0
        %1162 = vmatpush1.bf16.msra.mxu0 %v1102
        %1163 = vmatprep.subr.bf16.mxu0 0
        %1164 = vmatpush1.bf16.msra.mxu0 %v1103
        %1165 = vmatprep.subr.bf16.mxu0 0
        %1166 = vmatpush1.bf16.msra.mxu0 %v1104
        %1167 = vmatprep.subr.bf16.mxu0 0
        %1168 = vmatpush1.bf16.msra.mxu0 %v1105
        %1169 = vmatprep.subr.bf16.mxu0 0
        %1170 = vmatpush1.bf16.msra.mxu0 %v1106
        %1171 = vmatprep.mubr.bf16.mxu0 %v948
        %1172 = vmatmul.mubr.bf16.gmra.mrb[0].mxu0 %v947
        %v1173 = vpop.f32.mrb[0].mxu0
        %v1174 = vadd.f32 %v805, %v1173
        %v1175 = vpop.f32.mrb[0].mxu0
        %v1176 = vpop.f32.mrb[0].mxu0
        %v1177 = vadd.f32 %v808, %v1176
        %v1178 = vpop.f32.mrb[0].mxu0
        %1179 = vmatprep.mubr.bf16.mxu0 %v951
        %1180 = vmatmul.mubr.bf16.gmra.mrb[0].mxu0 %v950
        %v1181 = vpop.f32.mrb[0].mxu0
        %v1182 = vadd.f32 %v813, %v1181
        %v1183 = vpop.f32.mrb[0].mxu0
        %v1184 = vpop.f32.mrb[0].mxu0
        %v1185 = vadd.f32 %v816, %v1184
        %v1186 = vpop.f32.mrb[0].mxu0
        %1187 = vmatprep.mubr.bf16.mxu0 %v954
        %1188 = vmatmul.mubr.bf16.gmra.mrb[0].mxu0 %v953
        %v1189 = vpop.f32.mrb[0].mxu0
        %v1190 = vadd.f32 %v821, %v1189
        %v1191 = vpop.f32.mrb[0].mxu0
        %v1192 = vpop.f32.mrb[0].mxu0
        %v1193 = vadd.f32 %v824, %v1192
        %v1194 = vpop.f32.mrb[0].mxu0
        %1195 = vmatprep.mubr.bf16.mxu0 %v957
        %1196 = vmatmul.mubr.bf16.gmra.mrb[0].mxu0 %v956
        %v1197 = vpop.f32.mrb[0].mxu0
        %v1198 = vadd.f32 %v829, %v1197
        %v1199 = vpop.f32.mrb[0].mxu0
        %v1200 = vpop.f32.mrb[0].mxu0
        %v1201 = vadd.f32 %v832, %v1200
        %v1202 = vpop.f32.mrb[0].mxu0
        %1203 = vmatprep.mubr.bf16.mxu0 %v960
        %1204 = vmatmul.mubr.bf16.gmra.mrb[0].mxu0 %v959
        %v1205 = vpop.f32.mrb[0].mxu0
        %v1206 = vadd.f32 %v837, %v1205
        %v1207 = vpop.f32.mrb[0].mxu0
        %v1208 = vpop.f32.mrb[0].mxu0
        %v1209 = vadd.f32 %v840, %v1208
        %v1210 = vpop.f32.mrb[0].mxu0
        %1211 = vmatprep.mubr.bf16.mxu0 %v963
        %1212 = vmatmul.mubr.bf16.gmra.mrb[0].mxu0 %v962
        %v1213 = vpop.f32.mrb[0].mxu0
        %v1214 = vadd.f32 %v845, %v1213
        %v1215 = vpop.f32.mrb[0].mxu0
        %v1216 = vpop.f32.mrb[0].mxu0
        %v1217 = vadd.f32 %v848, %v1216
        %v1218 = vpop.f32.mrb[0].mxu0
        %1219 = vmatprep.mubr.bf16.mxu0 %v966
        %1220 = vmatmul.mubr.bf16.gmra.mrb[0].mxu0 %v965
        %v1221 = vpop.f32.mrb[0].mxu0
        %v1222 = vadd.f32 %v853, %v1221
        %v1223 = vpop.f32.mrb[0].mxu0
        %v1224 = vpop.f32.mrb[0].mxu0
        %v1225 = vadd.f32 %v856, %v1224
        %v1226 = vpop.f32.mrb[0].mxu0
        %1227 = vmatprep.mubr.bf16.mxu0 %v969
        %1228 = vmatmul.mubr.bf16.gmra.mrb[0].mxu0 %v968
        %v1229 = vpop.f32.mrb[0].mxu0
        %v1230 = vadd.f32 %v861, %v1229
        %v1231 = vpop.f32.mrb[0].mxu0
        %v1232 = vpop.f32.mrb[0].mxu0
        %v1233 = vadd.f32 %v864, %v1232
        %v1234 = vpop.f32.mrb[0].mxu0
        %1235 = vdwg.mxu0
        %1236 = vmatprep.subr.bf16.mxu0 0
        %1237 = vmatpush1.bf16.msra.mxu0 %v1107
        %1238 = vmatprep.subr.bf16.mxu0 0
        %1239 = vmatpush1.bf16.msra.mxu0 %v1108
        %1240 = vmatprep.subr.bf16.mxu0 0
        %1241 = vmatpush1.bf16.msra.mxu0 %v1109
        %1242 = vmatprep.subr.bf16.mxu0 0
        %1243 = vmatpush1.bf16.msra.mxu0 %v1110
        %1244 = vmatprep.subr.bf16.mxu0 0
        %1245 = vmatpush1.bf16.msra.mxu0 %v1111
        %1246 = vmatprep.subr.bf16.mxu0 0
        %1247 = vmatpush1.bf16.msra.mxu0 %v1112
        %1248 = vmatprep.subr.bf16.mxu0 0
        %1249 = vmatpush1.bf16.msra.mxu0 %v1113
        %1250 = vmatprep.subr.bf16.mxu0 0
        %1251 = vmatpush1.bf16.msra.mxu0 %v1114
        %1252 = vmatprep.subr.bf16.mxu0 0
        %1253 = vmatpush1.bf16.msra.mxu0 0
        %1254 = vmatprep.subr.bf16.mxu0 0
        %1255 = vmatpush1.bf16.msra.mxu0 0
        %1256 = vmatprep.subr.bf16.mxu0 0
        %1257 = vmatpush1.bf16.msra.mxu0 0
        %1258 = vmatprep.subr.bf16.mxu0 0
        %1259 = vmatpush1.bf16.msra.mxu0 0
        %1260 = vmatprep.subr.bf16.mxu0 0
        %1261 = vmatpush1.bf16.msra.mxu0 0
        %1262 = vmatprep.subr.bf16.mxu0 0
        %1263 = vmatpush1.bf16.msra.mxu0 0
        %1264 = vmatprep.subr.bf16.mxu0 0
        %1265 = vmatpush1.bf16.msra.mxu0 0
        %1266 = vmatprep.subr.bf16.mxu0 0
        %1267 = vmatpush1.bf16.msra.mxu0 0
        %1268 = vmatprep.mubr.bf16.mxu0 0
        %1269 = vmatmul.mubr.bf16.gmra.mrb[0].mxu0 %v949
        %v1270 = vpop.f32.mrb[0].mxu0
        %v1271 = vadd.f32 %v1174, %v1270
        %v1272 = vpop.f32.mrb[0].mxu0
        %v1273 = vpop.f32.mrb[0].mxu0
        %v1274 = vadd.f32 %v1177, %v1273
        %v1275 = vpop.f32.mrb[0].mxu0
        %1276 = vmatprep.mubr.bf16.mxu0 0
        %1277 = vmatmul.mubr.bf16.gmra.mrb[0].mxu0 %v952
        %v1278 = vpop.f32.mrb[0].mxu0
        %v1279 = vadd.f32 %v1182, %v1278
        %v1280 = vpop.f32.mrb[0].mxu0
        %v1281 = vpop.f32.mrb[0].mxu0
        %v1282 = vadd.f32 %v1185, %v1281
        %v1283 = vpop.f32.mrb[0].mxu0
        %1284 = vmatprep.mubr.bf16.mxu0 0
        %1285 = vmatmul.mubr.bf16.gmra.mrb[0].mxu0 %v955
        %v1286 = vpop.f32.mrb[0].mxu0
        %v1287 = vadd.f32 %v1190, %v1286
        %v1288 = vpop.f32.mrb[0].mxu0
        %v1289 = vpop.f32.mrb[0].mxu0
        %v1290 = vadd.f32 %v1193, %v1289
        %v1291 = vpop.f32.mrb[0].mxu0
        %1292 = vmatprep.mubr.bf16.mxu0 0
        %1293 = vmatmul.mubr.bf16.gmra.mrb[0].mxu0 %v958
        %v1294 = vpop.f32.mrb[0].mxu0
        %v1295 = vadd.f32 %v1198, %v1294
        %v1296 = vpop.f32.mrb[0].mxu0
        %v1297 = vpop.f32.mrb[0].mxu0
        %v1298 = vadd.f32 %v1201, %v1297
        %v1299 = vpop.f32.mrb[0].mxu0
        %1300 = vmatprep.mubr.bf16.mxu0 0
        %1301 = vmatmul.mubr.bf16.gmra.mrb[0].mxu0 %v961
        %v1302 = vpop.f32.mrb[0].mxu0
        %v1303 = vadd.f32 %v1206, %v1302
        %v1304 = vpop.f32.mrb[0].mxu0
        %v1305 = vpop.f32.mrb[0].mxu0
        %v1306 = vadd.f32 %v1209, %v1305
        %v1307 = vpop.f32.mrb[0].mxu0
        %1308 = vmatprep.mubr.bf16.mxu0 0
        %1309 = vmatmul.mubr.bf16.gmra.mrb[0].mxu0 %v964
        %v1310 = vpop.f32.mrb[0].mxu0
        %v1311 = vadd.f32 %v1214, %v1310
        %v1312 = vpop.f32.mrb[0].mxu0
        %v1313 = vpop.f32.mrb[0].mxu0
        %v1314 = vadd.f32 %v1217, %v1313
        %v1315 = vpop.f32.mrb[0].mxu0
        %1316 = vmatprep.mubr.bf16.mxu0 0
        %1317 = vmatmul.mubr.bf16.gmra.mrb[0].mxu0 %v967
        %v1318 = vpop.f32.mrb[0].mxu0
        %v1319 = vadd.f32 %v1222, %v1318
        %v1320 = vpop.f32.mrb[0].mxu0
        %v1321 = vpop.f32.mrb[0].mxu0
        %v1322 = vadd.f32 %v1225, %v1321
        %v1323 = vpop.f32.mrb[0].mxu0
        %1324 = vmatprep.mubr.bf16.mxu0 0
        %1325 = vmatmul.mubr.bf16.gmra.mrb[0].mxu0 %v970
        %v1326 = vpop.f32.mrb[0].mxu0
        %v1327 = vadd.f32 %v1230, %v1326
        %v1328 = vpop.f32.mrb[0].mxu0
        %v1329 = vpop.f32.mrb[0].mxu0
        %v1330 = vadd.f32 %v1233, %v1329
        %v1331 = vpop.f32.mrb[0].mxu0
        %1332 = vdwg.mxu0
        %s1333 = sadd.s32 %s232, 2
        %s1334 = smul.u32 %s1333, 6
        %s1335 = smul.addr %s1334, 4
        %s1336 = scalar_lea.vmem %s199, %s1335 [#allocation2]
        %v1337 = vld [vmem:[%s1336] sm:$0xff]
        %v1338 = vld [vmem:[%s1336 + $0x8] sm:$0xf]
        %v1339 = vld [vmem:[%s1336 + $0xc] sm:$0xff]
        %v1340 = vld [vmem:[%s1336 + $0x14] sm:$0xf]
        %v1341 = vld [vmem:[%s1336 + $0x18] sm:$0xff]
        %v1342 = vld [vmem:[%s1336 + $0x20] sm:$0xf]
        %v1343 = vld [vmem:[%s1336 + $0x24] sm:$0xff]
        %v1344 = vld [vmem:[%s1336 + $0x2c] sm:$0xf]
        %v1345 = vld [vmem:[%s1336 + $0x30] sm:$0xff]
        %v1346 = vld [vmem:[%s1336 + $0x38] sm:$0xf]
        %v1347 = vld [vmem:[%s1336 + $0x3c] sm:$0xff]
        %v1348 = vld [vmem:[%s1336 + $0x44] sm:$0xf]
        %v1349 = vld [vmem:[%s1336 + $0x48] sm:$0xff]
        %v1350 = vld [vmem:[%s1336 + $0x50] sm:$0xf]
        %v1351 = vld [vmem:[%s1336 + $0x54] sm:$0xff]
        %v1352 = vld [vmem:[%s1336 + $0x5c] sm:$0xf]
        %v1353 = vld [vmem:[%s1336 + $0x60] sm:$0xff]
        %v1354 = vld [vmem:[%s1336 + $0x68] sm:$0xf]
        %v1355 = vld [vmem:[%s1336 + $0x6c] sm:$0xff]
        %v1356 = vld [vmem:[%s1336 + $0x74] sm:$0xf]
        %v1357 = vld [vmem:[%s1336 + $0x78] sm:$0xff]
        %v1358 = vld [vmem:[%s1336 + $0x80] sm:$0xf]
        %v1359 = vld [vmem:[%s1336 + $0x84] sm:$0xff]
        %v1360 = vld [vmem:[%s1336 + $0x8c] sm:$0xf]
        %v1361 = vld [vmem:[%s1336 + $0x90] sm:$0xff]
        %v1362 = vld [vmem:[%s1336 + $0x98] sm:$0xf]
        %v1363 = vld [vmem:[%s1336 + $0x9c] sm:$0xff]
        %v1364 = vld [vmem:[%s1336 + $0xa4] sm:$0xf]
        %v1365 = vld [vmem:[%s1336 + $0xa8] sm:$0xff]
        %v1366 = vld [vmem:[%s1336 + $0xb0] sm:$0xf]
        %v1367 = vld [vmem:[%s1336 + $0xb4] sm:$0xff]
        %v1368 = vld [vmem:[%s1336 + $0xbc] sm:$0xf]
        %s1369 = scalar_lea.vmem [#allocation5], 384
        %v1370 = vld [vmem:[%s1369] sm:$0xf]
        %v1371 = vld [vmem:[%s1369 + $0x4] sm:$0xf]
        %v1372 = vld [vmem:[%s1369 + $0x8] sm:$0xf]
        %v1373 = vld [vmem:[%s1369 + $0xc] sm:$0xf]
        %v1374 = vld [vmem:[%s1369 + $0x10] sm:$0xf]
        %v1375 = vld [vmem:[%s1369 + $0x14] sm:$0xf]
        %v1376 = vld [vmem:[%s1369 + $0x18] sm:$0xf]
        %v1377 = vld [vmem:[%s1369 + $0x1c] sm:$0xf]
        %v1378 = vld [vmem:[%s1369 + $0x20] sm:$0xf]
        %v1379 = vld [vmem:[%s1369 + $0x24] sm:$0xf]
        %v1380 = vld [vmem:[%s1369 + $0x28] sm:$0xf]
        %v1381 = vld [vmem:[%s1369 + $0x2c] sm:$0xf]
        %v1382 = vld [vmem:[%s1369 + $0x30] sm:$0xf]
        %v1383 = vld [vmem:[%s1369 + $0x34] sm:$0xf]
        %v1384 = vld [vmem:[%s1369 + $0x38] sm:$0xf]
        %v1385 = vld [vmem:[%s1369 + $0x3c] sm:$0xf]
        %v1386 = vld [vmem:[%s1369 + $0x40] sm:$0xf]
        %v1387 = vld [vmem:[%s1369 + $0x44] sm:$0xf]
        %v1388 = vld [vmem:[%s1369 + $0x48] sm:$0xf]
        %v1389 = vld [vmem:[%s1369 + $0x4c] sm:$0xf]
        %v1390 = vld [vmem:[%s1369 + $0x50] sm:$0xf]
        %v1391 = vld [vmem:[%s1369 + $0x54] sm:$0xf]
        %v1392 = vld [vmem:[%s1369 + $0x58] sm:$0xf]
        %v1393 = vld [vmem:[%s1369 + $0x5c] sm:$0xf]
        %v1394 = vld [vmem:[%s1369 + $0x60] sm:$0xf]
        %v1395 = vld [vmem:[%s1369 + $0x64] sm:$0xf]
        %v1396 = vld [vmem:[%s1369 + $0x68] sm:$0xf]
        %v1397 = vld [vmem:[%s1369 + $0x6c] sm:$0xf]
        %v1398 = vld [vmem:[%s1369 + $0x70] sm:$0xf]
        %v1399 = vld [vmem:[%s1369 + $0x74] sm:$0xf]
        %v1400 = vld [vmem:[%s1369 + $0x78] sm:$0xf]
        %v1401 = vld [vmem:[%s1369 + $0x7c] sm:$0xf]
        %v1402 = vld [vmem:[%s1369 + $0x80] sm:$0xf]
        %v1403 = vld [vmem:[%s1369 + $0x84] sm:$0xf]
        %v1404 = vld [vmem:[%s1369 + $0x88] sm:$0xf]
        %v1405 = vld [vmem:[%s1369 + $0x8c] sm:$0xf]
        %v1406 = vld [vmem:[%s1369 + $0x90] sm:$0xf]
        %v1407 = vld [vmem:[%s1369 + $0x94] sm:$0xf]
        %v1408 = vld [vmem:[%s1369 + $0x98] sm:$0xf]
        %v1409 = vld [vmem:[%s1369 + $0x9c] sm:$0xf]
        %v1410 = vld [vmem:[%s1369 + $0xa0] sm:$0xf]
        %v1411 = vld [vmem:[%s1369 + $0xa4] sm:$0xf]
        %v1412 = vld [vmem:[%s1369 + $0xa8] sm:$0xf]
        %v1413 = vld [vmem:[%s1369 + $0xac] sm:$0xf]
        %v1414 = vld [vmem:[%s1369 + $0xb0] sm:$0xf]
        %v1415 = vld [vmem:[%s1369 + $0xb4] sm:$0xf]
        %v1416 = vld [vmem:[%s1369 + $0xb8] sm:$0xf]
        %v1417 = vld [vmem:[%s1369 + $0xbc] sm:$0xf]
        %v1450 = vunpack.c.l.b16 %v1337
        %v1451 = vunpack.c.h.b16 %v1337
        %v1452 = vunpack.c.l.b16 %v1338
        %v1453 = vunpack.c.l.b16 %v1339
        %v1454 = vunpack.c.h.b16 %v1339
        %v1455 = vunpack.c.l.b16 %v1340
        %v1456 = vunpack.c.l.b16 %v1341
        %v1457 = vunpack.c.h.b16 %v1341
        %v1458 = vunpack.c.l.b16 %v1342
        %v1459 = vunpack.c.l.b16 %v1343
        %v1460 = vunpack.c.h.b16 %v1343
        %v1461 = vunpack.c.l.b16 %v1344
        %v1462 = vunpack.c.l.b16 %v1345
        %v1463 = vunpack.c.h.b16 %v1345
        %v1464 = vunpack.c.l.b16 %v1346
        %v1465 = vunpack.c.l.b16 %v1347
        %v1466 = vunpack.c.h.b16 %v1347
        %v1467 = vunpack.c.l.b16 %v1348
        %v1468 = vunpack.c.l.b16 %v1349
        %v1469 = vunpack.c.h.b16 %v1349
        %v1470 = vunpack.c.l.b16 %v1350
        %v1471 = vunpack.c.l.b16 %v1351
        %v1472 = vunpack.c.h.b16 %v1351
        %v1473 = vunpack.c.l.b16 %v1352
        %v1474 = vunpack.c.l.b16 %v1353
        %v1475 = vunpack.c.h.b16 %v1353
        %v1476 = vunpack.c.l.b16 %v1354
        %v1477 = vunpack.c.l.b16 %v1355
        %v1478 = vunpack.c.h.b16 %v1355
        %v1479 = vunpack.c.l.b16 %v1356
        %v1480 = vunpack.c.l.b16 %v1357
        %v1481 = vunpack.c.h.b16 %v1357
        %v1482 = vunpack.c.l.b16 %v1358
        %v1483 = vunpack.c.l.b16 %v1359
        %v1484 = vunpack.c.h.b16 %v1359
        %v1485 = vunpack.c.l.b16 %v1360
        %v1486 = vunpack.c.l.b16 %v1361
        %v1487 = vunpack.c.h.b16 %v1361
        %v1488 = vunpack.c.l.b16 %v1362
        %v1489 = vunpack.c.l.b16 %v1363
        %v1490 = vunpack.c.h.b16 %v1363
        %v1491 = vunpack.c.l.b16 %v1364
        %v1492 = vunpack.c.l.b16 %v1365
        %v1493 = vunpack.c.h.b16 %v1365
        %v1494 = vunpack.c.l.b16 %v1366
        %v1495 = vunpack.c.l.b16 %v1367
        %v1496 = vunpack.c.h.b16 %v1367
        %v1497 = vunpack.c.l.b16 %v1368
        %v1498 = vpack.c.b16 %v1453, %v1450
        %v1499 = vpack.c.b16 %v1454, %v1451
        %v1500 = vpack.c.b16 %v1455, %v1452
        %v1501 = vpack.c.b16 %v1459, %v1456
        %v1502 = vpack.c.b16 %v1460, %v1457
        %v1503 = vpack.c.b16 %v1461, %v1458
        %v1504 = vpack.c.b16 %v1465, %v1462
        %v1505 = vpack.c.b16 %v1466, %v1463
        %v1506 = vpack.c.b16 %v1467, %v1464
        %v1507 = vpack.c.b16 %v1471, %v1468
        %v1508 = vpack.c.b16 %v1472, %v1469
        %v1509 = vpack.c.b16 %v1473, %v1470
        %v1510 = vpack.c.b16 %v1477, %v1474
        %v1511 = vpack.c.b16 %v1478, %v1475
        %v1512 = vpack.c.b16 %v1479, %v1476
        %v1513 = vpack.c.b16 %v1483, %v1480
        %v1514 = vpack.c.b16 %v1484, %v1481
        %v1515 = vpack.c.b16 %v1485, %v1482
        %v1516 = vpack.c.b16 %v1489, %v1486
        %v1517 = vpack.c.b16 %v1490, %v1487
        %v1518 = vpack.c.b16 %v1491, %v1488
        %v1519 = vpack.c.b16 %v1495, %v1492
        %v1520 = vpack.c.b16 %v1496, %v1493
        %v1521 = vpack.c.b16 %v1497, %v1494
        %v1594 = vunpack.c.l.b16 %v1370
        %v1595 = vunpack.c.l.b16 %v1371
        %v1596 = vunpack.c.l.b16 %v1372
        %v1597 = vunpack.c.l.b16 %v1373
        %v1598 = vunpack.c.l.b16 %v1374
        %v1599 = vunpack.c.l.b16 %v1375
        %v1600 = vunpack.c.l.b16 %v1376
        %v1601 = vunpack.c.l.b16 %v1377
        %v1602 = vunpack.c.l.b16 %v1378
        %v1603 = vunpack.c.l.b16 %v1379
        %v1604 = vunpack.c.l.b16 %v1380
        %v1605 = vunpack.c.l.b16 %v1381
        %v1606 = vunpack.c.l.b16 %v1382
        %v1607 = vunpack.c.l.b16 %v1383
        %v1608 = vunpack.c.l.b16 %v1384
        %v1609 = vunpack.c.l.b16 %v1385
        %v1610 = vunpack.c.l.b16 %v1386
        %v1611 = vunpack.c.l.b16 %v1387
        %v1612 = vunpack.c.l.b16 %v1388
        %v1613 = vunpack.c.l.b16 %v1389
        %v1614 = vunpack.c.l.b16 %v1390
        %v1615 = vunpack.c.l.b16 %v1391
        %v1616 = vunpack.c.l.b16 %v1392
        %v1617 = vunpack.c.l.b16 %v1393
        %v1618 = vunpack.c.l.b16 %v1394
        %v1619 = vunpack.c.l.b16 %v1395
        %v1620 = vunpack.c.l.b16 %v1396
        %v1621 = vunpack.c.l.b16 %v1397
        %v1622 = vunpack.c.l.b16 %v1398
        %v1623 = vunpack.c.l.b16 %v1399
        %v1624 = vunpack.c.l.b16 %v1400
        %v1625 = vunpack.c.l.b16 %v1401
        %v1626 = vunpack.c.l.b16 %v1402
        %v1627 = vunpack.c.l.b16 %v1403
        %v1628 = vunpack.c.l.b16 %v1404
        %v1629 = vunpack.c.l.b16 %v1405
        %v1630 = vunpack.c.l.b16 %v1406
        %v1631 = vunpack.c.l.b16 %v1407
        %v1632 = vunpack.c.l.b16 %v1408
        %v1633 = vunpack.c.l.b16 %v1409
        %v1634 = vunpack.c.l.b16 %v1410
        %v1635 = vunpack.c.l.b16 %v1411
        %v1636 = vunpack.c.l.b16 %v1412
        %v1637 = vunpack.c.l.b16 %v1413
        %v1638 = vunpack.c.l.b16 %v1414
        %v1639 = vunpack.c.l.b16 %v1415
        %v1640 = vunpack.c.l.b16 %v1416
        %v1641 = vunpack.c.l.b16 %v1417
        %v1642 = vpack.c.b16 %v1595, %v1594
        %v1643 = vpack.c.b16 %v1597, %v1596
        %v1644 = vpack.c.b16 %v1599, %v1598
        %v1645 = vpack.c.b16 %v1601, %v1600
        %v1646 = vpack.c.b16 %v1603, %v1602
        %v1647 = vpack.c.b16 %v1605, %v1604
        %v1648 = vpack.c.b16 %v1607, %v1606
        %v1649 = vpack.c.b16 %v1609, %v1608
        %v1650 = vpack.c.b16 %v1611, %v1610
        %v1651 = vpack.c.b16 %v1613, %v1612
        %v1652 = vpack.c.b16 %v1615, %v1614
        %v1653 = vpack.c.b16 %v1617, %v1616
        %v1654 = vpack.c.b16 %v1619, %v1618
        %v1655 = vpack.c.b16 %v1621, %v1620
        %v1656 = vpack.c.b16 %v1623, %v1622
        %v1657 = vpack.c.b16 %v1625, %v1624
        %v1658 = vpack.c.b16 %v1627, %v1626
        %v1659 = vpack.c.b16 %v1629, %v1628
        %v1660 = vpack.c.b16 %v1631, %v1630
        %v1661 = vpack.c.b16 %v1633, %v1632
        %v1662 = vpack.c.b16 %v1635, %v1634
        %v1663 = vpack.c.b16 %v1637, %v1636
        %v1664 = vpack.c.b16 %v1639, %v1638
        %v1665 = vpack.c.b16 %v1641, %v1640
        %1690 = vmatprep.subr.bf16.mxu0 0
        %1691 = vmatpush1.bf16.msra.mxu0 %v1642
        %1692 = vmatprep.subr.bf16.mxu0 0
        %1693 = vmatpush1.bf16.msra.mxu0 %v1643
        %1694 = vmatprep.subr.bf16.mxu0 0
        %1695 = vmatpush1.bf16.msra.mxu0 %v1644
        %1696 = vmatprep.subr.bf16.mxu0 0
        %1697 = vmatpush1.bf16.msra.mxu0 %v1645
        %1698 = vmatprep.subr.bf16.mxu0 0
        %1699 = vmatpush1.bf16.msra.mxu0 %v1646
        %1700 = vmatprep.subr.bf16.mxu0 0
        %1701 = vmatpush1.bf16.msra.mxu0 %v1647
        %1702 = vmatprep.subr.bf16.mxu0 0
        %1703 = vmatpush1.bf16.msra.mxu0 %v1648
        %1704 = vmatprep.subr.bf16.mxu0 0
        %1705 = vmatpush1.bf16.msra.mxu0 %v1649
        %1706 = vmatprep.subr.bf16.mxu0 0
        %1707 = vmatpush1.bf16.msra.mxu0 %v1650
        %1708 = vmatprep.subr.bf16.mxu0 0
        %1709 = vmatpush1.bf16.msra.mxu0 %v1651
        %1710 = vmatprep.subr.bf16.mxu0 0
        %1711 = vmatpush1.bf16.msra.mxu0 %v1652
        %1712 = vmatprep.subr.bf16.mxu0 0
        %1713 = vmatpush1.bf16.msra.mxu0 %v1653
        %1714 = vmatprep.subr.bf16.mxu0 0
        %1715 = vmatpush1.bf16.msra.mxu0 %v1654
        %1716 = vmatprep.subr.bf16.mxu0 0
        %1717 = vmatpush1.bf16.msra.mxu0 %v1655
        %1718 = vmatprep.subr.bf16.mxu0 0
        %1719 = vmatpush1.bf16.msra.mxu0 %v1656
        %1720 = vmatprep.subr.bf16.mxu0 0
        %1721 = vmatpush1.bf16.msra.mxu0 %v1657
        %1722 = vmatprep.mubr.bf16.mxu0 %v1499
        %1723 = vmatmul.mubr.bf16.gmra.mrb[0].mxu0 %v1498
        %v1724 = vpop.f32.mrb[0].mxu0
        %v1725 = vadd.f32 0.0, %v1724
        %v1726 = vpop.f32.mrb[0].mxu0
        %v1727 = vpop.f32.mrb[0].mxu0
        %v1728 = vadd.f32 0.0, %v1727
        %v1729 = vpop.f32.mrb[0].mxu0
        %1730 = vmatprep.mubr.bf16.mxu0 %v1502
        %1731 = vmatmul.mubr.bf16.gmra.mrb[0].mxu0 %v1501
        %v1732 = vpop.f32.mrb[0].mxu0
        %v1733 = vadd.f32 0.0, %v1732
        %v1734 = vpop.f32.mrb[0].mxu0
        %v1735 = vpop.f32.mrb[0].mxu0
        %v1736 = vadd.f32 0.0, %v1735
        %v1737 = vpop.f32.mrb[0].mxu0
        %1738 = vmatprep.mubr.bf16.mxu0 %v1505
        %1739 = vmatmul.mubr.bf16.gmra.mrb[0].mxu0 %v1504
        %v1740 = vpop.f32.mrb[0].mxu0
        %v1741 = vadd.f32 0.0, %v1740
        %v1742 = vpop.f32.mrb[0].mxu0
        %v1743 = vpop.f32.mrb[0].mxu0
        %v1744 = vadd.f32 0.0, %v1743
        %v1745 = vpop.f32.mrb[0].mxu0
        %1746 = vmatprep.mubr.bf16.mxu0 %v1508
        %1747 = vmatmul.mubr.bf16.gmra.mrb[0].mxu0 %v1507
        %v1748 = vpop.f32.mrb[0].mxu0
        %v1749 = vadd.f32 0.0, %v1748
        %v1750 = vpop.f32.mrb[0].mxu0
        %v1751 = vpop.f32.mrb[0].mxu0
        %v1752 = vadd.f32 0.0, %v1751
        %v1753 = vpop.f32.mrb[0].mxu0
        %1754 = vmatprep.mubr.bf16.mxu0 %v1511
        %1755 = vmatmul.mubr.bf16.gmra.mrb[0].mxu0 %v1510
        %v1756 = vpop.f32.mrb[0].mxu0
        %v1757 = vadd.f32 0.0, %v1756
        %v1758 = vpop.f32.mrb[0].mxu0
        %v1759 = vpop.f32.mrb[0].mxu0
        %v1760 = vadd.f32 0.0, %v1759
        %v1761 = vpop.f32.mrb[0].mxu0
        %1762 = vmatprep.mubr.bf16.mxu0 %v1514
        %1763 = vmatmul.mubr.bf16.gmra.mrb[0].mxu0 %v1513
        %v1764 = vpop.f32.mrb[0].mxu0
        %v1765 = vadd.f32 0.0, %v1764
        %v1766 = vpop.f32.mrb[0].mxu0
        %v1767 = vpop.f32.mrb[0].mxu0
        %v1768 = vadd.f32 0.0, %v1767
        %v1769 = vpop.f32.mrb[0].mxu0
        %1770 = vmatprep.mubr.bf16.mxu0 %v1517
        %1771 = vmatmul.mubr.bf16.gmra.mrb[0].mxu0 %v1516
        %v1772 = vpop.f32.mrb[0].mxu0
        %v1773 = vadd.f32 0.0, %v1772
        %v1774 = vpop.f32.mrb[0].mxu0
        %v1775 = vpop.f32.mrb[0].mxu0
        %v1776 = vadd.f32 0.0, %v1775
        %v1777 = vpop.f32.mrb[0].mxu0
        %1778 = vmatprep.mubr.bf16.mxu0 %v1520
        %1779 = vmatmul.mubr.bf16.gmra.mrb[0].mxu0 %v1519
        %v1780 = vpop.f32.mrb[0].mxu0
        %v1781 = vadd.f32 0.0, %v1780
        %v1782 = vpop.f32.mrb[0].mxu0
        %v1783 = vpop.f32.mrb[0].mxu0
        %v1784 = vadd.f32 0.0, %v1783
        %v1785 = vpop.f32.mrb[0].mxu0
        %1786 = vdwg.mxu0
        %1787 = vmatprep.subr.bf16.mxu0 0
        %1788 = vmatpush1.bf16.msra.mxu0 %v1658
        %1789 = vmatprep.subr.bf16.mxu0 0
        %1790 = vmatpush1.bf16.msra.mxu0 %v1659
        %1791 = vmatprep.subr.bf16.mxu0 0
        %1792 = vmatpush1.bf16.msra.mxu0 %v1660
        %1793 = vmatprep.subr.bf16.mxu0 0
        %1794 = vmatpush1.bf16.msra.mxu0 %v1661
        %1795 = vmatprep.subr.bf16.mxu0 0
        %1796 = vmatpush1.bf16.msra.mxu0 %v1662
        %1797 = vmatprep.subr.bf16.mxu0 0
        %1798 = vmatpush1.bf16.msra.mxu0 %v1663
        %1799 = vmatprep.subr.bf16.mxu0 0
        %1800 = vmatpush1.bf16.msra.mxu0 %v1664
        %1801 = vmatprep.subr.bf16.mxu0 0
        %1802 = vmatpush1.bf16.msra.mxu0 %v1665
        %1803 = vmatprep.subr.bf16.mxu0 0
        %1804 = vmatpush1.bf16.msra.mxu0 0
        %1805 = vmatprep.subr.bf16.mxu0 0
        %1806 = vmatpush1.bf16.msra.mxu0 0
        %1807 = vmatprep.subr.bf16.mxu0 0
        %1808 = vmatpush1.bf16.msra.mxu0 0
        %1809 = vmatprep.subr.bf16.mxu0 0
        %1810 = vmatpush1.bf16.msra.mxu0 0
        %1811 = vmatprep.subr.bf16.mxu0 0
        %1812 = vmatpush1.bf16.msra.mxu0 0
        %1813 = vmatprep.subr.bf16.mxu0 0
        %1814 = vmatpush1.bf16.msra.mxu0 0
        %1815 = vmatprep.subr.bf16.mxu0 0
        %1816 = vmatpush1.bf16.msra.mxu0 0
        %1817 = vmatprep.subr.bf16.mxu0 0
        %1818 = vmatpush1.bf16.msra.mxu0 0
        %1819 = vmatprep.mubr.bf16.mxu0 0
        %1820 = vmatmul.mubr.bf16.gmra.mrb[0].mxu0 %v1500
        %v1821 = vpop.f32.mrb[0].mxu0
        %v1822 = vadd.f32 %v1725, %v1821
        %v1823 = vpop.f32.mrb[0].mxu0
        %v1824 = vpop.f32.mrb[0].mxu0
        %v1825 = vadd.f32 %v1728, %v1824
        %v1826 = vpop.f32.mrb[0].mxu0
        %1827 = vmatprep.mubr.bf16.mxu0 0
        %1828 = vmatmul.mubr.bf16.gmra.mrb[0].mxu0 %v1503
        %v1829 = vpop.f32.mrb[0].mxu0
        %v1830 = vadd.f32 %v1733, %v1829
        %v1831 = vpop.f32.mrb[0].mxu0
        %v1832 = vpop.f32.mrb[0].mxu0
        %v1833 = vadd.f32 %v1736, %v1832
        %v1834 = vpop.f32.mrb[0].mxu0
        %1835 = vmatprep.mubr.bf16.mxu0 0
        %1836 = vmatmul.mubr.bf16.gmra.mrb[0].mxu0 %v1506
        %v1837 = vpop.f32.mrb[0].mxu0
        %v1838 = vadd.f32 %v1741, %v1837
        %v1839 = vpop.f32.mrb[0].mxu0
        %v1840 = vpop.f32.mrb[0].mxu0
        %v1841 = vadd.f32 %v1744, %v1840
        %v1842 = vpop.f32.mrb[0].mxu0
        %1843 = vmatprep.mubr.bf16.mxu0 0
        %1844 = vmatmul.mubr.bf16.gmra.mrb[0].mxu0 %v1509
        %v1845 = vpop.f32.mrb[0].mxu0
        %v1846 = vadd.f32 %v1749, %v1845
        %v1847 = vpop.f32.mrb[0].mxu0
        %v1848 = vpop.f32.mrb[0].mxu0
        %v1849 = vadd.f32 %v1752, %v1848
        %v1850 = vpop.f32.mrb[0].mxu0
        %1851 = vmatprep.mubr.bf16.mxu0 0
        %1852 = vmatmul.mubr.bf16.gmra.mrb[0].mxu0 %v1512
        %v1853 = vpop.f32.mrb[0].mxu0
        %v1854 = vadd.f32 %v1757, %v1853
        %v1855 = vpop.f32.mrb[0].mxu0
        %v1856 = vpop.f32.mrb[0].mxu0
        %v1857 = vadd.f32 %v1760, %v1856
        %v1858 = vpop.f32.mrb[0].mxu0
        %1859 = vmatprep.mubr.bf16.mxu0 0
        %1860 = vmatmul.mubr.bf16.gmra.mrb[0].mxu0 %v1515
        %v1861 = vpop.f32.mrb[0].mxu0
        %v1862 = vadd.f32 %v1765, %v1861
        %v1863 = vpop.f32.mrb[0].mxu0
        %v1864 = vpop.f32.mrb[0].mxu0
        %v1865 = vadd.f32 %v1768, %v1864
        %v1866 = vpop.f32.mrb[0].mxu0
        %1867 = vmatprep.mubr.bf16.mxu0 0
        %1868 = vmatmul.mubr.bf16.gmra.mrb[0].mxu0 %v1518
        %v1869 = vpop.f32.mrb[0].mxu0
        %v1870 = vadd.f32 %v1773, %v1869
        %v1871 = vpop.f32.mrb[0].mxu0
        %v1872 = vpop.f32.mrb[0].mxu0
        %v1873 = vadd.f32 %v1776, %v1872
        %v1874 = vpop.f32.mrb[0].mxu0
        %1875 = vmatprep.mubr.bf16.mxu0 0
        %1876 = vmatmul.mubr.bf16.gmra.mrb[0].mxu0 %v1521
        %v1877 = vpop.f32.mrb[0].mxu0
        %v1878 = vadd.f32 %v1781, %v1877
        %v1879 = vpop.f32.mrb[0].mxu0
        %v1880 = vpop.f32.mrb[0].mxu0
        %v1881 = vadd.f32 %v1784, %v1880
        %v1882 = vpop.f32.mrb[0].mxu0
        %1883 = vdwg.mxu0
        %v1884 = vadd.f32 %v1271, %v1822
        %v1885 = vadd.f32 %v1274, %v1825
        %v1886 = vadd.f32 %v1279, %v1830
        %v1887 = vadd.f32 %v1282, %v1833
        %v1888 = vadd.f32 %v1287, %v1838
        %v1889 = vadd.f32 %v1290, %v1841
        %v1890 = vadd.f32 %v1295, %v1846
        %v1891 = vadd.f32 %v1298, %v1849
        %v1892 = vadd.f32 %v1303, %v1854
        %v1893 = vadd.f32 %v1306, %v1857
        %v1894 = vadd.f32 %v1311, %v1862
        %v1895 = vadd.f32 %v1314, %v1865
        %v1896 = vadd.f32 %v1319, %v1870
        %v1897 = vadd.f32 %v1322, %v1873
        %v1898 = vadd.f32 %v1327, %v1878
        %v1899 = vadd.f32 %v1330, %v1881
        %v1900 = vld [vmem:[#allocation7] sm:$0x1]
        %v1902 = vlaneseq
        %v1903 = vshrl.u32 %v1902, 7
        %v1904 = vsub.s32 0, %v1903
        %v1905 = vrot.slane %v1900, %v1904
        %v1907 = vadd.f32 %v1884, %v1905
        %v1908 = vadd.f32 %v1885, %v1905
        %v1909 = vadd.f32 %v1886, %v1905
        %v1910 = vadd.f32 %v1887, %v1905
        %v1911 = vadd.f32 %v1888, %v1905
        %v1912 = vadd.f32 %v1889, %v1905
        %v1913 = vadd.f32 %v1890, %v1905
        %v1914 = vadd.f32 %v1891, %v1905
        %v1915 = vadd.f32 %v1892, %v1905
        %v1916 = vadd.f32 %v1893, %v1905
        %v1917 = vadd.f32 %v1894, %v1905
        %v1918 = vadd.f32 %v1895, %v1905
        %v1919 = vadd.f32 %v1896, %v1905
        %v1920 = vadd.f32 %v1897, %v1905
        %v1921 = vadd.f32 %v1898, %v1905
        %v1922 = vadd.f32 %v1899, %v1905
        %v1923 = vmul.f32 %v1907, 0.1
        %v1924 = vmul.f32 %v1908, 0.1
        %v1925 = vmul.f32 %v1909, 0.1
        %v1926 = vmul.f32 %v1910, 0.1
        %v1927 = vmul.f32 %v1911, 0.1
        %v1928 = vmul.f32 %v1912, 0.1
        %v1929 = vmul.f32 %v1913, 0.1
        %v1930 = vmul.f32 %v1914, 0.1
        %v1931 = vmul.f32 %v1915, 0.1
        %v1932 = vmul.f32 %v1916, 0.1
        %v1933 = vmul.f32 %v1917, 0.1
        %v1934 = vmul.f32 %v1918, 0.1
        %v1935 = vmul.f32 %v1919, 0.1
        %v1936 = vmul.f32 %v1920, 0.1
        %v1937 = vmul.f32 %v1921, 0.1
        %v1938 = vmul.f32 %v1922, 0.1
        %v1939 = vmax.f32 %v1907, %v1923
        %v1940 = vmax.f32 %v1908, %v1924
        %v1941 = vmax.f32 %v1909, %v1925
        %v1942 = vmax.f32 %v1910, %v1926
        %v1943 = vmax.f32 %v1911, %v1927
        %v1944 = vmax.f32 %v1912, %v1928
        %v1945 = vmax.f32 %v1913, %v1929
        %v1946 = vmax.f32 %v1914, %v1930
        %v1947 = vmax.f32 %v1915, %v1931
        %v1948 = vmax.f32 %v1916, %v1932
        %v1949 = vmax.f32 %v1917, %v1933
        %v1950 = vmax.f32 %v1918, %v1934
        %v1951 = vmax.f32 %v1919, %v1935
        %v1952 = vmax.f32 %v1920, %v1936
        %v1953 = vmax.f32 %v1921, %v1937
        %v1954 = vmax.f32 %v1922, %v1938
        %v1955 = vpack.c.bf16 %v1940, %v1939
        %v1956 = vpack.c.bf16 %v1942, %v1941
        %v1957 = vpack.c.bf16 %v1944, %v1943
        %v1958 = vpack.c.bf16 %v1946, %v1945
        %v1959 = vpack.c.bf16 %v1948, %v1947
        %v1960 = vpack.c.bf16 %v1950, %v1949
        %v1961 = vpack.c.bf16 %v1952, %v1951
        %v1962 = vpack.c.bf16 %v1954, %v1953
        %v1971 = vunpack.c.l.b16 %v1955
        %v1972 = vunpack.c.h.b16 %v1955
        %v1973 = vunpack.c.l.b16 %v1956
        %v1974 = vunpack.c.h.b16 %v1956
        %v1975 = vunpack.c.l.b16 %v1957
        %v1976 = vunpack.c.h.b16 %v1957
        %v1977 = vunpack.c.l.b16 %v1958
        %v1978 = vunpack.c.h.b16 %v1958
        %v1979 = vunpack.c.l.b16 %v1959
        %v1980 = vunpack.c.h.b16 %v1959
        %v1981 = vunpack.c.l.b16 %v1960
        %v1982 = vunpack.c.h.b16 %v1960
        %v1983 = vunpack.c.l.b16 %v1961
        %v1984 = vunpack.c.h.b16 %v1961
        %v1985 = vunpack.c.l.b16 %v1962
        %v1986 = vunpack.c.h.b16 %v1962
        %v1987 = vpack.c.b16 %v1971, %v1971
        %v1988 = vpack.c.b16 %v1972, %v1972
        %v1989 = vpack.c.b16 %v1973, %v1973
        %v1990 = vpack.c.b16 %v1974, %v1974
        %v1991 = vpack.c.b16 %v1975, %v1975
        %v1992 = vpack.c.b16 %v1976, %v1976
        %v1993 = vpack.c.b16 %v1977, %v1977
        %v1994 = vpack.c.b16 %v1978, %v1978
        %v1995 = vpack.c.b16 %v1979, %v1979
        %v1996 = vpack.c.b16 %v1980, %v1980
        %v1997 = vpack.c.b16 %v1981, %v1981
        %v1998 = vpack.c.b16 %v1982, %v1982
        %v1999 = vpack.c.b16 %v1983, %v1983
        %v2000 = vpack.c.b16 %v1984, %v1984
        %v2001 = vpack.c.b16 %v1985, %v1985
        %v2002 = vpack.c.b16 %v1986, %v1986
        %2019 = vst [vmem:[%s229] sm:$0xf] %v1987
        %2020 = vst [vmem:[%s229 + $0x4] sm:$0xf] %v1988
        %2021 = vst [vmem:[%s229 + $0x8] sm:$0xf] %v1989
        %2022 = vst [vmem:[%s229 + $0xc] sm:$0xf] %v1990
        %2023 = vst [vmem:[%s229 + $0x10] sm:$0xf] %v1991
        %2024 = vst [vmem:[%s229 + $0x14] sm:$0xf] %v1992
        %2025 = vst [vmem:[%s229 + $0x18] sm:$0xf] %v1993
        %2026 = vst [vmem:[%s229 + $0x1c] sm:$0xf] %v1994
        %2027 = vst [vmem:[%s229 + $0x20] sm:$0xf] %v1995
        %2028 = vst [vmem:[%s229 + $0x24] sm:$0xf] %v1996
        %2029 = vst [vmem:[%s229 + $0x28] sm:$0xf] %v1997
        %2030 = vst [vmem:[%s229 + $0x2c] sm:$0xf] %v1998
        %2031 = vst [vmem:[%s229 + $0x30] sm:$0xf] %v1999
        %2032 = vst [vmem:[%s229 + $0x34] sm:$0xf] %v2000
        %2033 = vst [vmem:[%s229 + $0x38] sm:$0xf] %v2001
        %2034 = vst [vmem:[%s229 + $0x3c] sm:$0xf] %v2002
        %s2035 = sand.u32 %s111, 1
        %s2036 = scalar_lea.sflag [#allocation4], %s2035
        %s2037 = sand.u32 %s111, 1
        %s2038 = smul.addr %s2037, 64
        %s2039 = scalar_lea.vmem [#allocation8], %s2038
        // Predicated region
        $region45: #{yolo_block_forward.8} parent=31 // pred_check
          %p2040 = pneg %p121
        $region46: #{yolo_block_forward.8} parent=31 // pred_check_branch
          %2042 = sbr.rel (%p2040) target = $region48
        $region47: #{yolo_block_forward.8} parent=31 // pred_region
          %s2043 = smul.u32 8, %s26
          %s2045 = ssub.s32 1024, 1024
          %2046 = vsyncadd %s2036, %s2045
          %s2047 = smul.addr %s2043, 2
          %s2048 = smul.addr %s25, 32
          %s2049 = sadd.s32 %s2047, %s2048
          %s2050 = smul.addr %s2049, 64
          %s2051 = scalar_lea.hbm %s3, %s2050
          %s2052 = sshll.u32 %s2039, 4
          %s2053 = int_to_ptr.vmem [resolvable:$true] %s2052
          %2058 = dma.vmem_to_hbm [thread:$0]  %s2053, 1024, %s2051, %s2036, 64, 64, 4
        $region48: #{yolo_block_forward.8} parent=31 // pred_fallthru
          _
      $region32: #{yolo_block_forward.8} parent=5 // pred_fallthru
        _
      %p2059 = scmp.le.s32.totalorder 2, %s16
      // Predicated region
      $region49: #{yolo_block_forward.8} parent=5 // pred_check
        %p2060 = pneg %p2059
      $region50: #{yolo_block_forward.8} parent=5 // pred_check_branch
        %2062 = sbr.rel (%p2060) target = $region52
      $region51: #{yolo_block_forward.8} parent=5 // pred_region
        %s2063 = ssub.s32 %s16, 2
        // Predicated region
        $region53: #{yolo_block_forward.8} parent=51 // pred_check
          %p2064 = pneg %p127
        $region54: #{yolo_block_forward.8} parent=51 // pred_check_branch
          %2066 = sbr.rel (%p2064) target = $region56
        $region55: #{yolo_block_forward.8} parent=51 // pred_region
          %s2067 = sand.u32 %s112, 1
          %s2068 = scalar_lea.sflag [#allocation4], %s2067
          %s2069 = sand.u32 %s112, 1
          %s2070 = smul.addr %s2069, 64
          %s2071 = scalar_lea.vmem [#allocation8], %s2070
          %2072 = dma.done %s2068, 1024
        $region56: #{yolo_block_forward.8} parent=51 // pred_fallthru
          _
      $region52: #{yolo_block_forward.8} parent=5 // pred_fallthru
        _
    $region6: #{yolo_block_forward.8} parent=1 // loop_footer
      %s20 = sadd.s32 1, %s16
    $region7: #{yolo_block_forward.8} parent=1 // loop_footer_branch
      %15 = sbr.rel target = $region3
    $region8: #{yolo_block_forward.8} parent=1 // loop_exit
      _
    %2073 = vsyncpa [#allocation3], 1
    %s2074 = scalar_lea.sflag [#allocation3], 1
    %2075 = vsyncpa %s2074, 1
    %2076 = vsyncpa [#allocation6], 1
    %2077 = vsyncpa [#allocation4], 1
    %s2078 = scalar_lea.sflag [#allocation4], 1
    %2079 = vsyncpa %s2078, 1

// kernel: yolo_block_forward.13
$region0: #{yolo_block_forward.13}
  #allocation0 [shape = 'u32[]', space=smem, size = 0x4, offset = 0x4, fixed_abs, tag = 'smem constant byte address 0x4 - core index']
  #allocation1 [shape = 'u32[144,128]{1,0:T(1,128)}', space=vmem, size = 0x12000, scoped, tag = 'internal scratch']
  %s0 = inlined_call_operand.hbm [shape: bf16[512,128], index: 0, kind: input, shape index: {}]
  %s1 = inlined_call_operand.hbm [shape: bf16[128,128], index: 1, kind: input, shape index: {}]
  %s2 = inlined_call_operand.hbm [shape: f32[1,128], index: 2, kind: input, shape index: {}]
  %s3 = inlined_call_operand.hbm [shape: bf16[512,128], index: 3, kind: output, shape index: {}]
  %s4 = sld [smem:[#allocation0]]
  $region34: #{yolo_block_forward.13} parent=0
    _
  %s6 = ssub.s32 1, %s4
  %s7 = scalar_select 0, %s6, %s4
  $region1: #{yolo_block_forward.13} parent=0
    #allocation2 [shape = 'u8[131072]{0}', space=vmem, size = 0x20000, scoped, tag = 'input window, operand 0, single buffered']
    #allocation3 [shape = 's32[1]{0}', space=sflag, size = 0x4, scoped, tag = 'scoped memory for yolo_block_forward.13']
    #allocation4 [shape = 's32[1]{0}', space=sflag, size = 0x4, scoped, tag = 'scoped memory for yolo_block_forward.13']
    #allocation5 [shape = 'u8[32768]{0}', space=vmem, size = 0x8000, scoped, tag = 'input window, operand 1, single buffered']
    #allocation6 [shape = 's32[1]{0}', space=sflag, size = 0x4, scoped, tag = 'scoped memory for yolo_block_forward.13']
    #allocation7 [shape = 'u8[512]{0}', space=vmem, size = 0x400, scoped, tag = 'input window, operand 2, single buffered']
    #allocation8 [shape = 'u8[131072]{0}', space=vmem, size = 0x20000, scoped, tag = 'output window, operand 0, single buffered']
    %8 = vsyncpa [#allocation3], 0
    %9 = vsyncpa [#allocation6], 0
    %10 = vsyncpa [#allocation4], 0
    // Predicated region
    $region2: #{yolo_block_forward.13} parent=1 // pred_check
      _
    $region3: #{yolo_block_forward.13} parent=1 // pred_check_branch
      %12 = sbr.rel (0) target = $region5
    $region4: #{yolo_block_forward.13} parent=1 // pred_region
      %s14 = ssub.s32 4096, 4096
      %15 = vsyncadd [#allocation3], %s14
      %s16 = sshll.u32 [#allocation2], 4
      %s17 = int_to_ptr.vmem [resolvable:$true] %s16
      %22 = dma.hbm_to_vmem [thread:$0]  %s0, 4096, %s17, [#allocation3], 64, 64, 4
    $region5: #{yolo_block_forward.13} parent=1 // pred_fallthru
      _
    // Predicated region
    $region6: #{yolo_block_forward.13} parent=1 // pred_check
      _
    $region7: #{yolo_block_forward.13} parent=1 // pred_check_branch
      %24 = sbr.rel (0) target = $region9
    $region8: #{yolo_block_forward.13} parent=1 // pred_region
      %s26 = ssub.s32 1024, 1024
      %27 = vsyncadd [#allocation6], %s26
      %s28 = sshll.u32 [#allocation5], 4
      %s29 = int_to_ptr.vmem [resolvable:$true] %s28
      %34 = dma.hbm_to_vmem [thread:$0]  %s1, 1024, %s29, [#allocation6], 64, 64, 4
    $region9: #{yolo_block_forward.13} parent=1 // pred_fallthru
      _
    // Predicated region
    $region10: #{yolo_block_forward.13} parent=1 // pred_check
      _
    $region11: #{yolo_block_forward.13} parent=1 // pred_check_branch
      %36 = sbr.rel (0) target = $region13
    $region12: #{yolo_block_forward.13} parent=1 // pred_region
      %s38 = ssub.s32 16, 16
      %39 = vsyncadd [#allocation6], %s38
      %s41 = sshll.u32 [#allocation7], 4
      %s42 = int_to_ptr.vmem [resolvable:$true] %s41
      %44 = dma.hbm_to_vmem [thread:$0]  %s2, 16, %s42, [#allocation6]
    $region13: #{yolo_block_forward.13} parent=1 // pred_fallthru
      _
    // Predicated region
    $region14: #{yolo_block_forward.13} parent=1 // pred_check
      _
    $region15: #{yolo_block_forward.13} parent=1 // pred_check_branch
      %46 = sbr.rel (0) target = $region17
    $region16: #{yolo_block_forward.13} parent=1 // pred_region
      %47 = dma.done [#allocation3], 4096
    $region17: #{yolo_block_forward.13} parent=1 // pred_fallthru
      _
    // Predicated region
    $region18: #{yolo_block_forward.13} parent=1 // pred_check
      _
    $region19: #{yolo_block_forward.13} parent=1 // pred_check_branch
      %49 = sbr.rel (0) target = $region21
    $region20: #{yolo_block_forward.13} parent=1 // pred_region
      %50 = dma.done [#allocation6], 1024
    $region21: #{yolo_block_forward.13} parent=1 // pred_fallthru
      _
    // Predicated region
    $region22: #{yolo_block_forward.13} parent=1 // pred_check
      _
    $region23: #{yolo_block_forward.13} parent=1 // pred_check_branch
      %52 = sbr.rel (0) target = $region25
    $region24: #{yolo_block_forward.13} parent=1 // pred_region
      %53 = dma.done [#allocation6], 16
    $region25: #{yolo_block_forward.13} parent=1 // pred_fallthru
      _
    %v55 = vld [vmem:[#allocation2] sm:$0xf]
    %v56 = vld [vmem:[#allocation2 + $0x4] sm:$0xf]
    %v57 = vld [vmem:[#allocation2 + $0x8] sm:$0xf]
    %v58 = vld [vmem:[#allocation2 + $0xc] sm:$0xf]
    %v59 = vld [vmem:[#allocation2 + $0x10] sm:$0xf]
    %v60 = vld [vmem:[#allocation2 + $0x14] sm:$0xf]
    %v61 = vld [vmem:[#allocation2 + $0x18] sm:$0xf]
    %v62 = vld [vmem:[#allocation2 + $0x1c] sm:$0xf]
    %v63 = vld [vmem:[#allocation2 + $0x20] sm:$0xf]
    %v64 = vld [vmem:[#allocation2 + $0x24] sm:$0xf]
    %v65 = vld [vmem:[#allocation2 + $0x28] sm:$0xf]
    %v66 = vld [vmem:[#allocation2 + $0x2c] sm:$0xf]
    %v67 = vld [vmem:[#allocation2 + $0x30] sm:$0xf]
    %v68 = vld [vmem:[#allocation2 + $0x34] sm:$0xf]
    %v69 = vld [vmem:[#allocation2 + $0x38] sm:$0xf]
    %v70 = vld [vmem:[#allocation2 + $0x3c] sm:$0xf]
    %v71 = vld [vmem:[#allocation2 + $0x40] sm:$0xf]
    %v72 = vld [vmem:[#allocation2 + $0x44] sm:$0xf]
    %v73 = vld [vmem:[#allocation2 + $0x48] sm:$0xf]
    %v74 = vld [vmem:[#allocation2 + $0x4c] sm:$0xf]
    %v75 = vld [vmem:[#allocation2 + $0x50] sm:$0xf]
    %v76 = vld [vmem:[#allocation2 + $0x54] sm:$0xf]
    %v77 = vld [vmem:[#allocation2 + $0x58] sm:$0xf]
    %v78 = vld [vmem:[#allocation2 + $0x5c] sm:$0xf]
    %v79 = vld [vmem:[#allocation2 + $0x60] sm:$0xf]
    %v80 = vld [vmem:[#allocation2 + $0x64] sm:$0xf]
    %v81 = vld [vmem:[#allocation2 + $0x68] sm:$0xf]
    %v82 = vld [vmem:[#allocation2 + $0x6c] sm:$0xf]
    %v83 = vld [vmem:[#allocation2 + $0x70] sm:$0xf]
    %v84 = vld [vmem:[#allocation2 + $0x74] sm:$0xf]
    %v85 = vld [vmem:[#allocation2 + $0x78] sm:$0xf]
    %v86 = vld [vmem:[#allocation2 + $0x7c] sm:$0xf]
    %v87 = vld [vmem:[#allocation2 + $0x80] sm:$0xf]
    %v88 = vld [vmem:[#allocation2 + $0x84] sm:$0xf]
    %v89 = vld [vmem:[#allocation2 + $0x88] sm:$0xf]
    %v90 = vld [vmem:[#allocation2 + $0x8c] sm:$0xf]
    %v91 = vld [vmem:[#allocation2 + $0x90] sm:$0xf]
    %v92 = vld [vmem:[#allocation2 + $0x94] sm:$0xf]
    %v93 = vld [vmem:[#allocation2 + $0x98] sm:$0xf]
    %v94 = vld [vmem:[#allocation2 + $0x9c] sm:$0xf]
    %v95 = vld [vmem:[#allocation2 + $0xa0] sm:$0xf]
    %v96 = vld [vmem:[#allocation2 + $0xa4] sm:$0xf]
    %v97 = vld [vmem:[#allocation2 + $0xa8] sm:$0xf]
    %v98 = vld [vmem:[#allocation2 + $0xac] sm:$0xf]
    %v99 = vld [vmem:[#allocation2 + $0xb0] sm:$0xf]
    %v100 = vld [vmem:[#allocation2 + $0xb4] sm:$0xf]
    %v101 = vld [vmem:[#allocation2 + $0xb8] sm:$0xf]
    %v102 = vld [vmem:[#allocation2 + $0xbc] sm:$0xf]
    %v103 = vld [vmem:[#allocation2 + $0xc0] sm:$0xf]
    %v104 = vld [vmem:[#allocation2 + $0xc4] sm:$0xf]
    %v105 = vld [vmem:[#allocation2 + $0xc8] sm:$0xf]
    %v106 = vld [vmem:[#allocation2 + $0xcc] sm:$0xf]
    %v107 = vld [vmem:[#allocation2 + $0xd0] sm:$0xf]
    %v108 = vld [vmem:[#allocation2 + $0xd4] sm:$0xf]
    %v109 = vld [vmem:[#allocation2 + $0xd8] sm:$0xf]
    %v110 = vld [vmem:[#allocation2 + $0xdc] sm:$0xf]
    %v111 = vld [vmem:[#allocation2 + $0xe0] sm:$0xf]
    %v112 = vld [vmem:[#allocation2 + $0xe4] sm:$0xf]
    %v113 = vld [vmem:[#allocation2 + $0xe8] sm:$0xf]
    %v114 = vld [vmem:[#allocation2 + $0xec] sm:$0xf]
    %v115 = vld [vmem:[#allocation2 + $0xf0] sm:$0xf]
    %v116 = vld [vmem:[#allocation2 + $0xf4] sm:$0xf]
    %v117 = vld [vmem:[#allocation2 + $0xf8] sm:$0xf]
    %v118 = vld [vmem:[#allocation2 + $0xfc] sm:$0xf]
    %v119 = vld [vmem:[#allocation5] sm:$0xf]
    %v120 = vld [vmem:[#allocation5 + $0x4] sm:$0xf]
    %v121 = vld [vmem:[#allocation5 + $0x8] sm:$0xf]
    %v122 = vld [vmem:[#allocation5 + $0xc] sm:$0xf]
    %v123 = vld [vmem:[#allocation5 + $0x10] sm:$0xf]
    %v124 = vld [vmem:[#allocation5 + $0x14] sm:$0xf]
    %v125 = vld [vmem:[#allocation5 + $0x18] sm:$0xf]
    %v126 = vld [vmem:[#allocation5 + $0x1c] sm:$0xf]
    %v127 = vld [vmem:[#allocation5 + $0x20] sm:$0xf]
    %v128 = vld [vmem:[#allocation5 + $0x24] sm:$0xf]
    %v129 = vld [vmem:[#allocation5 + $0x28] sm:$0xf]
    %v130 = vld [vmem:[#allocation5 + $0x2c] sm:$0xf]
    %v131 = vld [vmem:[#allocation5 + $0x30] sm:$0xf]
    %v132 = vld [vmem:[#allocation5 + $0x34] sm:$0xf]
    %v133 = vld [vmem:[#allocation5 + $0x38] sm:$0xf]
    %v134 = vld [vmem:[#allocation5 + $0x3c] sm:$0xf]
    %v135 = vld [vmem:[#allocation7] sm:$0x1]
    %v137 = vlaneseq
    %v138 = vshrl.u32 %v137, 7
    %v139 = vsub.s32 0, %v138
    %v140 = vrot.slane %v135, %v139
    %v206 = vunpack.c.l.b16 %v55
    %v207 = vunpack.c.l.b16 %v56
    %v208 = vunpack.c.l.b16 %v57
    %v209 = vunpack.c.l.b16 %v58
    %v210 = vunpack.c.l.b16 %v59
    %v211 = vunpack.c.l.b16 %v60
    %v212 = vunpack.c.l.b16 %v61
    %v213 = vunpack.c.l.b16 %v62
    %v214 = vunpack.c.l.b16 %v63
    %v215 = vunpack.c.l.b16 %v64
    %v216 = vunpack.c.l.b16 %v65
    %v217 = vunpack.c.l.b16 %v66
    %v218 = vunpack.c.l.b16 %v67
    %v219 = vunpack.c.l.b16 %v68
    %v220 = vunpack.c.l.b16 %v69
    %v221 = vunpack.c.l.b16 %v70
    %v222 = vunpack.c.l.b16 %v71
    %v223 = vunpack.c.l.b16 %v72
    %v224 = vunpack.c.l.b16 %v73
    %v225 = vunpack.c.l.b16 %v74
    %v226 = vunpack.c.l.b16 %v75
    %v227 = vunpack.c.l.b16 %v76
    %v228 = vunpack.c.l.b16 %v77
    %v229 = vunpack.c.l.b16 %v78
    %v230 = vunpack.c.l.b16 %v79
    %v231 = vunpack.c.l.b16 %v80
    %v232 = vunpack.c.l.b16 %v81
    %v233 = vunpack.c.l.b16 %v82
    %v234 = vunpack.c.l.b16 %v83
    %v235 = vunpack.c.l.b16 %v84
    %v236 = vunpack.c.l.b16 %v85
    %v237 = vunpack.c.l.b16 %v86
    %v238 = vunpack.c.l.b16 %v87
    %v239 = vunpack.c.l.b16 %v88
    %v240 = vunpack.c.l.b16 %v89
    %v241 = vunpack.c.l.b16 %v90
    %v242 = vunpack.c.l.b16 %v91
    %v243 = vunpack.c.l.b16 %v92
    %v244 = vunpack.c.l.b16 %v93
    %v245 = vunpack.c.l.b16 %v94
    %v246 = vunpack.c.l.b16 %v95
    %v247 = vunpack.c.l.b16 %v96
    %v248 = vunpack.c.l.b16 %v97
    %v249 = vunpack.c.l.b16 %v98
    %v250 = vunpack.c.l.b16 %v99
    %v251 = vunpack.c.l.b16 %v100
    %v252 = vunpack.c.l.b16 %v101
    %v253 = vunpack.c.l.b16 %v102
    %v254 = vunpack.c.l.b16 %v103
    %v255 = vunpack.c.l.b16 %v104
    %v256 = vunpack.c.l.b16 %v105
    %v257 = vunpack.c.l.b16 %v106
    %v258 = vunpack.c.l.b16 %v107
    %v259 = vunpack.c.l.b16 %v108
    %v260 = vunpack.c.l.b16 %v109
    %v261 = vunpack.c.l.b16 %v110
    %v262 = vunpack.c.l.b16 %v111
    %v263 = vunpack.c.l.b16 %v112
    %v264 = vunpack.c.l.b16 %v113
    %v265 = vunpack.c.l.b16 %v114
    %v266 = vunpack.c.l.b16 %v115
    %v267 = vunpack.c.l.b16 %v116
    %v268 = vunpack.c.l.b16 %v117
    %v269 = vunpack.c.l.b16 %v118
    %v270 = vpack.c.b16 %v207, %v206
    %v271 = vpack.c.b16 %v209, %v208
    %v272 = vpack.c.b16 %v211, %v210
    %v273 = vpack.c.b16 %v213, %v212
    %v274 = vpack.c.b16 %v215, %v214
    %v275 = vpack.c.b16 %v217, %v216
    %v276 = vpack.c.b16 %v219, %v218
    %v277 = vpack.c.b16 %v221, %v220
    %v278 = vpack.c.b16 %v223, %v222
    %v279 = vpack.c.b16 %v225, %v224
    %v280 = vpack.c.b16 %v227, %v226
    %v281 = vpack.c.b16 %v229, %v228
    %v282 = vpack.c.b16 %v231, %v230
    %v283 = vpack.c.b16 %v233, %v232
    %v284 = vpack.c.b16 %v235, %v234
    %v285 = vpack.c.b16 %v237, %v236
    %v286 = vpack.c.b16 %v239, %v238
    %v287 = vpack.c.b16 %v241, %v240
    %v288 = vpack.c.b16 %v243, %v242
    %v289 = vpack.c.b16 %v245, %v244
    %v290 = vpack.c.b16 %v247, %v246
    %v291 = vpack.c.b16 %v249, %v248
    %v292 = vpack.c.b16 %v251, %v250
    %v293 = vpack.c.b16 %v253, %v252
    %v294 = vpack.c.b16 %v255, %v254
    %v295 = vpack.c.b16 %v257, %v256
    %v296 = vpack.c.b16 %v259, %v258
    %v297 = vpack.c.b16 %v261, %v260
    %v298 = vpack.c.b16 %v263, %v262
    %v299 = vpack.c.b16 %v265, %v264
    %v300 = vpack.c.b16 %v267, %v266
    %v301 = vpack.c.b16 %v269, %v268
    %v350 = vunpack.c.l.b16 %v119
    %v351 = vunpack.c.l.b16 %v120
    %v352 = vunpack.c.l.b16 %v121
    %v353 = vunpack.c.l.b16 %v122
    %v354 = vunpack.c.l.b16 %v123
    %v355 = vunpack.c.l.b16 %v124
    %v356 = vunpack.c.l.b16 %v125
    %v357 = vunpack.c.l.b16 %v126
    %v358 = vunpack.c.l.b16 %v127
    %v359 = vunpack.c.l.b16 %v128
    %v360 = vunpack.c.l.b16 %v129
    %v361 = vunpack.c.l.b16 %v130
    %v362 = vunpack.c.l.b16 %v131
    %v363 = vunpack.c.l.b16 %v132
    %v364 = vunpack.c.l.b16 %v133
    %v365 = vunpack.c.l.b16 %v134
    %v366 = vpack.c.b16 %v351, %v350
    %v367 = vpack.c.b16 %v353, %v352
    %v368 = vpack.c.b16 %v355, %v354
    %v369 = vpack.c.b16 %v357, %v356
    %v370 = vpack.c.b16 %v359, %v358
    %v371 = vpack.c.b16 %v361, %v360
    %v372 = vpack.c.b16 %v363, %v362
    %v373 = vpack.c.b16 %v365, %v364
    %382 = vmatprep.subr.bf16.mxu0 0
    %383 = vmatpush1.bf16.msra.mxu0 %v366
    %384 = vmatprep.subr.bf16.mxu0 0
    %385 = vmatpush1.bf16.msra.mxu0 %v367
    %386 = vmatprep.subr.bf16.mxu0 0
    %387 = vmatpush1.bf16.msra.mxu0 %v368
    %388 = vmatprep.subr.bf16.mxu0 0
    %389 = vmatpush1.bf16.msra.mxu0 %v369
    %390 = vmatprep.subr.bf16.mxu0 0
    %391 = vmatpush1.bf16.msra.mxu0 %v370
    %392 = vmatprep.subr.bf16.mxu0 0
    %393 = vmatpush1.bf16.msra.mxu0 %v371
    %394 = vmatprep.subr.bf16.mxu0 0
    %395 = vmatpush1.bf16.msra.mxu0 %v372
    %396 = vmatprep.subr.bf16.mxu0 0
    %397 = vmatpush1.bf16.msra.mxu0 %v373
    %398 = vmatprep.subr.bf16.mxu0 0
    %399 = vmatpush1.bf16.msra.mxu0 0
    %400 = vmatprep.subr.bf16.mxu0 0
    %401 = vmatpush1.bf16.msra.mxu0 0
    %402 = vmatprep.subr.bf16.mxu0 0
    %403 = vmatpush1.bf16.msra.mxu0 0
    %404 = vmatprep.subr.bf16.mxu0 0
    %405 = vmatpush1.bf16.msra.mxu0 0
    %406 = vmatprep.subr.bf16.mxu0 0
    %407 = vmatpush1.bf16.msra.mxu0 0
    %408 = vmatprep.subr.bf16.mxu0 0
    %409 = vmatpush1.bf16.msra.mxu0 0
    %410 = vmatprep.subr.bf16.mxu0 0
    %411 = vmatpush1.bf16.msra.mxu0 0
    %412 = vmatprep.subr.bf16.mxu0 0
    %413 = vmatpush1.bf16.msra.mxu0 0
    %414 = vmatprep.mubr.bf16.mxu0 0
    %415 = vmatmul.mubr.bf16.gmra.mrb[0].mxu0 %v270
    %v416 = vpop.f32.mrb[0].mxu0
    %v417 = vadd.f32 %v140, %v416
    %v418 = vpop.f32.mrb[0].mxu0
    %v419 = vpop.f32.mrb[0].mxu0
    %v420 = vadd.f32 %v140, %v419
    %v421 = vpop.f32.mrb[0].mxu0
    %422 = vmatprep.mubr.bf16.mxu0 0
    %423 = vmatmul.mubr.bf16.gmra.mrb[0].mxu0 %v271
    %v424 = vpop.f32.mrb[0].mxu0
    %v425 = vadd.f32 %v140, %v424
    %v426 = vpop.f32.mrb[0].mxu0
    %v427 = vpop.f32.mrb[0].mxu0
    %v428 = vadd.f32 %v140, %v427
    %v429 = vpop.f32.mrb[0].mxu0
    %430 = vmatprep.mubr.bf16.mxu0 0
    %431 = vmatmul.mubr.bf16.gmra.mrb[0].mxu0 %v272
    %v432 = vpop.f32.mrb[0].mxu0
    %v433 = vadd.f32 %v140, %v432
    %v434 = vpop.f32.mrb[0].mxu0
    %v435 = vpop.f32.mrb[0].mxu0
    %v436 = vadd.f32 %v140, %v435
    %v437 = vpop.f32.mrb[0].mxu0
    %438 = vmatprep.mubr.bf16.mxu0 0
    %439 = vmatmul.mubr.bf16.gmra.mrb[0].mxu0 %v273
    %v440 = vpop.f32.mrb[0].mxu0
    %v441 = vadd.f32 %v140, %v440
    %v442 = vpop.f32.mrb[0].mxu0
    %v443 = vpop.f32.mrb[0].mxu0
    %v444 = vadd.f32 %v140, %v443
    %v445 = vpop.f32.mrb[0].mxu0
    %446 = vmatprep.mubr.bf16.mxu0 0
    %447 = vmatmul.mubr.bf16.gmra.mrb[0].mxu0 %v274
    %v448 = vpop.f32.mrb[0].mxu0
    %v449 = vadd.f32 %v140, %v448
    %v450 = vpop.f32.mrb[0].mxu0
    %v451 = vpop.f32.mrb[0].mxu0
    %v452 = vadd.f32 %v140, %v451
    %v453 = vpop.f32.mrb[0].mxu0
    %454 = vmatprep.mubr.bf16.mxu0 0
    %455 = vmatmul.mubr.bf16.gmra.mrb[0].mxu0 %v275
    %v456 = vpop.f32.mrb[0].mxu0
    %v457 = vadd.f32 %v140, %v456
    %v458 = vpop.f32.mrb[0].mxu0
    %v459 = vpop.f32.mrb[0].mxu0
    %v460 = vadd.f32 %v140, %v459
    %v461 = vpop.f32.mrb[0].mxu0
    %462 = vmatprep.mubr.bf16.mxu0 0
    %463 = vmatmul.mubr.bf16.gmra.mrb[0].mxu0 %v276
    %v464 = vpop.f32.mrb[0].mxu0
    %v465 = vadd.f32 %v140, %v464
    %v466 = vpop.f32.mrb[0].mxu0
    %v467 = vpop.f32.mrb[0].mxu0
    %v468 = vadd.f32 %v140, %v467
    %v469 = vpop.f32.mrb[0].mxu0
    %470 = vmatprep.mubr.bf16.mxu0 0
    %471 = vmatmul.mubr.bf16.gmra.mrb[0].mxu0 %v277
    %v472 = vpop.f32.mrb[0].mxu0
    %v473 = vadd.f32 %v140, %v472
    %v474 = vpop.f32.mrb[0].mxu0
    %v475 = vpop.f32.mrb[0].mxu0
    %v476 = vadd.f32 %v140, %v475
    %v477 = vpop.f32.mrb[0].mxu0
    %478 = vmatprep.mubr.bf16.mxu0 0
    %479 = vmatmul.mubr.bf16.gmra.mrb[0].mxu0 %v278
    %v480 = vpop.f32.mrb[0].mxu0
    %v481 = vadd.f32 %v140, %v480
    %v482 = vpop.f32.mrb[0].mxu0
    %v483 = vpop.f32.mrb[0].mxu0
    %v484 = vadd.f32 %v140, %v483
    %v485 = vpop.f32.mrb[0].mxu0
    %486 = vmatprep.mubr.bf16.mxu0 0
    %487 = vmatmul.mubr.bf16.gmra.mrb[0].mxu0 %v279
    %v488 = vpop.f32.mrb[0].mxu0
    %v489 = vadd.f32 %v140, %v488
    %v490 = vpop.f32.mrb[0].mxu0
    %v491 = vpop.f32.mrb[0].mxu0
    %v492 = vadd.f32 %v140, %v491
    %v493 = vpop.f32.mrb[0].mxu0
    %494 = vmatprep.mubr.bf16.mxu0 0
    %495 = vmatmul.mubr.bf16.gmra.mrb[0].mxu0 %v280
    %v496 = vpop.f32.mrb[0].mxu0
    %v497 = vadd.f32 %v140, %v496
    %v498 = vpop.f32.mrb[0].mxu0
    %v499 = vpop.f32.mrb[0].mxu0
    %v500 = vadd.f32 %v140, %v499
    %v501 = vpop.f32.mrb[0].mxu0
    %502 = vmatprep.mubr.bf16.mxu0 0
    %503 = vmatmul.mubr.bf16.gmra.mrb[0].mxu0 %v281
    %v504 = vpop.f32.mrb[0].mxu0
    %v505 = vadd.f32 %v140, %v504
    %v506 = vpop.f32.mrb[0].mxu0
    %v507 = vpop.f32.mrb[0].mxu0
    %v508 = vadd.f32 %v140, %v507
    %v509 = vpop.f32.mrb[0].mxu0
    %510 = vmatprep.mubr.bf16.mxu0 0
    %511 = vmatmul.mubr.bf16.gmra.mrb[0].mxu0 %v282
    %v512 = vpop.f32.mrb[0].mxu0
    %v513 = vadd.f32 %v140, %v512
    %v514 = vpop.f32.mrb[0].mxu0
    %v515 = vpop.f32.mrb[0].mxu0
    %v516 = vadd.f32 %v140, %v515
    %v517 = vpop.f32.mrb[0].mxu0
    %518 = vmatprep.mubr.bf16.mxu0 0
    %519 = vmatmul.mubr.bf16.gmra.mrb[0].mxu0 %v283
    %v520 = vpop.f32.mrb[0].mxu0
    %v521 = vadd.f32 %v140, %v520
    %v522 = vpop.f32.mrb[0].mxu0
    %v523 = vpop.f32.mrb[0].mxu0
    %v524 = vadd.f32 %v140, %v523
    %v525 = vpop.f32.mrb[0].mxu0
    %526 = vmatprep.mubr.bf16.mxu0 0
    %527 = vmatmul.mubr.bf16.gmra.mrb[0].mxu0 %v284
    %v528 = vpop.f32.mrb[0].mxu0
    %v529 = vadd.f32 %v140, %v528
    %v530 = vpop.f32.mrb[0].mxu0
    %v531 = vpop.f32.mrb[0].mxu0
    %v532 = vadd.f32 %v140, %v531
    %v533 = vpop.f32.mrb[0].mxu0
    %534 = vmatprep.mubr.bf16.mxu0 0
    %535 = vmatmul.mubr.bf16.gmra.mrb[0].mxu0 %v285
    %v536 = vpop.f32.mrb[0].mxu0
    %v537 = vadd.f32 %v140, %v536
    %v538 = vpop.f32.mrb[0].mxu0
    %v539 = vpop.f32.mrb[0].mxu0
    %v540 = vadd.f32 %v140, %v539
    %v541 = vpop.f32.mrb[0].mxu0
    %542 = vmatprep.mubr.bf16.mxu0 0
    %543 = vmatmul.mubr.bf16.gmra.mrb[0].mxu0 %v286
    %v544 = vpop.f32.mrb[0].mxu0
    %v545 = vadd.f32 %v140, %v544
    %v546 = vpop.f32.mrb[0].mxu0
    %v547 = vpop.f32.mrb[0].mxu0
    %v548 = vadd.f32 %v140, %v547
    %v549 = vpop.f32.mrb[0].mxu0
    %550 = vmatprep.mubr.bf16.mxu0 0
    %551 = vmatmul.mubr.bf16.gmra.mrb[0].mxu0 %v287
    %v552 = vpop.f32.mrb[0].mxu0
    %v553 = vadd.f32 %v140, %v552
    %v554 = vpop.f32.mrb[0].mxu0
    %v555 = vpop.f32.mrb[0].mxu0
    %v556 = vadd.f32 %v140, %v555
    %v557 = vpop.f32.mrb[0].mxu0
    %558 = vmatprep.mubr.bf16.mxu0 0
    %559 = vmatmul.mubr.bf16.gmra.mrb[0].mxu0 %v288
    %v560 = vpop.f32.mrb[0].mxu0
    %v561 = vadd.f32 %v140, %v560
    %v562 = vpop.f32.mrb[0].mxu0
    %v563 = vpop.f32.mrb[0].mxu0
    %v564 = vadd.f32 %v140, %v563
    %v565 = vpop.f32.mrb[0].mxu0
    %566 = vmatprep.mubr.bf16.mxu0 0
    %567 = vmatmul.mubr.bf16.gmra.mrb[0].mxu0 %v289
    %v568 = vpop.f32.mrb[0].mxu0
    %v569 = vadd.f32 %v140, %v568
    %v570 = vpop.f32.mrb[0].mxu0
    %v571 = vpop.f32.mrb[0].mxu0
    %v572 = vadd.f32 %v140, %v571
    %v573 = vpop.f32.mrb[0].mxu0
    %574 = vmatprep.mubr.bf16.mxu0 0
    %575 = vmatmul.mubr.bf16.gmra.mrb[0].mxu0 %v290
    %v576 = vpop.f32.mrb[0].mxu0
    %v577 = vadd.f32 %v140, %v576
    %v578 = vpop.f32.mrb[0].mxu0
    %v579 = vpop.f32.mrb[0].mxu0
    %v580 = vadd.f32 %v140, %v579
    %v581 = vpop.f32.mrb[0].mxu0
    %582 = vmatprep.mubr.bf16.mxu0 0
    %583 = vmatmul.mubr.bf16.gmra.mrb[0].mxu0 %v291
    %v584 = vpop.f32.mrb[0].mxu0
    %v585 = vadd.f32 %v140, %v584
    %v586 = vpop.f32.mrb[0].mxu0
    %v587 = vpop.f32.mrb[0].mxu0
    %v588 = vadd.f32 %v140, %v587
    %v589 = vpop.f32.mrb[0].mxu0
    %590 = vmatprep.mubr.bf16.mxu0 0
    %591 = vmatmul.mubr.bf16.gmra.mrb[0].mxu0 %v292
    %v592 = vpop.f32.mrb[0].mxu0
    %v593 = vadd.f32 %v140, %v592
    %v594 = vpop.f32.mrb[0].mxu0
    %v595 = vpop.f32.mrb[0].mxu0
    %v596 = vadd.f32 %v140, %v595
    %v597 = vpop.f32.mrb[0].mxu0
    %598 = vmatprep.mubr.bf16.mxu0 0
    %599 = vmatmul.mubr.bf16.gmra.mrb[0].mxu0 %v293
    %v600 = vpop.f32.mrb[0].mxu0
    %v601 = vadd.f32 %v140, %v600
    %v602 = vpop.f32.mrb[0].mxu0
    %v603 = vpop.f32.mrb[0].mxu0
    %v604 = vadd.f32 %v140, %v603
    %v605 = vpop.f32.mrb[0].mxu0
    %606 = vmatprep.mubr.bf16.mxu0 0
    %607 = vmatmul.mubr.bf16.gmra.mrb[0].mxu0 %v294
    %v608 = vpop.f32.mrb[0].mxu0
    %v609 = vadd.f32 %v140, %v608
    %v610 = vpop.f32.mrb[0].mxu0
    %v611 = vpop.f32.mrb[0].mxu0
    %v612 = vadd.f32 %v140, %v611
    %v613 = vpop.f32.mrb[0].mxu0
    %614 = vmatprep.mubr.bf16.mxu0 0
    %615 = vmatmul.mubr.bf16.gmra.mrb[0].mxu0 %v295
    %v616 = vpop.f32.mrb[0].mxu0
    %v617 = vadd.f32 %v140, %v616
    %v618 = vpop.f32.mrb[0].mxu0
    %v619 = vpop.f32.mrb[0].mxu0
    %v620 = vadd.f32 %v140, %v619
    %v621 = vpop.f32.mrb[0].mxu0
    %622 = vmatprep.mubr.bf16.mxu0 0
    %623 = vmatmul.mubr.bf16.gmra.mrb[0].mxu0 %v296
    %v624 = vpop.f32.mrb[0].mxu0
    %v625 = vadd.f32 %v140, %v624
    %v626 = vpop.f32.mrb[0].mxu0
    %v627 = vpop.f32.mrb[0].mxu0
    %v628 = vadd.f32 %v140, %v627
    %v629 = vpop.f32.mrb[0].mxu0
    %630 = vmatprep.mubr.bf16.mxu0 0
    %631 = vmatmul.mubr.bf16.gmra.mrb[0].mxu0 %v297
    %v632 = vpop.f32.mrb[0].mxu0
    %v633 = vadd.f32 %v140, %v632
    %v634 = vpop.f32.mrb[0].mxu0
    %v635 = vpop.f32.mrb[0].mxu0
    %v636 = vadd.f32 %v140, %v635
    %v637 = vpop.f32.mrb[0].mxu0
    %638 = vmatprep.mubr.bf16.mxu0 0
    %639 = vmatmul.mubr.bf16.gmra.mrb[0].mxu0 %v298
    %v640 = vpop.f32.mrb[0].mxu0
    %v641 = vadd.f32 %v140, %v640
    %v642 = vpop.f32.mrb[0].mxu0
    %v643 = vpop.f32.mrb[0].mxu0
    %v644 = vadd.f32 %v140, %v643
    %v645 = vpop.f32.mrb[0].mxu0
    %646 = vmatprep.mubr.bf16.mxu0 0
    %647 = vmatmul.mubr.bf16.gmra.mrb[0].mxu0 %v299
    %v648 = vpop.f32.mrb[0].mxu0
    %v649 = vadd.f32 %v140, %v648
    %v650 = vpop.f32.mrb[0].mxu0
    %v651 = vpop.f32.mrb[0].mxu0
    %v652 = vadd.f32 %v140, %v651
    %v653 = vpop.f32.mrb[0].mxu0
    %654 = vmatprep.mubr.bf16.mxu0 0
    %655 = vmatmul.mubr.bf16.gmra.mrb[0].mxu0 %v300
    %v656 = vpop.f32.mrb[0].mxu0
    %v657 = vadd.f32 %v140, %v656
    %v658 = vpop.f32.mrb[0].mxu0
    %v659 = vpop.f32.mrb[0].mxu0
    %v660 = vadd.f32 %v140, %v659
    %v661 = vpop.f32.mrb[0].mxu0
    %662 = vmatprep.mubr.bf16.mxu0 0
    %663 = vmatmul.mubr.bf16.gmra.mrb[0].mxu0 %v301
    %v664 = vpop.f32.mrb[0].mxu0
    %v665 = vadd.f32 %v140, %v664
    %v666 = vpop.f32.mrb[0].mxu0
    %v667 = vpop.f32.mrb[0].mxu0
    %v668 = vadd.f32 %v140, %v667
    %v669 = vpop.f32.mrb[0].mxu0
    %670 = vdwg.mxu0
    %v671 = vpack.c.bf16 %v420, %v417
    %v672 = vpack.c.bf16 %v428, %v425
    %v673 = vpack.c.bf16 %v436, %v433
    %v674 = vpack.c.bf16 %v444, %v441
    %v675 = vpack.c.bf16 %v452, %v449
    %v676 = vpack.c.bf16 %v460, %v457
    %v677 = vpack.c.bf16 %v468, %v465
    %v678 = vpack.c.bf16 %v476, %v473
    %v679 = vpack.c.bf16 %v484, %v481
    %v680 = vpack.c.bf16 %v492, %v489
    %v681 = vpack.c.bf16 %v500, %v497
    %v682 = vpack.c.bf16 %v508, %v505
    %v683 = vpack.c.bf16 %v516, %v513
    %v684 = vpack.c.bf16 %v524, %v521
    %v685 = vpack.c.bf16 %v532, %v529
    %v686 = vpack.c.bf16 %v540, %v537
    %v687 = vpack.c.bf16 %v548, %v545
    %v688 = vpack.c.bf16 %v556, %v553
    %v689 = vpack.c.bf16 %v564, %v561
    %v690 = vpack.c.bf16 %v572, %v569
    %v691 = vpack.c.bf16 %v580, %v577
    %v692 = vpack.c.bf16 %v588, %v585
    %v693 = vpack.c.bf16 %v596, %v593
    %v694 = vpack.c.bf16 %v604, %v601
    %v695 = vpack.c.bf16 %v612, %v609
    %v696 = vpack.c.bf16 %v620, %v617
    %v697 = vpack.c.bf16 %v628, %v625
    %v698 = vpack.c.bf16 %v636, %v633
    %v699 = vpack.c.bf16 %v644, %v641
    %v700 = vpack.c.bf16 %v652, %v649
    %v701 = vpack.c.bf16 %v660, %v657
    %v702 = vpack.c.bf16 %v668, %v665
    %v735 = vunpack.c.l.b16 %v671
    %v736 = vunpack.c.h.b16 %v671
    %v737 = vunpack.c.l.b16 %v672
    %v738 = vunpack.c.h.b16 %v672
    %v739 = vunpack.c.l.b16 %v673
    %v740 = vunpack.c.h.b16 %v673
    %v741 = vunpack.c.l.b16 %v674
    %v742 = vunpack.c.h.b16 %v674
    %v743 = vunpack.c.l.b16 %v675
    %v744 = vunpack.c.h.b16 %v675
    %v745 = vunpack.c.l.b16 %v676
    %v746 = vunpack.c.h.b16 %v676
    %v747 = vunpack.c.l.b16 %v677
    %v748 = vunpack.c.h.b16 %v677
    %v749 = vunpack.c.l.b16 %v678
    %v750 = vunpack.c.h.b16 %v678
    %v751 = vunpack.c.l.b16 %v679
    %v752 = vunpack.c.h.b16 %v679
    %v753 = vunpack.c.l.b16 %v680
    %v754 = vunpack.c.h.b16 %v680
    %v755 = vunpack.c.l.b16 %v681
    %v756 = vunpack.c.h.b16 %v681
    %v757 = vunpack.c.l.b16 %v682
    %v758 = vunpack.c.h.b16 %v682
    %v759 = vunpack.c.l.b16 %v683
    %v760 = vunpack.c.h.b16 %v683
    %v761 = vunpack.c.l.b16 %v684
    %v762 = vunpack.c.h.b16 %v684
    %v763 = vunpack.c.l.b16 %v685
    %v764 = vunpack.c.h.b16 %v685
    %v765 = vunpack.c.l.b16 %v686
    %v766 = vunpack.c.h.b16 %v686
    %v767 = vunpack.c.l.b16 %v687
    %v768 = vunpack.c.h.b16 %v687
    %v769 = vunpack.c.l.b16 %v688
    %v770 = vunpack.c.h.b16 %v688
    %v771 = vunpack.c.l.b16 %v689
    %v772 = vunpack.c.h.b16 %v689
    %v773 = vunpack.c.l.b16 %v690
    %v774 = vunpack.c.h.b16 %v690
    %v775 = vunpack.c.l.b16 %v691
    %v776 = vunpack.c.h.b16 %v691
    %v777 = vunpack.c.l.b16 %v692
    %v778 = vunpack.c.h.b16 %v692
    %v779 = vunpack.c.l.b16 %v693
    %v780 = vunpack.c.h.b16 %v693
    %v781 = vunpack.c.l.b16 %v694
    %v782 = vunpack.c.h.b16 %v694
    %v783 = vunpack.c.l.b16 %v695
    %v784 = vunpack.c.h.b16 %v695
    %v785 = vunpack.c.l.b16 %v696
    %v786 = vunpack.c.h.b16 %v696
    %v787 = vunpack.c.l.b16 %v697
    %v788 = vunpack.c.h.b16 %v697
    %v789 = vunpack.c.l.b16 %v698
    %v790 = vunpack.c.h.b16 %v698
    %v791 = vunpack.c.l.b16 %v699
    %v792 = vunpack.c.h.b16 %v699
    %v793 = vunpack.c.l.b16 %v700
    %v794 = vunpack.c.h.b16 %v700
    %v795 = vunpack.c.l.b16 %v701
    %v796 = vunpack.c.h.b16 %v701
    %v797 = vunpack.c.l.b16 %v702
    %v798 = vunpack.c.h.b16 %v702
    %v799 = vpack.c.b16 %v735, %v735
    %v800 = vpack.c.b16 %v736, %v736
    %v801 = vpack.c.b16 %v737, %v737
    %v802 = vpack.c.b16 %v738, %v738
    %v803 = vpack.c.b16 %v739, %v739
    %v804 = vpack.c.b16 %v740, %v740
    %v805 = vpack.c.b16 %v741, %v741
    %v806 = vpack.c.b16 %v742, %v742
    %v807 = vpack.c.b16 %v743, %v743
    %v808 = vpack.c.b16 %v744, %v744
    %v809 = vpack.c.b16 %v745, %v745
    %v810 = vpack.c.b16 %v746, %v746
    %v811 = vpack.c.b16 %v747, %v747
    %v812 = vpack.c.b16 %v748, %v748
    %v813 = vpack.c.b16 %v749, %v749
    %v814 = vpack.c.b16 %v750, %v750
    %v815 = vpack.c.b16 %v751, %v751
    %v816 = vpack.c.b16 %v752, %v752
    %v817 = vpack.c.b16 %v753, %v753
    %v818 = vpack.c.b16 %v754, %v754
    %v819 = vpack.c.b16 %v755, %v755
    %v820 = vpack.c.b16 %v756, %v756
    %v821 = vpack.c.b16 %v757, %v757
    %v822 = vpack.c.b16 %v758, %v758
    %v823 = vpack.c.b16 %v759, %v759
    %v824 = vpack.c.b16 %v760, %v760
    %v825 = vpack.c.b16 %v761, %v761
    %v826 = vpack.c.b16 %v762, %v762
    %v827 = vpack.c.b16 %v763, %v763
    %v828 = vpack.c.b16 %v764, %v764
    %v829 = vpack.c.b16 %v765, %v765
    %v830 = vpack.c.b16 %v766, %v766
    %v831 = vpack.c.b16 %v767, %v767
    %v832 = vpack.c.b16 %v768, %v768
    %v833 = vpack.c.b16 %v769, %v769
    %v834 = vpack.c.b16 %v770, %v770
    %v835 = vpack.c.b16 %v771, %v771
    %v836 = vpack.c.b16 %v772, %v772
    %v837 = vpack.c.b16 %v773, %v773
    %v838 = vpack.c.b16 %v774, %v774
    %v839 = vpack.c.b16 %v775, %v775
    %v840 = vpack.c.b16 %v776, %v776
    %v841 = vpack.c.b16 %v777, %v777
    %v842 = vpack.c.b16 %v778, %v778
    %v843 = vpack.c.b16 %v779, %v779
    %v844 = vpack.c.b16 %v780, %v780
    %v845 = vpack.c.b16 %v781, %v781
    %v846 = vpack.c.b16 %v782, %v782
    %v847 = vpack.c.b16 %v783, %v783
    %v848 = vpack.c.b16 %v784, %v784
    %v849 = vpack.c.b16 %v785, %v785
    %v850 = vpack.c.b16 %v786, %v786
    %v851 = vpack.c.b16 %v787, %v787
    %v852 = vpack.c.b16 %v788, %v788
    %v853 = vpack.c.b16 %v789, %v789
    %v854 = vpack.c.b16 %v790, %v790
    %v855 = vpack.c.b16 %v791, %v791
    %v856 = vpack.c.b16 %v792, %v792
    %v857 = vpack.c.b16 %v793, %v793
    %v858 = vpack.c.b16 %v794, %v794
    %v859 = vpack.c.b16 %v795, %v795
    %v860 = vpack.c.b16 %v796, %v796
    %v861 = vpack.c.b16 %v797, %v797
    %v862 = vpack.c.b16 %v798, %v798
    %927 = vst [vmem:[#allocation8] sm:$0xf] %v799
    %928 = vst [vmem:[#allocation8 + $0x4] sm:$0xf] %v800
    %929 = vst [vmem:[#allocation8 + $0x8] sm:$0xf] %v801
    %930 = vst [vmem:[#allocation8 + $0xc] sm:$0xf] %v802
    %931 = vst [vmem:[#allocation8 + $0x10] sm:$0xf] %v803
    %932 = vst [vmem:[#allocation8 + $0x14] sm:$0xf] %v804
    %933 = vst [vmem:[#allocation8 + $0x18] sm:$0xf] %v805
    %934 = vst [vmem:[#allocation8 + $0x1c] sm:$0xf] %v806
    %935 = vst [vmem:[#allocation8 + $0x20] sm:$0xf] %v807
    %936 = vst [vmem:[#allocation8 + $0x24] sm:$0xf] %v808
    %937 = vst [vmem:[#allocation8 + $0x28] sm:$0xf] %v809
    %938 = vst [vmem:[#allocation8 + $0x2c] sm:$0xf] %v810
    %939 = vst [vmem:[#allocation8 + $0x30] sm:$0xf] %v811
    %940 = vst [vmem:[#allocation8 + $0x34] sm:$0xf] %v812
    %941 = vst [vmem:[#allocation8 + $0x38] sm:$0xf] %v813
    %942 = vst [vmem:[#allocation8 + $0x3c] sm:$0xf] %v814
    %943 = vst [vmem:[#allocation8 + $0x40] sm:$0xf] %v815
    %944 = vst [vmem:[#allocation8 + $0x44] sm:$0xf] %v816
    %945 = vst [vmem:[#allocation8 + $0x48] sm:$0xf] %v817
    %946 = vst [vmem:[#allocation8 + $0x4c] sm:$0xf] %v818
    %947 = vst [vmem:[#allocation8 + $0x50] sm:$0xf] %v819
    %948 = vst [vmem:[#allocation8 + $0x54] sm:$0xf] %v820
    %949 = vst [vmem:[#allocation8 + $0x58] sm:$0xf] %v821
    %950 = vst [vmem:[#allocation8 + $0x5c] sm:$0xf] %v822
    %951 = vst [vmem:[#allocation8 + $0x60] sm:$0xf] %v823
    %952 = vst [vmem:[#allocation8 + $0x64] sm:$0xf] %v824
    %953 = vst [vmem:[#allocation8 + $0x68] sm:$0xf] %v825
    %954 = vst [vmem:[#allocation8 + $0x6c] sm:$0xf] %v826
    %955 = vst [vmem:[#allocation8 + $0x70] sm:$0xf] %v827
    %956 = vst [vmem:[#allocation8 + $0x74] sm:$0xf] %v828
    %957 = vst [vmem:[#allocation8 + $0x78] sm:$0xf] %v829
    %958 = vst [vmem:[#allocation8 + $0x7c] sm:$0xf] %v830
    %959 = vst [vmem:[#allocation8 + $0x80] sm:$0xf] %v831
    %960 = vst [vmem:[#allocation8 + $0x84] sm:$0xf] %v832
    %961 = vst [vmem:[#allocation8 + $0x88] sm:$0xf] %v833
    %962 = vst [vmem:[#allocation8 + $0x8c] sm:$0xf] %v834
    %963 = vst [vmem:[#allocation8 + $0x90] sm:$0xf] %v835
    %964 = vst [vmem:[#allocation8 + $0x94] sm:$0xf] %v836
    %965 = vst [vmem:[#allocation8 + $0x98] sm:$0xf] %v837
    %966 = vst [vmem:[#allocation8 + $0x9c] sm:$0xf] %v838
    %967 = vst [vmem:[#allocation8 + $0xa0] sm:$0xf] %v839
    %968 = vst [vmem:[#allocation8 + $0xa4] sm:$0xf] %v840
    %969 = vst [vmem:[#allocation8 + $0xa8] sm:$0xf] %v841
    %970 = vst [vmem:[#allocation8 + $0xac] sm:$0xf] %v842
    %971 = vst [vmem:[#allocation8 + $0xb0] sm:$0xf] %v843
    %972 = vst [vmem:[#allocation8 + $0xb4] sm:$0xf] %v844
    %973 = vst [vmem:[#allocation8 + $0xb8] sm:$0xf] %v845
    %974 = vst [vmem:[#allocation8 + $0xbc] sm:$0xf] %v846
    %975 = vst [vmem:[#allocation8 + $0xc0] sm:$0xf] %v847
    %976 = vst [vmem:[#allocation8 + $0xc4] sm:$0xf] %v848
    %977 = vst [vmem:[#allocation8 + $0xc8] sm:$0xf] %v849
    %978 = vst [vmem:[#allocation8 + $0xcc] sm:$0xf] %v850
    %979 = vst [vmem:[#allocation8 + $0xd0] sm:$0xf] %v851
    %980 = vst [vmem:[#allocation8 + $0xd4] sm:$0xf] %v852
    %981 = vst [vmem:[#allocation8 + $0xd8] sm:$0xf] %v853
    %982 = vst [vmem:[#allocation8 + $0xdc] sm:$0xf] %v854
    %983 = vst [vmem:[#allocation8 + $0xe0] sm:$0xf] %v855
    %984 = vst [vmem:[#allocation8 + $0xe4] sm:$0xf] %v856
    %985 = vst [vmem:[#allocation8 + $0xe8] sm:$0xf] %v857
    %986 = vst [vmem:[#allocation8 + $0xec] sm:$0xf] %v858
    %987 = vst [vmem:[#allocation8 + $0xf0] sm:$0xf] %v859
    %988 = vst [vmem:[#allocation8 + $0xf4] sm:$0xf] %v860
    %989 = vst [vmem:[#allocation8 + $0xf8] sm:$0xf] %v861
    %990 = vst [vmem:[#allocation8 + $0xfc] sm:$0xf] %v862
    // Predicated region
    $region26: #{yolo_block_forward.13} parent=1 // pred_check
      _
    $region27: #{yolo_block_forward.13} parent=1 // pred_check_branch
      %992 = sbr.rel (0) target = $region29
    $region28: #{yolo_block_forward.13} parent=1 // pred_region
      %s994 = ssub.s32 4096, 4096
      %995 = vsyncadd [#allocation4], %s994
      %s996 = sshll.u32 [#allocation8], 4
      %s997 = int_to_ptr.vmem [resolvable:$true] %s996
      %1002 = dma.vmem_to_hbm [thread:$0]  %s997, 4096, %s3, [#allocation4], 64, 64, 4
    $region29: #{yolo_block_forward.13} parent=1 // pred_fallthru
      _
    // Predicated region
    $region30: #{yolo_block_forward.13} parent=1 // pred_check
      _
    $region31: #{yolo_block_forward.13} parent=1 // pred_check_branch
      %1004 = sbr.rel (0) target = $region33
    $region32: #{yolo_block_forward.13} parent=1 // pred_region
      %1005 = dma.done [#allocation4], 4096
    $region33: #{yolo_block_forward.13} parent=1 // pred_fallthru
      _
    %1006 = vsyncpa [#allocation3], 1
    %1007 = vsyncpa [#allocation6], 1
    %1008 = vsyncpa [#allocation4], 1

</llo_original>
